<compile_context>
chip_gen: v7x
topology: tpu7x:2x2x1
jax: 0.10.0
libtpu: 0.0.40
codegen_flags: <defaults>
</compile_context>

<pallas_src>
import functools

import jax
import jax.numpy as jnp
from jax.experimental import pallas as pl
from jax.experimental.pallas import tpu as pltpu


_LANE = 128          # channel dim padded to a multiple of this (lane width)
_BATCH_ALIGN = 16    # batch padded to a multiple of this (bf16 sublane-packed tile rows)


def _round_up(n, m):
    return (n + m - 1) // m * m


@functools.lru_cache(maxsize=None)
def _vmem_limits():
    """Generation-aware (budget, limit) bytes; conservative fallback assumes 64 MiB physical."""
    phys = 64 * 1024 * 1024
    try:
        info = pltpu.get_tpu_info()
        phys = int(getattr(info, "vmem_capacity_bytes", 0)) or phys
    except Exception:
        pass
    # v5e/v6e (128 MiB) -> 80 MiB limit / 70 MiB budget; v7x (64 MiB) -> 44 / 34 MiB.
    limit = max(32 * 1024 * 1024, min(phys - 20 * 1024 * 1024, 80 * 1024 * 1024))
    budget = limit - 10 * 1024 * 1024
    return int(budget), int(limit)


def _gelu_exact(x):
    # PyTorch nn.GELU() default (approximate='none'): 0.5*x*(1+erf(x/sqrt(2)))
    return 0.5 * x * (1.0 + jax.lax.erf(x * 0.7071067811865476))


def _lstm_chunk_kernel(x_ref, wih_hbm, whh_hbm, b_ref, out_ref,
                       wih_ref, whh_ref, gx_ref, h_ref, c_ref, sem,
                       *, t_chunk, batch, hidden, seq_len, n_chunks, reverse):
    """One time-chunk of a single-direction LSTM + fused GELU.

    x_ref    : (t_chunk*batch, hidden)   bf16  current chunk (time-major rows, streamed)
    wih_hbm  : (hidden, 4*hidden)        bf16  W_ih^T in HBM (gate order i,f,g,o)
    whh_hbm  : (hidden, 4*hidden)        bf16  W_hh^T in HBM
    b_ref    : (1, 4*hidden)             f32   b_ih + b_hh (tiny, BlockSpec-resident)
    out_ref  : (t_chunk*batch, hidden)         GELU(h_t) for this chunk
    wih_ref / whh_ref : VMEM scratch           single-buffered resident weight copies
    gx_ref   : (t_chunk*batch, 4*hidden) f32   scratch: x @ W_ih^T + b
    h_ref    : (batch, hidden)           bf16  scratch: recurrent h (carried across grid)
    c_ref    : (batch, hidden)           f32   scratch: recurrent c (carried across grid)
    sem      : DMA semaphores (2,)             for the one-time weight copies
    """
    pid = pl.program_id(0)

    @pl.when(pid == 0)
    def _():
        # One-time single-buffered weight residency (no pipeline double-buffering of weights).
        cp_ih = pltpu.make_async_copy(wih_hbm, wih_ref, sem.at[0])
        cp_hh = pltpu.make_async_copy(whh_hbm, whh_ref, sem.at[1])
        cp_ih.start()
        cp_hh.start()
        h_ref[...] = jnp.zeros_like(h_ref)
        c_ref[...] = jnp.zeros_like(c_ref)
        cp_ih.wait()
        cp_hh.wait()

    # Hoisted, non-recurrent input projection for the whole chunk: one large-M bf16 MXU
    # matmul (M = t_chunk*batch); bias folded in so nothing loop-invariant remains inside
    # the recurrence loop.
    # TODO(synk): skew this by one chunk (double-buffered gx + look-ahead x index_map) so it
    # overlaps the previous chunk's latency-bound recurrence instead of preceding it.
    gx_ref[...] = (
        jnp.dot(x_ref[...], wih_ref[...], preferred_element_type=jnp.float32)
        + b_ref[...])

    def step(s):
        # Walking reversed chunks + reversed steps == flip -> LSTM -> flip of the reference.
        t = (t_chunk - 1 - s) if reverse else s
        row0 = pl.multiple_of(t * batch, batch)

        # TODO(synk): with small batch the per-step h@W_hh re-streams the full weight through
        # the MXU; staging the RHS once per chunk (pltpu.matmul_push_rhs / matmul_acc_lhs /
        # matmul_pop) would take the weight push off the critical path.
        gates = gx_ref[pl.ds(row0, batch), :] + jnp.dot(
            h_ref[...], whh_ref[...], preferred_element_type=jnp.float32)

        # hidden is a multiple of 128 -> each gate slice is lane-aligned (free view)
        i_g = jax.nn.sigmoid(gates[:, 0 * hidden:1 * hidden])
        f_g = jax.nn.sigmoid(gates[:, 1 * hidden:2 * hidden])
        g_g = jnp.tanh(gates[:, 2 * hidden:3 * hidden])
        o_g = jax.nn.sigmoid(gates[:, 3 * hidden:4 * hidden])

        c_new = f_g * c_ref[...] + i_g * g_g
        h_new = o_g * jnp.tanh(c_new)

        h_ref[...] = h_new.astype(h_ref.dtype)
        c_ref[...] = c_new
        # GELU fused under the recurrence (VPU/EUP slots are idle there); batch is a multiple
        # of 16 so this store is tile-aligned for both bf16 and f32 outputs.
        out_ref[pl.ds(row0, batch), :] = _gelu_exact(h_new).astype(out_ref.dtype)

    # TODO(synk): unroll the step loop by 2-4 once pl.loop unrolling with the dynamic-bound
    # variant below is validated; kept rolled here for robustness.
    if n_chunks * t_chunk == seq_len:
        pl.loop(0, t_chunk)(step)
    else:
        # Time padding exists only in the last data chunk. Skip padded steps entirely with
        # dynamic loop bounds instead of per-step masking (forward: shorten the stop; reverse:
        # raise the start so the padded tail never touches the carried state).
        data_chunk = (n_chunks - 1 - pid) if reverse else pid
        valid = jnp.minimum(t_chunk, seq_len - data_chunk * t_chunk)
        if reverse:
            pl.loop(t_chunk - valid, t_chunk)(step)
        else:
            pl.loop(0, valid)(step)


def _lstm_pass(x2d, wih, whh, bias, *, seq_len, t_chunk, batch, hidden,
               reverse, out_dtype, vmem_limit):
    """x2d: (Tp*batch, hidden) time-major rows. Returns GELU(LSTM(x)) in the same layout."""
    rows = x2d.shape[0]
    n_chunks = rows // (t_chunk * batch)
    blk = (t_chunk * batch, hidden)

    seq_map = (lambda i: (n_chunks - 1 - i, 0)) if reverse else (lambda i: (i, 0))

    kernel = functools.partial(
        _lstm_chunk_kernel, t_chunk=t_chunk, batch=batch, hidden=hidden,
        seq_len=seq_len, n_chunks=n_chunks, reverse=reverse)

    # TODO(synk): on v7x (2 TensorCores) a leading "parallel" batch-split grid axis (when the
    # padded batch is >= 2 tiles) would use the second core; omitted to keep this path simple.
    return pl.pallas_call(
        kernel,
        out_shape=jax.ShapeDtypeStruct((rows, hidden), out_dtype),
        grid=(n_chunks,),
        in_specs=[
            pl.BlockSpec(blk, seq_map),                        # x chunk (streamed)
            pl.BlockSpec(memory_space=pl.ANY),                 # W_ih^T stays in HBM
            pl.BlockSpec(memory_space=pl.ANY),                 # W_hh^T stays in HBM
            pl.BlockSpec((1, 4 * hidden), lambda i: (0, 0)),   # bias (tiny, VMEM)
        ],
        out_specs=pl.BlockSpec(blk, seq_map),
        scratch_shapes=[
            pltpu.VMEM((hidden, 4 * hidden), jnp.bfloat16),          # W_ih^T resident copy
            pltpu.VMEM((hidden, 4 * hidden), jnp.bfloat16),          # W_hh^T resident copy
            pltpu.VMEM((t_chunk * batch, 4 * hidden), jnp.float32),  # gx chunk
            pltpu.VMEM((batch, hidden), jnp.bfloat16),               # h state
            pltpu.VMEM((batch, hidden), jnp.float32),                # c state
            pltpu.SemaphoreType.DMA((2,)),                           # weight-copy sems
        ],
        compiler_params=pltpu.CompilerParams(
            dimension_semantics=("arbitrary",),                # sequential: h/c carry
            vmem_limit_bytes=vmem_limit),
    )(x2d, wih, whh, bias)


def _pick_time_chunk(T, Bp, Cp, vmem_budget):
    """Largest time chunk whose streamed blocks + scratch fit the VMEM budget."""
    # per time step: x bf16 (x2 buffers) + out <=f32 (x2 buffers) + gx f32 (4*Cp)
    per_t = Bp * Cp * (2 * 2 + 4 * 2 + 4 * 4)
    # resident: single VMEM copy of each bf16 weight + double-buffered tiny bias + h/c state
    fixed = 2 * (Cp * 4 * Cp * 2) + 2 * (4 * Cp * 4) + Bp * Cp * (2 + 4)
    tc = max(1, (vmem_budget - fixed) // per_t)
    return int(min(T, tc))


def _pad_gate_weight(w_t, c, cp):
    # w_t: (C, 4C) = W^T, gate-major columns [i,f,g,o] -> (Cp, 4Cp) with zero padding
    w4 = w_t.reshape(c, 4, c)
    w4 = jnp.pad(w4, ((0, cp - c), (0, 0), (0, cp - c)))
    return w4.reshape(cp, 4 * cp).astype(jnp.bfloat16)


def _pad_gate_bias(b, c, cp):
    b4 = b.reshape(4, c)
    b4 = jnp.pad(b4, ((0, 0), (0, cp - c)))
    return b4.reshape(1, 4 * cp).astype(jnp.float32)


def init_blstm_params(key, channel):
    """Matches the module init: kaiming_normal_ on W_ih/W_hh (fan_in=C, gain=sqrt(2)), zero biases.
    Weights stored transposed: (C, 4C), PyTorch gate order [i, f, g, o]; bias = b_ih + b_hh."""
    std = jnp.sqrt(2.0 / channel)
    k = jax.random.split(key, 4)

    def w(kk):
        return (jax.random.normal(kk, (4 * channel, channel), jnp.float32) * std).T

    zb = jnp.zeros((1, 4 * channel), jnp.float32)
    return {"wih_f": w(k[0]), "whh_f": w(k[1]), "b_f": zb,
            "wih_b": w(k[2]), "whh_b": w(k[3]), "b_b": zb}


@jax.jit
def blstm_forward(x, params):
    """x: (B, T, C) float32 batch_first, like the PyTorch module (eval mode)."""
    B, T, C = x.shape
    Bp = _round_up(B, _BATCH_ALIGN)
    Cp = _round_up(C, _LANE)
    vmem_budget, vmem_limit = _vmem_limits()
    t_chunk = _pick_time_chunk(T, Bp, Cp, vmem_budget)
    Tp = _round_up(T, t_chunk)

    # time-major, zero-padded; zero-padded weights/bias keep padded lanes exactly 0
    x_t = jnp.transpose(x, (1, 0, 2))                                   # (T, B, C)
    x_p = jnp.pad(x_t, ((0, Tp - T), (0, Bp - B), (0, Cp - C))).astype(jnp.bfloat16)
    x2d = x_p.reshape(Tp * Bp, Cp)

    wih_f = _pad_gate_weight(params["wih_f"], C, Cp)
    whh_f = _pad_gate_weight(params["whh_f"], C, Cp)
    b_f = _pad_gate_bias(params["b_f"], C, Cp)
    wih_b = _pad_gate_weight(params["wih_b"], C, Cp)
    whh_b = _pad_gate_weight(params["whh_b"], C, Cp)
    b_b = _pad_gate_bias(params["b_b"], C, Cp)

    common = dict(seq_len=T, t_chunk=t_chunk, batch=Bp, hidden=Cp,
                  vmem_limit=vmem_limit)

    # forward LSTM -> Dropout (eval-mode identity) -> GELU  (GELU fused in kernel; the
    # inter-direction intermediate stays bf16 to halve its HBM round trip)
    # TODO(synk): training-mode Dropout(p=0.5) RNG masking not implemented (eval identity).
    h1 = _lstm_pass(x2d, wih_f, whh_f, b_f, reverse=False,
                    out_dtype=jnp.bfloat16, **common)

    # flip -> backward LSTM -> flip -> GELU: done in-kernel by walking chunks and steps in
    # reverse time order; final GELU fused into the per-step store.
    y2d = _lstm_pass(h1, wih_b, whh_b, b_b, reverse=True,
                     out_dtype=jnp.float32, **common)

    y = y2d.reshape(Tp, Bp, Cp)[:T, :B, :C]
    return jnp.transpose(y, (1, 0, 2))                                  # (B, T, C)


if __name__ == "__main__":
    B, T, C = 2, 8, 32
    key = jax.random.PRNGKey(0)
    k_x, k_p = jax.random.split(key)

    x = jax.random.normal(k_x, (B, T, C), jnp.float32)
    params = init_blstm_params(k_p, C)

    out = blstm_forward(x, params)
    jax.block_until_ready(out)
    assert out.shape == (B, T, C) and out.dtype == jnp.float32
    assert bool(jnp.all(jnp.isfinite(out)))
    print("KERNEL_OK")
</pallas_src>

<mosaic_0001>
module attributes {stable_mosaic.version = 11 : i64} {
  func.func @_lstm_chunk_kernel(%arg0: i32, %arg1: memref<128x128xbf16, #tpu.memory_space<vmem>>, %arg2: memref<128x512xbf16, #tpu.memory_space<any>>, %arg3: memref<128x512xbf16, #tpu.memory_space<any>>, %arg4: memref<1x512xf32, #tpu.memory_space<vmem>>, %arg5: memref<128x128xbf16, #tpu.memory_space<vmem>>, %arg6: memref<128x512xbf16, #tpu.memory_space<vmem>>, %arg7: memref<128x512xbf16, #tpu.memory_space<vmem>>, %arg8: memref<128x512xf32, #tpu.memory_space<vmem>>, %arg9: memref<16x128xbf16, #tpu.memory_space<vmem>>, %arg10: memref<16x128xf32, #tpu.memory_space<vmem>>, %arg11: memref<2x!tpu.dma_semaphore, #tpu.memory_space<semaphore_mem>>) attributes {dimension_semantics = [#tpu.dimension_semantics<arbitrary>], iteration_bounds = array<i64: 1>, scalar_prefetch = 0 : i64, scratch_operands = 6 : i64, tpu.core_type = #tpu.core_type<tc>, window_params = [{transform_indices = @transform_0, window_bounds = array<i64: 128, 128>}, {}, {}, {pipeline_mode = #tpu.pipeline_mode<synchronous>, transform_indices = @transform_3, window_bounds = array<i64: 1, 512>}, {transform_indices = @transform_4, window_bounds = array<i64: 128, 128>}]} {
    %c0_i32 = arith.constant 0 : i32
    %0 = arith.cmpi eq, %arg0, %c0_i32 : i32
    %1 = arith.extui %0 : i1 to i32
    %c0_i32_0 = arith.constant 0 : i32
    %2 = arith.cmpi ne, %1, %c0_i32_0 : i32
    scf.if %2 {
      %c0_i32_10 = arith.constant 0 : i32
      %11 = tpu.memref_slice %arg11[%c0_i32_10] : memref<2x!tpu.dma_semaphore, #tpu.memory_space<semaphore_mem>> -> memref<1x!tpu.dma_semaphore, #tpu.memory_space<semaphore_mem>>
      %12 = tpu.memref_squeeze %11 : memref<1x!tpu.dma_semaphore, #tpu.memory_space<semaphore_mem>> -> memref<!tpu.dma_semaphore, #tpu.memory_space<semaphore_mem>>
      tpu.enqueue_dma source(%arg2 : memref<128x512xbf16, #tpu.memory_space<any>>) target(%arg6 : memref<128x512xbf16, #tpu.memory_space<vmem>>) target_semaphore(%12 : memref<!tpu.dma_semaphore, #tpu.memory_space<semaphore_mem>>)
      %c1_i32_11 = arith.constant 1 : i32
      %13 = tpu.memref_slice %arg11[%c1_i32_11] : memref<2x!tpu.dma_semaphore, #tpu.memory_space<semaphore_mem>> -> memref<1x!tpu.dma_semaphore, #tpu.memory_space<semaphore_mem>>
      %14 = tpu.memref_squeeze %13 : memref<1x!tpu.dma_semaphore, #tpu.memory_space<semaphore_mem>> -> memref<!tpu.dma_semaphore, #tpu.memory_space<semaphore_mem>>
      tpu.enqueue_dma source(%arg3 : memref<128x512xbf16, #tpu.memory_space<any>>) target(%arg7 : memref<128x512xbf16, #tpu.memory_space<vmem>>) target_semaphore(%14 : memref<!tpu.dma_semaphore, #tpu.memory_space<semaphore_mem>>)
      %cst_12 = arith.constant 0.000000e+00 : bf16
      %15 = vector.broadcast %cst_12 : bf16 to vector<16x128xbf16>
      %c0_13 = arith.constant 0 : index
      %c0_14 = arith.constant 0 : index
      %16 = vector.load %arg9[%c0_13, %c0_14] : memref<16x128xbf16, #tpu.memory_space<vmem>>, vector<16x128xbf16>
      tpu.vector_store %arg9[%c0_13, %c0_14], %15 {strides = array<i32>} : memref<16x128xbf16, #tpu.memory_space<vmem>>, vector<16x128xbf16>,
      %cst_15 = arith.constant 0.000000e+00 : f32
      %17 = vector.broadcast %cst_15 : f32 to vector<16x128xf32>
      %c0_16 = arith.constant 0 : index
      %c0_17 = arith.constant 0 : index
      %18 = vector.load %arg10[%c0_16, %c0_17] : memref<16x128xf32, #tpu.memory_space<vmem>>, vector<16x128xf32>
      tpu.vector_store %arg10[%c0_16, %c0_17], %17 {strides = array<i32>} : memref<16x128xf32, #tpu.memory_space<vmem>>, vector<16x128xf32>,
      %c0_i32_18 = arith.constant 0 : i32
      %19 = tpu.memref_slice %arg11[%c0_i32_18] : memref<2x!tpu.dma_semaphore, #tpu.memory_space<semaphore_mem>> -> memref<1x!tpu.dma_semaphore, #tpu.memory_space<semaphore_mem>>
      %20 = tpu.memref_squeeze %19 : memref<1x!tpu.dma_semaphore, #tpu.memory_space<semaphore_mem>> -> memref<!tpu.dma_semaphore, #tpu.memory_space<semaphore_mem>>
      tpu.wait_dma2 semaphore(%20 : memref<!tpu.dma_semaphore, #tpu.memory_space<semaphore_mem>>) src(%arg2 : memref<128x512xbf16, #tpu.memory_space<any>>) dst(%arg6 : memref<128x512xbf16, #tpu.memory_space<vmem>>)
      %c1_i32_19 = arith.constant 1 : i32
      %21 = tpu.memref_slice %arg11[%c1_i32_19] : memref<2x!tpu.dma_semaphore, #tpu.memory_space<semaphore_mem>> -> memref<1x!tpu.dma_semaphore, #tpu.memory_space<semaphore_mem>>
      %22 = tpu.memref_squeeze %21 : memref<1x!tpu.dma_semaphore, #tpu.memory_space<semaphore_mem>> -> memref<!tpu.dma_semaphore, #tpu.memory_space<semaphore_mem>>
      tpu.wait_dma2 semaphore(%22 : memref<!tpu.dma_semaphore, #tpu.memory_space<semaphore_mem>>) src(%arg3 : memref<128x512xbf16, #tpu.memory_space<any>>) dst(%arg7 : memref<128x512xbf16, #tpu.memory_space<vmem>>)
    } else {
    }
    %c0 = arith.constant 0 : index
    %c0_1 = arith.constant 0 : index
    %3 = vector.load %arg1[%c0, %c0_1] : memref<128x128xbf16, #tpu.memory_space<vmem>>, vector<128x128xbf16>
    %c0_2 = arith.constant 0 : index
    %c0_3 = arith.constant 0 : index
    %4 = vector.load %arg6[%c0_2, %c0_3] : memref<128x512xbf16, #tpu.memory_space<vmem>>, vector<128x512xbf16>
    %cst = arith.constant dense<0.000000e+00> : vector<128x512xf32>
    %5 = tpu.matmul %3, %4, %cst {dimension_numbers = #tpu.dot_dimension_numbers<[1], [0], [0], [1], [0, 0, 1, 1], [], []>} : vector<128x128xbf16>, vector<128x512xbf16>, vector<128x512xf32> -> vector<128x512xf32>
    %c0_4 = arith.constant 0 : index
    %c0_5 = arith.constant 0 : index
    %6 = vector.load %arg4[%c0_4, %c0_5] : memref<1x512xf32, #tpu.memory_space<vmem>>, vector<1x512xf32>
    %7 = vector.broadcast %6 : vector<1x512xf32> to vector<128x512xf32>
    %8 = arith.addf %5, %7 : vector<128x512xf32>
    %c0_6 = arith.constant 0 : index
    %c0_7 = arith.constant 0 : index
    %9 = vector.load %arg8[%c0_6, %c0_7] : memref<128x512xf32, #tpu.memory_space<vmem>>, vector<128x512xf32>
    tpu.vector_store %arg8[%c0_6, %c0_7], %8 {strides = array<i32>} : memref<128x512xf32, #tpu.memory_space<vmem>>, vector<128x512xf32>,
    %c0_i32_8 = arith.constant 0 : i32
    %c8_i32 = arith.constant 8 : i32
    %10 = arith.addi %c0_i32_8, %c8_i32 : i32
    %c1_i32 = arith.constant 1 : i32
    scf.for %arg12 = %c0_i32_8 to %10 step %c1_i32  : i32 {
      %c1_i32_10 = arith.constant 1 : i32
      %11 = arith.muli %arg12, %c1_i32_10 : i32
      %c0_i32_11 = arith.constant 0 : i32
      %12 = arith.addi %c0_i32_11, %11 : i32
      %c16_i32 = arith.constant 16 : i32
      %13 = arith.muli %12, %c16_i32 : i32
      %14 = tpu.assume_multiple %13, 16 : i32
      %15 = arith.index_cast %14 : i32 to index
      %c0_12 = arith.constant 0 : index
      %16 = vector.load %arg8[%15, %c0_12] : memref<128x512xf32, #tpu.memory_space<vmem>>, vector<16x512xf32>
      %c0_13 = arith.constant 0 : index
      %c0_14 = arith.constant 0 : index
      %17 = vector.load %arg9[%c0_13, %c0_14] : memref<16x128xbf16, #tpu.memory_space<vmem>>, vector<16x128xbf16>
      %c0_15 = arith.constant 0 : index
      %c0_16 = arith.constant 0 : index
      %18 = vector.load %arg7[%c0_15, %c0_16] : memref<128x512xbf16, #tpu.memory_space<vmem>>, vector<128x512xbf16>
      %cst_17 = arith.constant dense<0.000000e+00> : vector<16x512xf32>
      %19 = tpu.matmul %17, %18, %cst_17 {dimension_numbers = #tpu.dot_dimension_numbers<[1], [0], [0], [1], [0, 0, 1, 1], [], []>} : vector<16x128xbf16>, vector<128x512xbf16>, vector<16x512xf32> -> vector<16x512xf32>
      %20 = arith.addf %16, %19 : vector<16x512xf32>
      %21 = vector.extract_strided_slice %20 {offsets = [0, 0], sizes = [16, 128], strides = [1, 1]} : vector<16x512xf32> to vector<16x128xf32>
      %22 = arith.negf %21 : vector<16x128xf32>
      %23 = math.exp %22 : vector<16x128xf32>
      %cst_18 = arith.constant 1.000000e+00 : f32
      %24 = vector.broadcast %cst_18 : f32 to vector<16x128xf32>
      %25 = arith.addf %24, %23 : vector<16x128xf32>
      %26 = arith.divf %24, %25 : vector<16x128xf32>
      %27 = vector.extract_strided_slice %20 {offsets = [0, 128], sizes = [16, 128], strides = [1, 1]} : vector<16x512xf32> to vector<16x128xf32>
      %28 = arith.negf %27 : vector<16x128xf32>
      %29 = math.exp %28 : vector<16x128xf32>
      %cst_19 = arith.constant 1.000000e+00 : f32
      %30 = vector.broadcast %cst_19 : f32 to vector<16x128xf32>
      %31 = arith.addf %30, %29 : vector<16x128xf32>
      %32 = arith.divf %30, %31 : vector<16x128xf32>
      %33 = vector.extract_strided_slice %20 {offsets = [0, 256], sizes = [16, 128], strides = [1, 1]} : vector<16x512xf32> to vector<16x128xf32>
      %34 = math.tanh %33 : vector<16x128xf32>
      %35 = vector.extract_strided_slice %20 {offsets = [0, 384], sizes = [16, 128], strides = [1, 1]} : vector<16x512xf32> to vector<16x128xf32>
      %36 = arith.negf %35 : vector<16x128xf32>
      %37 = math.exp %36 : vector<16x128xf32>
      %cst_20 = arith.constant 1.000000e+00 : f32
      %38 = vector.broadcast %cst_20 : f32 to vector<16x128xf32>
      %39 = arith.addf %38, %37 : vector<16x128xf32>
      %40 = arith.divf %38, %39 : vector<16x128xf32>
      %c0_21 = arith.constant 0 : index
      %c0_22 = arith.constant 0 : index
      %41 = vector.load %arg10[%c0_21, %c0_22] : memref<16x128xf32, #tpu.memory_space<vmem>>, vector<16x128xf32>
      %42 = arith.mulf %32, %41 : vector<16x128xf32>
      %43 = arith.mulf %26, %34 : vector<16x128xf32>
      %44 = arith.addf %42, %43 : vector<16x128xf32>
      %45 = math.tanh %44 : vector<16x128xf32>
      %46 = arith.mulf %40, %45 : vector<16x128xf32>
      %47 = arith.truncf %46 : vector<16x128xf32> to vector<16x128xbf16>
      %c0_23 = arith.constant 0 : index
      %c0_24 = arith.constant 0 : index
      %48 = vector.load %arg9[%c0_23, %c0_24] : memref<16x128xbf16, #tpu.memory_space<vmem>>, vector<16x128xbf16>
      tpu.vector_store %arg9[%c0_23, %c0_24], %47 {strides = array<i32>} : memref<16x128xbf16, #tpu.memory_space<vmem>>, vector<16x128xbf16>,
      %c0_25 = arith.constant 0 : index
      %c0_26 = arith.constant 0 : index
      %49 = vector.load %arg10[%c0_25, %c0_26] : memref<16x128xf32, #tpu.memory_space<vmem>>, vector<16x128xf32>
      tpu.vector_store %arg10[%c0_25, %c0_26], %44 {strides = array<i32>} : memref<16x128xf32, #tpu.memory_space<vmem>>, vector<16x128xf32>,
      %cst_27 = arith.constant 5.000000e-01 : f32
      %50 = vector.broadcast %cst_27 : f32 to vector<16x128xf32>
      %51 = arith.mulf %50, %46 : vector<16x128xf32>
      %cst_28 = arith.constant 0.707106769 : f32
      %52 = vector.broadcast %cst_28 : f32 to vector<16x128xf32>
      %53 = arith.mulf %46, %52 : vector<16x128xf32>
      %54 = math.erf %53 : vector<16x128xf32>
      %cst_29 = arith.constant 1.000000e+00 : f32
      %55 = vector.broadcast %cst_29 : f32 to vector<16x128xf32>
      %56 = arith.addf %55, %54 : vector<16x128xf32>
      %57 = arith.mulf %51, %56 : vector<16x128xf32>
      %58 = arith.truncf %57 : vector<16x128xf32> to vector<16x128xbf16>
      %59 = arith.index_cast %14 : i32 to index
      %c0_30 = arith.constant 0 : index
      %60 = vector.load %arg5[%59, %c0_30] : memref<128x128xbf16, #tpu.memory_space<vmem>>, vector<16x128xbf16>
      tpu.vector_store %arg5[%59, %c0_30], %58 {strides = array<i32>} : memref<128x128xbf16, #tpu.memory_space<vmem>>, vector<16x128xbf16>,
    }
    %c8_i32_9 = arith.constant 8 : i32
    return
  }
  func.func @transform_0(%arg0: i32) -> (i32, i32) {
    %c0_i32 = arith.constant 0 : i32
    %c0_i32_0 = arith.constant 0 : i32
    return %arg0, %c0_i32 : i32, i32
  }
  func.func @transform_3(%arg0: i32) -> (i32, i32) {
    %c0_i32 = arith.constant 0 : i32
    %c0_i32_0 = arith.constant 0 : i32
    %c0_i32_1 = arith.constant 0 : i32
    return %c0_i32, %c0_i32_0 : i32, i32
  }
  func.func @transform_4(%arg0: i32) -> (i32, i32) {
    %c0_i32 = arith.constant 0 : i32
    %c0_i32_0 = arith.constant 0 : i32
    return %arg0, %c0_i32 : i32, i32
  }
}

module attributes {stable_mosaic.version = 11 : i64} {
  func.func @_lstm_chunk_kernel(%arg0: i32, %arg1: memref<128x128xbf16, #tpu.memory_space<vmem>>, %arg2: memref<128x512xbf16, #tpu.memory_space<any>>, %arg3: memref<128x512xbf16, #tpu.memory_space<any>>, %arg4: memref<1x512xf32, #tpu.memory_space<vmem>>, %arg5: memref<128x128xf32, #tpu.memory_space<vmem>>, %arg6: memref<128x512xbf16, #tpu.memory_space<vmem>>, %arg7: memref<128x512xbf16, #tpu.memory_space<vmem>>, %arg8: memref<128x512xf32, #tpu.memory_space<vmem>>, %arg9: memref<16x128xbf16, #tpu.memory_space<vmem>>, %arg10: memref<16x128xf32, #tpu.memory_space<vmem>>, %arg11: memref<2x!tpu.dma_semaphore, #tpu.memory_space<semaphore_mem>>) attributes {dimension_semantics = [#tpu.dimension_semantics<arbitrary>], iteration_bounds = array<i64: 1>, scalar_prefetch = 0 : i64, scratch_operands = 6 : i64, tpu.core_type = #tpu.core_type<tc>, window_params = [{transform_indices = @transform_0, window_bounds = array<i64: 128, 128>}, {}, {}, {pipeline_mode = #tpu.pipeline_mode<synchronous>, transform_indices = @transform_3, window_bounds = array<i64: 1, 512>}, {transform_indices = @transform_4, window_bounds = array<i64: 128, 128>}]} {
    %c0_i32 = arith.constant 0 : i32
    %0 = arith.cmpi eq, %arg0, %c0_i32 : i32
    %1 = arith.extui %0 : i1 to i32
    %c0_i32_0 = arith.constant 0 : i32
    %2 = arith.cmpi ne, %1, %c0_i32_0 : i32
    scf.if %2 {
      %c0_i32_10 = arith.constant 0 : i32
      %11 = tpu.memref_slice %arg11[%c0_i32_10] : memref<2x!tpu.dma_semaphore, #tpu.memory_space<semaphore_mem>> -> memref<1x!tpu.dma_semaphore, #tpu.memory_space<semaphore_mem>>
      %12 = tpu.memref_squeeze %11 : memref<1x!tpu.dma_semaphore, #tpu.memory_space<semaphore_mem>> -> memref<!tpu.dma_semaphore, #tpu.memory_space<semaphore_mem>>
      tpu.enqueue_dma source(%arg2 : memref<128x512xbf16, #tpu.memory_space<any>>) target(%arg6 : memref<128x512xbf16, #tpu.memory_space<vmem>>) target_semaphore(%12 : memref<!tpu.dma_semaphore, #tpu.memory_space<semaphore_mem>>)
      %c1_i32_11 = arith.constant 1 : i32
      %13 = tpu.memref_slice %arg11[%c1_i32_11] : memref<2x!tpu.dma_semaphore, #tpu.memory_space<semaphore_mem>> -> memref<1x!tpu.dma_semaphore, #tpu.memory_space<semaphore_mem>>
      %14 = tpu.memref_squeeze %13 : memref<1x!tpu.dma_semaphore, #tpu.memory_space<semaphore_mem>> -> memref<!tpu.dma_semaphore, #tpu.memory_space<semaphore_mem>>
      tpu.enqueue_dma source(%arg3 : memref<128x512xbf16, #tpu.memory_space<any>>) target(%arg7 : memref<128x512xbf16, #tpu.memory_space<vmem>>) target_semaphore(%14 : memref<!tpu.dma_semaphore, #tpu.memory_space<semaphore_mem>>)
      %cst_12 = arith.constant 0.000000e+00 : bf16
      %15 = vector.broadcast %cst_12 : bf16 to vector<16x128xbf16>
      %c0_13 = arith.constant 0 : index
      %c0_14 = arith.constant 0 : index
      %16 = vector.load %arg9[%c0_13, %c0_14] : memref<16x128xbf16, #tpu.memory_space<vmem>>, vector<16x128xbf16>
      tpu.vector_store %arg9[%c0_13, %c0_14], %15 {strides = array<i32>} : memref<16x128xbf16, #tpu.memory_space<vmem>>, vector<16x128xbf16>,
      %cst_15 = arith.constant 0.000000e+00 : f32
      %17 = vector.broadcast %cst_15 : f32 to vector<16x128xf32>
      %c0_16 = arith.constant 0 : index
      %c0_17 = arith.constant 0 : index
      %18 = vector.load %arg10[%c0_16, %c0_17] : memref<16x128xf32, #tpu.memory_space<vmem>>, vector<16x128xf32>
      tpu.vector_store %arg10[%c0_16, %c0_17], %17 {strides = array<i32>} : memref<16x128xf32, #tpu.memory_space<vmem>>, vector<16x128xf32>,
      %c0_i32_18 = arith.constant 0 : i32
      %19 = tpu.memref_slice %arg11[%c0_i32_18] : memref<2x!tpu.dma_semaphore, #tpu.memory_space<semaphore_mem>> -> memref<1x!tpu.dma_semaphore, #tpu.memory_space<semaphore_mem>>
      %20 = tpu.memref_squeeze %19 : memref<1x!tpu.dma_semaphore, #tpu.memory_space<semaphore_mem>> -> memref<!tpu.dma_semaphore, #tpu.memory_space<semaphore_mem>>
      tpu.wait_dma2 semaphore(%20 : memref<!tpu.dma_semaphore, #tpu.memory_space<semaphore_mem>>) src(%arg2 : memref<128x512xbf16, #tpu.memory_space<any>>) dst(%arg6 : memref<128x512xbf16, #tpu.memory_space<vmem>>)
      %c1_i32_19 = arith.constant 1 : i32
      %21 = tpu.memref_slice %arg11[%c1_i32_19] : memref<2x!tpu.dma_semaphore, #tpu.memory_space<semaphore_mem>> -> memref<1x!tpu.dma_semaphore, #tpu.memory_space<semaphore_mem>>
      %22 = tpu.memref_squeeze %21 : memref<1x!tpu.dma_semaphore, #tpu.memory_space<semaphore_mem>> -> memref<!tpu.dma_semaphore, #tpu.memory_space<semaphore_mem>>
      tpu.wait_dma2 semaphore(%22 : memref<!tpu.dma_semaphore, #tpu.memory_space<semaphore_mem>>) src(%arg3 : memref<128x512xbf16, #tpu.memory_space<any>>) dst(%arg7 : memref<128x512xbf16, #tpu.memory_space<vmem>>)
    } else {
    }
    %c0 = arith.constant 0 : index
    %c0_1 = arith.constant 0 : index
    %3 = vector.load %arg1[%c0, %c0_1] : memref<128x128xbf16, #tpu.memory_space<vmem>>, vector<128x128xbf16>
    %c0_2 = arith.constant 0 : index
    %c0_3 = arith.constant 0 : index
    %4 = vector.load %arg6[%c0_2, %c0_3] : memref<128x512xbf16, #tpu.memory_space<vmem>>, vector<128x512xbf16>
    %cst = arith.constant dense<0.000000e+00> : vector<128x512xf32>
    %5 = tpu.matmul %3, %4, %cst {dimension_numbers = #tpu.dot_dimension_numbers<[1], [0], [0], [1], [0, 0, 1, 1], [], []>} : vector<128x128xbf16>, vector<128x512xbf16>, vector<128x512xf32> -> vector<128x512xf32>
    %c0_4 = arith.constant 0 : index
    %c0_5 = arith.constant 0 : index
    %6 = vector.load %arg4[%c0_4, %c0_5] : memref<1x512xf32, #tpu.memory_space<vmem>>, vector<1x512xf32>
    %7 = vector.broadcast %6 : vector<1x512xf32> to vector<128x512xf32>
    %8 = arith.addf %5, %7 : vector<128x512xf32>
    %c0_6 = arith.constant 0 : index
    %c0_7 = arith.constant 0 : index
    %9 = vector.load %arg8[%c0_6, %c0_7] : memref<128x512xf32, #tpu.memory_space<vmem>>, vector<128x512xf32>
    tpu.vector_store %arg8[%c0_6, %c0_7], %8 {strides = array<i32>} : memref<128x512xf32, #tpu.memory_space<vmem>>, vector<128x512xf32>,
    %c0_i32_8 = arith.constant 0 : i32
    %c8_i32 = arith.constant 8 : i32
    %10 = arith.addi %c0_i32_8, %c8_i32 : i32
    %c1_i32 = arith.constant 1 : i32
    scf.for %arg12 = %c0_i32_8 to %10 step %c1_i32  : i32 {
      %c1_i32_10 = arith.constant 1 : i32
      %11 = arith.muli %arg12, %c1_i32_10 : i32
      %c0_i32_11 = arith.constant 0 : i32
      %12 = arith.addi %c0_i32_11, %11 : i32
      %c7_i32 = arith.constant 7 : i32
      %13 = arith.subi %c7_i32, %12 : i32
      %c16_i32 = arith.constant 16 : i32
      %14 = arith.muli %13, %c16_i32 : i32
      %15 = tpu.assume_multiple %14, 16 : i32
      %16 = arith.index_cast %15 : i32 to index
      %c0_12 = arith.constant 0 : index
      %17 = vector.load %arg8[%16, %c0_12] : memref<128x512xf32, #tpu.memory_space<vmem>>, vector<16x512xf32>
      %c0_13 = arith.constant 0 : index
      %c0_14 = arith.constant 0 : index
      %18 = vector.load %arg9[%c0_13, %c0_14] : memref<16x128xbf16, #tpu.memory_space<vmem>>, vector<16x128xbf16>
      %c0_15 = arith.constant 0 : index
      %c0_16 = arith.constant 0 : index
      %19 = vector.load %arg7[%c0_15, %c0_16] : memref<128x512xbf16, #tpu.memory_space<vmem>>, vector<128x512xbf16>
      %cst_17 = arith.constant dense<0.000000e+00> : vector<16x512xf32>
      %20 = tpu.matmul %18, %19, %cst_17 {dimension_numbers = #tpu.dot_dimension_numbers<[1], [0], [0], [1], [0, 0, 1, 1], [], []>} : vector<16x128xbf16>, vector<128x512xbf16>, vector<16x512xf32> -> vector<16x512xf32>
      %21 = arith.addf %17, %20 : vector<16x512xf32>
      %22 = vector.extract_strided_slice %21 {offsets = [0, 0], sizes = [16, 128], strides = [1, 1]} : vector<16x512xf32> to vector<16x128xf32>
      %23 = arith.negf %22 : vector<16x128xf32>
      %24 = math.exp %23 : vector<16x128xf32>
      %cst_18 = arith.constant 1.000000e+00 : f32
      %25 = vector.broadcast %cst_18 : f32 to vector<16x128xf32>
      %26 = arith.addf %25, %24 : vector<16x128xf32>
      %27 = arith.divf %25, %26 : vector<16x128xf32>
      %28 = vector.extract_strided_slice %21 {offsets = [0, 128], sizes = [16, 128], strides = [1, 1]} : vector<16x512xf32> to vector<16x128xf32>
      %29 = arith.negf %28 : vector<16x128xf32>
      %30 = math.exp %29 : vector<16x128xf32>
      %cst_19 = arith.constant 1.000000e+00 : f32
      %31 = vector.broadcast %cst_19 : f32 to vector<16x128xf32>
      %32 = arith.addf %31, %30 : vector<16x128xf32>
      %33 = arith.divf %31, %32 : vector<16x128xf32>
      %34 = vector.extract_strided_slice %21 {offsets = [0, 256], sizes = [16, 128], strides = [1, 1]} : vector<16x512xf32> to vector<16x128xf32>
      %35 = math.tanh %34 : vector<16x128xf32>
      %36 = vector.extract_strided_slice %21 {offsets = [0, 384], sizes = [16, 128], strides = [1, 1]} : vector<16x512xf32> to vector<16x128xf32>
      %37 = arith.negf %36 : vector<16x128xf32>
      %38 = math.exp %37 : vector<16x128xf32>
      %cst_20 = arith.constant 1.000000e+00 : f32
      %39 = vector.broadcast %cst_20 : f32 to vector<16x128xf32>
      %40 = arith.addf %39, %38 : vector<16x128xf32>
      %41 = arith.divf %39, %40 : vector<16x128xf32>
      %c0_21 = arith.constant 0 : index
      %c0_22 = arith.constant 0 : index
      %42 = vector.load %arg10[%c0_21, %c0_22] : memref<16x128xf32, #tpu.memory_space<vmem>>, vector<16x128xf32>
      %43 = arith.mulf %33, %42 : vector<16x128xf32>
      %44 = arith.mulf %27, %35 : vector<16x128xf32>
      %45 = arith.addf %43, %44 : vector<16x128xf32>
      %46 = math.tanh %45 : vector<16x128xf32>
      %47 = arith.mulf %41, %46 : vector<16x128xf32>
      %48 = arith.truncf %47 : vector<16x128xf32> to vector<16x128xbf16>
      %c0_23 = arith.constant 0 : index
      %c0_24 = arith.constant 0 : index
      %49 = vector.load %arg9[%c0_23, %c0_24] : memref<16x128xbf16, #tpu.memory_space<vmem>>, vector<16x128xbf16>
      tpu.vector_store %arg9[%c0_23, %c0_24], %48 {strides = array<i32>} : memref<16x128xbf16, #tpu.memory_space<vmem>>, vector<16x128xbf16>,
      %c0_25 = arith.constant 0 : index
      %c0_26 = arith.constant 0 : index
      %50 = vector.load %arg10[%c0_25, %c0_26] : memref<16x128xf32, #tpu.memory_space<vmem>>, vector<16x128xf32>
      tpu.vector_store %arg10[%c0_25, %c0_26], %45 {strides = array<i32>} : memref<16x128xf32, #tpu.memory_space<vmem>>, vector<16x128xf32>,
      %cst_27 = arith.constant 5.000000e-01 : f32
      %51 = vector.broadcast %cst_27 : f32 to vector<16x128xf32>
      %52 = arith.mulf %51, %47 : vector<16x128xf32>
      %cst_28 = arith.constant 0.707106769 : f32
      %53 = vector.broadcast %cst_28 : f32 to vector<16x128xf32>
      %54 = arith.mulf %47, %53 : vector<16x128xf32>
      %55 = math.erf %54 : vector<16x128xf32>
      %cst_29 = arith.constant 1.000000e+00 : f32
      %56 = vector.broadcast %cst_29 : f32 to vector<16x128xf32>
      %57 = arith.addf %56, %55 : vector<16x128xf32>
      %58 = arith.mulf %52, %57 : vector<16x128xf32>
      %59 = arith.index_cast %15 : i32 to index
      %c0_30 = arith.constant 0 : index
      %60 = vector.load %arg5[%59, %c0_30] : memref<128x128xf32, #tpu.memory_space<vmem>>, vector<16x128xf32>
      tpu.vector_store %arg5[%59, %c0_30], %58 {strides = array<i32>} : memref<128x128xf32, #tpu.memory_space<vmem>>, vector<16x128xf32>,
    }
    %c8_i32_9 = arith.constant 8 : i32
    return
  }
  func.func @transform_0(%arg0: i32) -> (i32, i32) {
    %c0_i32 = arith.constant 0 : i32
    %0 = arith.subi %c0_i32, %arg0 : i32
    %c0_i32_0 = arith.constant 0 : i32
    %c0_i32_1 = arith.constant 0 : i32
    return %0, %c0_i32_0 : i32, i32
  }
  func.func @transform_3(%arg0: i32) -> (i32, i32) {
    %c0_i32 = arith.constant 0 : i32
    %c0_i32_0 = arith.constant 0 : i32
    %c0_i32_1 = arith.constant 0 : i32
    return %c0_i32, %c0_i32_0 : i32, i32
  }
  func.func @transform_4(%arg0: i32) -> (i32, i32) {
    %c0_i32 = arith.constant 0 : i32
    %0 = arith.subi %c0_i32, %arg0 : i32
    %c0_i32_0 = arith.constant 0 : i32
    %c0_i32_1 = arith.constant 0 : i32
    return %0, %c0_i32_0 : i32, i32
  }
}

</mosaic_0001>

<llo_original>
// kernel: blstm_forward.2
$region0: #{blstm_forward.2}
  #allocation0 [shape = 'u32[]', space=smem, size = 0x4, offset = 0x4, fixed_abs, tag = 'smem constant byte address 0x4 - core index']
  #allocation1 [shape = 'u32[144,128]{1,0:T(1,128)}', space=vmem, size = 0x12000, scoped, tag = 'internal scratch']
  #allocation2 [shape = 'bf16[128,512]{1,0:T(16,128)(2,1)}', space=vmem, size = 0x20000, scoped, tag = 'scratch operand']
  #allocation3 [shape = 'bf16[128,512]{1,0:T(16,128)(2,1)}', space=vmem, size = 0x20000, scoped, tag = 'scratch operand']
  #allocation4 [shape = 'f32[128,512]{1,0:T(8,128)}', space=vmem, size = 0x40000, scoped, tag = 'scratch operand']
  #allocation5 [shape = 'bf16[16,128]{1,0:T(16,128)(2,1)}', space=vmem, size = 0x1000, scoped, tag = 'scratch operand']
  #allocation6 [shape = 'f32[16,128]{1,0:T(8,128)}', space=vmem, size = 0x2000, scoped, tag = 'scratch operand']
  #allocation7 [shape = 's32[2]{0}', space=sflag, size = 0x8, scoped, tag = 'scratch operand']
  #allocation8 [shape = 's32[]', space=sflag, size = 0x4, offset = 0, fixed_abs, tag = 'sflag constant byte address 0x0 - dummy sync flag']
  #allocation9 [shape = 's32[]', space=sflag, size = 0x4, offset = 0, fixed_abs, tag = 'sflag constant byte address 0x0 - dummy sync flag']
  %s0 = inlined_call_operand.vmem [shape: bf16[128,128], index: 0, kind: input, shape index: {}]
  %s1 = inlined_call_operand.vmem [shape: bf16[128,512], index: 1, kind: input, shape index: {}]
  %s2 = inlined_call_operand.vmem [shape: bf16[128,512], index: 2, kind: input, shape index: {}]
  %s3 = inlined_call_operand.vmem [shape: f32[1,512], index: 3, kind: input, shape index: {}]
  %s4 = inlined_call_operand.vmem [shape: bf16[128,128], index: 4, kind: output, shape index: {}]
  %s5 = sld [smem:[#allocation0]]
  $region103: #{blstm_forward.2} parent=0
    _
  %s7 = ssub.s32 1, %s5
  %s8 = scalar_select 0, %s7, %s5
  // Predicated region
  $region2: #{blstm_forward.2} parent=0 // pred_check
    _
  $region3: #{blstm_forward.2} parent=0 // pred_check_branch
    %10 = sbr.rel (0) target = $region5
  $region4: #{blstm_forward.2} parent=0 // pred_region
    _
  $region5: #{blstm_forward.2} parent=0 // pred_fallthru
    _
  // Predicated region
  $region6: #{blstm_forward.2} parent=0 // pred_check
    _
  $region7: #{blstm_forward.2} parent=0 // pred_check_branch
    %12 = sbr.rel (0) target = $region9
  $region8: #{blstm_forward.2} parent=0 // pred_region
    _
  $region9: #{blstm_forward.2} parent=0 // pred_fallthru
    _
  %p14 = scmp.eq.s32.totalorder 0, 0
  // Predicated region
  $region10: #{blstm_forward.2} parent=0 // pred_check
    %p15 = pneg %p14
  $region11: #{blstm_forward.2} parent=0 // pred_check_branch
    %17 = sbr.rel (%p15) target = $region13
  $region12: #{blstm_forward.2} parent=0 // pred_region
    %p19 = scmp.lt.u32.totalorder 4, 8
    %p20 = pneg %p19
    // Predicated region
    $region14: #{blstm_forward.2} parent=12 // pred_check
      _
    $region15: #{blstm_forward.2} parent=12 // pred_check_branch
      %22 = sbr.rel (%p19) target = $region17
    $region16: #{blstm_forward.2} parent=12 // pred_region
      %s163 = sand.u32 4, 7
      %p164 = scmp.eq.s32.totalorder %s163, 0
      %p165 = pneg %p164
      // Predicated region
      $region29: #{blstm_forward.2} parent=16 // pred_check
        _
      $region30: #{blstm_forward.2} parent=16 // pred_check_branch
        %167 = sbr.rel (%p164) target = $region32
      $region31: #{blstm_forward.2} parent=16 // pred_region
        %s168 = sand.u32 4, 7
        %s169 = ssub.s32 4, %s168
        %s170 = scalar_lea.vmem %s1, %s169
        %s171 = ssub.s32 4, %s168
        %s172 = scalar_lea.vmem [#allocation2], %s171
        loop: start=0, step=1, limit=1
        $region33: #{blstm_forward.2} parent=31 // loop_pre_header
          _
        $region34: #{blstm_forward.2} parent=31 // loop_header
          %s174 = sphi 0, %s178
          %p175 = scmp.ge.s32.totalorder %s174, 1
          %s179 = sphi %s1, %s1
          %s180 = sphi [#allocation2], [#allocation2]
        $region35: #{blstm_forward.2} parent=31 // loop_header_branch
          %177 = sbr.rel (%p175) target = $region39
        $region36: #{blstm_forward.2} parent=31 // loop_body
          _
        $region37: #{blstm_forward.2} parent=31 // loop_footer
          %s178 = sadd.s32 1, %s174
        $region38: #{blstm_forward.2} parent=31 // loop_footer_branch
          %173 = sbr.rel target = $region34
        $region39: #{blstm_forward.2} parent=31 // loop_exit
          _
        %s181 = sshllo.u32 0, %s168
        loop: start=0, step=1, limit=1
        $region40: #{blstm_forward.2} parent=31 // loop_pre_header
          _
        $region41: #{blstm_forward.2} parent=31 // loop_header
          %s183 = sphi 0, %s187
          %p184 = scmp.ge.s32.totalorder %s183, 1
          %s188 = sphi %s170, %s170
          %s189 = sphi %s172, %s172
        $region42: #{blstm_forward.2} parent=31 // loop_header_branch
          %186 = sbr.rel (%p184) target = $region46
        $region43: #{blstm_forward.2} parent=31 // loop_body
          %v190 = vld [vmem:[%s188] sm:%s181]
          %191 = vst [vmem:[%s189] sm:%s181] %v190
          %v192 = vld [vmem:[%s188 + $0x10] sm:%s181]
          %193 = vst [vmem:[%s189 + $0x4] sm:%s181] %v192
          %v194 = vld [vmem:[%s188 + $0x4] sm:%s181]
          %195 = vst [vmem:[%s189 + $0x8] sm:%s181] %v194
          %v196 = vld [vmem:[%s188 + $0x14] sm:%s181]
          %197 = vst [vmem:[%s189 + $0xc] sm:%s181] %v196
          %v198 = vld [vmem:[%s188 + $0x8] sm:%s181]
          %199 = vst [vmem:[%s189 + $0x10] sm:%s181] %v198
          %v200 = vld [vmem:[%s188 + $0x18] sm:%s181]
          %201 = vst [vmem:[%s189 + $0x14] sm:%s181] %v200
          %v202 = vld [vmem:[%s188 + $0xc] sm:%s181]
          %203 = vst [vmem:[%s189 + $0x18] sm:%s181] %v202
          %v204 = vld [vmem:[%s188 + $0x1c] sm:%s181]
          %205 = vst [vmem:[%s189 + $0x1c] sm:%s181] %v204
          %v206 = vld [vmem:[%s188 + $0x20] sm:%s181]
          %207 = vst [vmem:[%s189 + $0x20] sm:%s181] %v206
          %v208 = vld [vmem:[%s188 + $0x30] sm:%s181]
          %209 = vst [vmem:[%s189 + $0x24] sm:%s181] %v208
          %v210 = vld [vmem:[%s188 + $0x24] sm:%s181]
          %211 = vst [vmem:[%s189 + $0x28] sm:%s181] %v210
          %v212 = vld [vmem:[%s188 + $0x34] sm:%s181]
          %213 = vst [vmem:[%s189 + $0x2c] sm:%s181] %v212
          %v214 = vld [vmem:[%s188 + $0x28] sm:%s181]
          %215 = vst [vmem:[%s189 + $0x30] sm:%s181] %v214
          %v216 = vld [vmem:[%s188 + $0x38] sm:%s181]
          %217 = vst [vmem:[%s189 + $0x34] sm:%s181] %v216
          %v218 = vld [vmem:[%s188 + $0x2c] sm:%s181]
          %219 = vst [vmem:[%s189 + $0x38] sm:%s181] %v218
          %v220 = vld [vmem:[%s188 + $0x3c] sm:%s181]
          %221 = vst [vmem:[%s189 + $0x3c] sm:%s181] %v220
          %v222 = vld [vmem:[%s188 + $0x40] sm:%s181]
          %223 = vst [vmem:[%s189 + $0x40] sm:%s181] %v222
          %v224 = vld [vmem:[%s188 + $0x50] sm:%s181]
          %225 = vst [vmem:[%s189 + $0x44] sm:%s181] %v224
          %v226 = vld [vmem:[%s188 + $0x44] sm:%s181]
          %227 = vst [vmem:[%s189 + $0x48] sm:%s181] %v226
          %v228 = vld [vmem:[%s188 + $0x54] sm:%s181]
          %229 = vst [vmem:[%s189 + $0x4c] sm:%s181] %v228
          %v230 = vld [vmem:[%s188 + $0x48] sm:%s181]
          %231 = vst [vmem:[%s189 + $0x50] sm:%s181] %v230
          %v232 = vld [vmem:[%s188 + $0x58] sm:%s181]
          %233 = vst [vmem:[%s189 + $0x54] sm:%s181] %v232
          %v234 = vld [vmem:[%s188 + $0x4c] sm:%s181]
          %235 = vst [vmem:[%s189 + $0x58] sm:%s181] %v234
          %v236 = vld [vmem:[%s188 + $0x5c] sm:%s181]
          %237 = vst [vmem:[%s189 + $0x5c] sm:%s181] %v236
          %v238 = vld [vmem:[%s188 + $0x60] sm:%s181]
          %239 = vst [vmem:[%s189 + $0x60] sm:%s181] %v238
          %v240 = vld [vmem:[%s188 + $0x70] sm:%s181]
          %241 = vst [vmem:[%s189 + $0x64] sm:%s181] %v240
          %v242 = vld [vmem:[%s188 + $0x64] sm:%s181]
          %243 = vst [vmem:[%s189 + $0x68] sm:%s181] %v242
          %v244 = vld [vmem:[%s188 + $0x74] sm:%s181]
          %245 = vst [vmem:[%s189 + $0x6c] sm:%s181] %v244
          %v246 = vld [vmem:[%s188 + $0x68] sm:%s181]
          %247 = vst [vmem:[%s189 + $0x70] sm:%s181] %v246
          %v248 = vld [vmem:[%s188 + $0x78] sm:%s181]
          %249 = vst [vmem:[%s189 + $0x74] sm:%s181] %v248
          %v250 = vld [vmem:[%s188 + $0x6c] sm:%s181]
          %251 = vst [vmem:[%s189 + $0x78] sm:%s181] %v250
          %v252 = vld [vmem:[%s188 + $0x7c] sm:%s181]
          %253 = vst [vmem:[%s189 + $0x7c] sm:%s181] %v252
          %v254 = vld [vmem:[%s188 + $0x80] sm:%s181]
          %255 = vst [vmem:[%s189 + $0x80] sm:%s181] %v254
          %v256 = vld [vmem:[%s188 + $0x90] sm:%s181]
          %257 = vst [vmem:[%s189 + $0x84] sm:%s181] %v256
          %v258 = vld [vmem:[%s188 + $0x84] sm:%s181]
          %259 = vst [vmem:[%s189 + $0x88] sm:%s181] %v258
          %v260 = vld [vmem:[%s188 + $0x94] sm:%s181]
          %261 = vst [vmem:[%s189 + $0x8c] sm:%s181] %v260
          %v262 = vld [vmem:[%s188 + $0x88] sm:%s181]
          %263 = vst [vmem:[%s189 + $0x90] sm:%s181] %v262
          %v264 = vld [vmem:[%s188 + $0x98] sm:%s181]
          %265 = vst [vmem:[%s189 + $0x94] sm:%s181] %v264
          %v266 = vld [vmem:[%s188 + $0x8c] sm:%s181]
          %267 = vst [vmem:[%s189 + $0x98] sm:%s181] %v266
          %v268 = vld [vmem:[%s188 + $0x9c] sm:%s181]
          %269 = vst [vmem:[%s189 + $0x9c] sm:%s181] %v268
          %v270 = vld [vmem:[%s188 + $0xa0] sm:%s181]
          %271 = vst [vmem:[%s189 + $0xa0] sm:%s181] %v270
          %v272 = vld [vmem:[%s188 + $0xb0] sm:%s181]
          %273 = vst [vmem:[%s189 + $0xa4] sm:%s181] %v272
          %v274 = vld [vmem:[%s188 + $0xa4] sm:%s181]
          %275 = vst [vmem:[%s189 + $0xa8] sm:%s181] %v274
          %v276 = vld [vmem:[%s188 + $0xb4] sm:%s181]
          %277 = vst [vmem:[%s189 + $0xac] sm:%s181] %v276
          %v278 = vld [vmem:[%s188 + $0xa8] sm:%s181]
          %279 = vst [vmem:[%s189 + $0xb0] sm:%s181] %v278
          %v280 = vld [vmem:[%s188 + $0xb8] sm:%s181]
          %281 = vst [vmem:[%s189 + $0xb4] sm:%s181] %v280
          %v282 = vld [vmem:[%s188 + $0xac] sm:%s181]
          %283 = vst [vmem:[%s189 + $0xb8] sm:%s181] %v282
          %v284 = vld [vmem:[%s188 + $0xbc] sm:%s181]
          %285 = vst [vmem:[%s189 + $0xbc] sm:%s181] %v284
          %v286 = vld [vmem:[%s188 + $0xc0] sm:%s181]
          %287 = vst [vmem:[%s189 + $0xc0] sm:%s181] %v286
          %v288 = vld [vmem:[%s188 + $0xd0] sm:%s181]
          %289 = vst [vmem:[%s189 + $0xc4] sm:%s181] %v288
          %v290 = vld [vmem:[%s188 + $0xc4] sm:%s181]
          %291 = vst [vmem:[%s189 + $0xc8] sm:%s181] %v290
          %v292 = vld [vmem:[%s188 + $0xd4] sm:%s181]
          %293 = vst [vmem:[%s189 + $0xcc] sm:%s181] %v292
          %v294 = vld [vmem:[%s188 + $0xc8] sm:%s181]
          %295 = vst [vmem:[%s189 + $0xd0] sm:%s181] %v294
          %v296 = vld [vmem:[%s188 + $0xd8] sm:%s181]
          %297 = vst [vmem:[%s189 + $0xd4] sm:%s181] %v296
          %v298 = vld [vmem:[%s188 + $0xcc] sm:%s181]
          %299 = vst [vmem:[%s189 + $0xd8] sm:%s181] %v298
          %v300 = vld [vmem:[%s188 + $0xdc] sm:%s181]
          %301 = vst [vmem:[%s189 + $0xdc] sm:%s181] %v300
          %v302 = vld [vmem:[%s188 + $0xe0] sm:%s181]
          %303 = vst [vmem:[%s189 + $0xe0] sm:%s181] %v302
          %v304 = vld [vmem:[%s188 + $0xf0] sm:%s181]
          %305 = vst [vmem:[%s189 + $0xe4] sm:%s181] %v304
          %v306 = vld [vmem:[%s188 + $0xe4] sm:%s181]
          %307 = vst [vmem:[%s189 + $0xe8] sm:%s181] %v306
          %v308 = vld [vmem:[%s188 + $0xf4] sm:%s181]
          %309 = vst [vmem:[%s189 + $0xec] sm:%s181] %v308
          %v310 = vld [vmem:[%s188 + $0xe8] sm:%s181]
          %311 = vst [vmem:[%s189 + $0xf0] sm:%s181] %v310
          %v312 = vld [vmem:[%s188 + $0xf8] sm:%s181]
          %313 = vst [vmem:[%s189 + $0xf4] sm:%s181] %v312
          %v314 = vld [vmem:[%s188 + $0xec] sm:%s181]
          %315 = vst [vmem:[%s189 + $0xf8] sm:%s181] %v314
          %v316 = vld [vmem:[%s188 + $0xfc] sm:%s181]
          %317 = vst [vmem:[%s189 + $0xfc] sm:%s181] %v316
        $region44: #{blstm_forward.2} parent=31 // loop_footer
          %s187 = sadd.s32 1, %s183
        $region45: #{blstm_forward.2} parent=31 // loop_footer_branch
          %182 = sbr.rel target = $region41
        $region46: #{blstm_forward.2} parent=31 // loop_exit
          _
      $region32: #{blstm_forward.2} parent=16 // pred_fallthru
        _
    $region17: #{blstm_forward.2} parent=12 // pred_fallthru
      _
    // Predicated region
    $region18: #{blstm_forward.2} parent=12 // pred_check
      %p23 = pneg %p19
    $region19: #{blstm_forward.2} parent=12 // pred_check_branch
      %25 = sbr.rel (%p23) target = $region21
    $region20: #{blstm_forward.2} parent=12 // pred_region
      %s26 = sshllo.u32 0, 4
      loop: start=0, step=1, limit=1
      $region22: #{blstm_forward.2} parent=20 // loop_pre_header
        _
      $region23: #{blstm_forward.2} parent=20 // loop_header
        %s28 = sphi 0, %s32
        %p29 = scmp.ge.s32.totalorder %s28, 1
        %s33 = sphi %s1, %s1
        %s34 = sphi [#allocation2], [#allocation2]
      $region24: #{blstm_forward.2} parent=20 // loop_header_branch
        %31 = sbr.rel (%p29) target = $region28
      $region25: #{blstm_forward.2} parent=20 // loop_body
        %v35 = vld [vmem:[%s33] sm:%s26]
        %36 = vst [vmem:[%s34] sm:%s26] %v35
        %v37 = vld [vmem:[%s33 + $0x10] sm:%s26]
        %38 = vst [vmem:[%s34 + $0x4] sm:%s26] %v37
        %v39 = vld [vmem:[%s33 + $0x4] sm:%s26]
        %40 = vst [vmem:[%s34 + $0x8] sm:%s26] %v39
        %v41 = vld [vmem:[%s33 + $0x14] sm:%s26]
        %42 = vst [vmem:[%s34 + $0xc] sm:%s26] %v41
        %v43 = vld [vmem:[%s33 + $0x8] sm:%s26]
        %44 = vst [vmem:[%s34 + $0x10] sm:%s26] %v43
        %v45 = vld [vmem:[%s33 + $0x18] sm:%s26]
        %46 = vst [vmem:[%s34 + $0x14] sm:%s26] %v45
        %v47 = vld [vmem:[%s33 + $0xc] sm:%s26]
        %48 = vst [vmem:[%s34 + $0x18] sm:%s26] %v47
        %v49 = vld [vmem:[%s33 + $0x1c] sm:%s26]
        %50 = vst [vmem:[%s34 + $0x1c] sm:%s26] %v49
        %v51 = vld [vmem:[%s33 + $0x20] sm:%s26]
        %52 = vst [vmem:[%s34 + $0x20] sm:%s26] %v51
        %v53 = vld [vmem:[%s33 + $0x30] sm:%s26]
        %54 = vst [vmem:[%s34 + $0x24] sm:%s26] %v53
        %v55 = vld [vmem:[%s33 + $0x24] sm:%s26]
        %56 = vst [vmem:[%s34 + $0x28] sm:%s26] %v55
        %v57 = vld [vmem:[%s33 + $0x34] sm:%s26]
        %58 = vst [vmem:[%s34 + $0x2c] sm:%s26] %v57
        %v59 = vld [vmem:[%s33 + $0x28] sm:%s26]
        %60 = vst [vmem:[%s34 + $0x30] sm:%s26] %v59
        %v61 = vld [vmem:[%s33 + $0x38] sm:%s26]
        %62 = vst [vmem:[%s34 + $0x34] sm:%s26] %v61
        %v63 = vld [vmem:[%s33 + $0x2c] sm:%s26]
        %64 = vst [vmem:[%s34 + $0x38] sm:%s26] %v63
        %v65 = vld [vmem:[%s33 + $0x3c] sm:%s26]
        %66 = vst [vmem:[%s34 + $0x3c] sm:%s26] %v65
        %v67 = vld [vmem:[%s33 + $0x40] sm:%s26]
        %68 = vst [vmem:[%s34 + $0x40] sm:%s26] %v67
        %v69 = vld [vmem:[%s33 + $0x50] sm:%s26]
        %70 = vst [vmem:[%s34 + $0x44] sm:%s26] %v69
        %v71 = vld [vmem:[%s33 + $0x44] sm:%s26]
        %72 = vst [vmem:[%s34 + $0x48] sm:%s26] %v71
        %v73 = vld [vmem:[%s33 + $0x54] sm:%s26]
        %74 = vst [vmem:[%s34 + $0x4c] sm:%s26] %v73
        %v75 = vld [vmem:[%s33 + $0x48] sm:%s26]
        %76 = vst [vmem:[%s34 + $0x50] sm:%s26] %v75
        %v77 = vld [vmem:[%s33 + $0x58] sm:%s26]
        %78 = vst [vmem:[%s34 + $0x54] sm:%s26] %v77
        %v79 = vld [vmem:[%s33 + $0x4c] sm:%s26]
        %80 = vst [vmem:[%s34 + $0x58] sm:%s26] %v79
        %v81 = vld [vmem:[%s33 + $0x5c] sm:%s26]
        %82 = vst [vmem:[%s34 + $0x5c] sm:%s26] %v81
        %v83 = vld [vmem:[%s33 + $0x60] sm:%s26]
        %84 = vst [vmem:[%s34 + $0x60] sm:%s26] %v83
        %v85 = vld [vmem:[%s33 + $0x70] sm:%s26]
        %86 = vst [vmem:[%s34 + $0x64] sm:%s26] %v85
        %v87 = vld [vmem:[%s33 + $0x64] sm:%s26]
        %88 = vst [vmem:[%s34 + $0x68] sm:%s26] %v87
        %v89 = vld [vmem:[%s33 + $0x74] sm:%s26]
        %90 = vst [vmem:[%s34 + $0x6c] sm:%s26] %v89
        %v91 = vld [vmem:[%s33 + $0x68] sm:%s26]
        %92 = vst [vmem:[%s34 + $0x70] sm:%s26] %v91
        %v93 = vld [vmem:[%s33 + $0x78] sm:%s26]
        %94 = vst [vmem:[%s34 + $0x74] sm:%s26] %v93
        %v95 = vld [vmem:[%s33 + $0x6c] sm:%s26]
        %96 = vst [vmem:[%s34 + $0x78] sm:%s26] %v95
        %v97 = vld [vmem:[%s33 + $0x7c] sm:%s26]
        %98 = vst [vmem:[%s34 + $0x7c] sm:%s26] %v97
        %v99 = vld [vmem:[%s33 + $0x80] sm:%s26]
        %100 = vst [vmem:[%s34 + $0x80] sm:%s26] %v99
        %v101 = vld [vmem:[%s33 + $0x90] sm:%s26]
        %102 = vst [vmem:[%s34 + $0x84] sm:%s26] %v101
        %v103 = vld [vmem:[%s33 + $0x84] sm:%s26]
        %104 = vst [vmem:[%s34 + $0x88] sm:%s26] %v103
        %v105 = vld [vmem:[%s33 + $0x94] sm:%s26]
        %106 = vst [vmem:[%s34 + $0x8c] sm:%s26] %v105
        %v107 = vld [vmem:[%s33 + $0x88] sm:%s26]
        %108 = vst [vmem:[%s34 + $0x90] sm:%s26] %v107
        %v109 = vld [vmem:[%s33 + $0x98] sm:%s26]
        %110 = vst [vmem:[%s34 + $0x94] sm:%s26] %v109
        %v111 = vld [vmem:[%s33 + $0x8c] sm:%s26]
        %112 = vst [vmem:[%s34 + $0x98] sm:%s26] %v111
        %v113 = vld [vmem:[%s33 + $0x9c] sm:%s26]
        %114 = vst [vmem:[%s34 + $0x9c] sm:%s26] %v113
        %v115 = vld [vmem:[%s33 + $0xa0] sm:%s26]
        %116 = vst [vmem:[%s34 + $0xa0] sm:%s26] %v115
        %v117 = vld [vmem:[%s33 + $0xb0] sm:%s26]
        %118 = vst [vmem:[%s34 + $0xa4] sm:%s26] %v117
        %v119 = vld [vmem:[%s33 + $0xa4] sm:%s26]
        %120 = vst [vmem:[%s34 + $0xa8] sm:%s26] %v119
        %v121 = vld [vmem:[%s33 + $0xb4] sm:%s26]
        %122 = vst [vmem:[%s34 + $0xac] sm:%s26] %v121
        %v123 = vld [vmem:[%s33 + $0xa8] sm:%s26]
        %124 = vst [vmem:[%s34 + $0xb0] sm:%s26] %v123
        %v125 = vld [vmem:[%s33 + $0xb8] sm:%s26]
        %126 = vst [vmem:[%s34 + $0xb4] sm:%s26] %v125
        %v127 = vld [vmem:[%s33 + $0xac] sm:%s26]
        %128 = vst [vmem:[%s34 + $0xb8] sm:%s26] %v127
        %v129 = vld [vmem:[%s33 + $0xbc] sm:%s26]
        %130 = vst [vmem:[%s34 + $0xbc] sm:%s26] %v129
        %v131 = vld [vmem:[%s33 + $0xc0] sm:%s26]
        %132 = vst [vmem:[%s34 + $0xc0] sm:%s26] %v131
        %v133 = vld [vmem:[%s33 + $0xd0] sm:%s26]
        %134 = vst [vmem:[%s34 + $0xc4] sm:%s26] %v133
        %v135 = vld [vmem:[%s33 + $0xc4] sm:%s26]
        %136 = vst [vmem:[%s34 + $0xc8] sm:%s26] %v135
        %v137 = vld [vmem:[%s33 + $0xd4] sm:%s26]
        %138 = vst [vmem:[%s34 + $0xcc] sm:%s26] %v137
        %v139 = vld [vmem:[%s33 + $0xc8] sm:%s26]
        %140 = vst [vmem:[%s34 + $0xd0] sm:%s26] %v139
        %v141 = vld [vmem:[%s33 + $0xd8] sm:%s26]
        %142 = vst [vmem:[%s34 + $0xd4] sm:%s26] %v141
        %v143 = vld [vmem:[%s33 + $0xcc] sm:%s26]
        %144 = vst [vmem:[%s34 + $0xd8] sm:%s26] %v143
        %v145 = vld [vmem:[%s33 + $0xdc] sm:%s26]
        %146 = vst [vmem:[%s34 + $0xdc] sm:%s26] %v145
        %v147 = vld [vmem:[%s33 + $0xe0] sm:%s26]
        %148 = vst [vmem:[%s34 + $0xe0] sm:%s26] %v147
        %v149 = vld [vmem:[%s33 + $0xf0] sm:%s26]
        %150 = vst [vmem:[%s34 + $0xe4] sm:%s26] %v149
        %v151 = vld [vmem:[%s33 + $0xe4] sm:%s26]
        %152 = vst [vmem:[%s34 + $0xe8] sm:%s26] %v151
        %v153 = vld [vmem:[%s33 + $0xf4] sm:%s26]
        %154 = vst [vmem:[%s34 + $0xec] sm:%s26] %v153
        %v155 = vld [vmem:[%s33 + $0xe8] sm:%s26]
        %156 = vst [vmem:[%s34 + $0xf0] sm:%s26] %v155
        %v157 = vld [vmem:[%s33 + $0xf8] sm:%s26]
        %158 = vst [vmem:[%s34 + $0xf4] sm:%s26] %v157
        %v159 = vld [vmem:[%s33 + $0xec] sm:%s26]
        %160 = vst [vmem:[%s34 + $0xf8] sm:%s26] %v159
        %v161 = vld [vmem:[%s33 + $0xfc] sm:%s26]
        %162 = vst [vmem:[%s34 + $0xfc] sm:%s26] %v161
      $region26: #{blstm_forward.2} parent=20 // loop_footer
        %s32 = sadd.s32 1, %s28
      $region27: #{blstm_forward.2} parent=20 // loop_footer_branch
        %27 = sbr.rel target = $region23
      $region28: #{blstm_forward.2} parent=20 // loop_exit
        _
    $region21: #{blstm_forward.2} parent=12 // pred_fallthru
      _
    // Predicated region
    $region47: #{blstm_forward.2} parent=12 // pred_check
      _
    $region48: #{blstm_forward.2} parent=12 // pred_check_branch
      %320 = sbr.rel (0) target = $region50
    $region49: #{blstm_forward.2} parent=12 // pred_region
      %321 = vsyncadd [#allocation7], 4096
    $region50: #{blstm_forward.2} parent=12 // pred_fallthru
      _
    %s322 = scalar_lea.sflag [#allocation7], 1
    %p324 = scmp.lt.u32.totalorder 4, 8
    %p325 = pneg %p324
    // Predicated region
    $region51: #{blstm_forward.2} parent=12 // pred_check
      _
    $region52: #{blstm_forward.2} parent=12 // pred_check_branch
      %327 = sbr.rel (%p324) target = $region54
    $region53: #{blstm_forward.2} parent=12 // pred_region
      %s468 = sand.u32 4, 7
      %p469 = scmp.eq.s32.totalorder %s468, 0
      %p470 = pneg %p469
      // Predicated region
      $region66: #{blstm_forward.2} parent=53 // pred_check
        _
      $region67: #{blstm_forward.2} parent=53 // pred_check_branch
        %472 = sbr.rel (%p469) target = $region69
      $region68: #{blstm_forward.2} parent=53 // pred_region
        %s473 = sand.u32 4, 7
        %s474 = ssub.s32 4, %s473
        %s475 = scalar_lea.vmem %s2, %s474
        %s476 = ssub.s32 4, %s473
        %s477 = scalar_lea.vmem [#allocation3], %s476
        loop: start=0, step=1, limit=1
        $region70: #{blstm_forward.2} parent=68 // loop_pre_header
          _
        $region71: #{blstm_forward.2} parent=68 // loop_header
          %s479 = sphi 0, %s483
          %p480 = scmp.ge.s32.totalorder %s479, 1
          %s484 = sphi %s2, %s2
          %s485 = sphi [#allocation3], [#allocation3]
        $region72: #{blstm_forward.2} parent=68 // loop_header_branch
          %482 = sbr.rel (%p480) target = $region76
        $region73: #{blstm_forward.2} parent=68 // loop_body
          _
        $region74: #{blstm_forward.2} parent=68 // loop_footer
          %s483 = sadd.s32 1, %s479
        $region75: #{blstm_forward.2} parent=68 // loop_footer_branch
          %478 = sbr.rel target = $region71
        $region76: #{blstm_forward.2} parent=68 // loop_exit
          _
        %s486 = sshllo.u32 0, %s473
        loop: start=0, step=1, limit=1
        $region77: #{blstm_forward.2} parent=68 // loop_pre_header
          _
        $region78: #{blstm_forward.2} parent=68 // loop_header
          %s488 = sphi 0, %s492
          %p489 = scmp.ge.s32.totalorder %s488, 1
          %s493 = sphi %s475, %s475
          %s494 = sphi %s477, %s477
        $region79: #{blstm_forward.2} parent=68 // loop_header_branch
          %491 = sbr.rel (%p489) target = $region83
        $region80: #{blstm_forward.2} parent=68 // loop_body
          %v495 = vld [vmem:[%s493] sm:%s486]
          %496 = vst [vmem:[%s494] sm:%s486] %v495
          %v497 = vld [vmem:[%s493 + $0x10] sm:%s486]
          %498 = vst [vmem:[%s494 + $0x4] sm:%s486] %v497
          %v499 = vld [vmem:[%s493 + $0x4] sm:%s486]
          %500 = vst [vmem:[%s494 + $0x8] sm:%s486] %v499
          %v501 = vld [vmem:[%s493 + $0x14] sm:%s486]
          %502 = vst [vmem:[%s494 + $0xc] sm:%s486] %v501
          %v503 = vld [vmem:[%s493 + $0x8] sm:%s486]
          %504 = vst [vmem:[%s494 + $0x10] sm:%s486] %v503
          %v505 = vld [vmem:[%s493 + $0x18] sm:%s486]
          %506 = vst [vmem:[%s494 + $0x14] sm:%s486] %v505
          %v507 = vld [vmem:[%s493 + $0xc] sm:%s486]
          %508 = vst [vmem:[%s494 + $0x18] sm:%s486] %v507
          %v509 = vld [vmem:[%s493 + $0x1c] sm:%s486]
          %510 = vst [vmem:[%s494 + $0x1c] sm:%s486] %v509
          %v511 = vld [vmem:[%s493 + $0x20] sm:%s486]
          %512 = vst [vmem:[%s494 + $0x20] sm:%s486] %v511
          %v513 = vld [vmem:[%s493 + $0x30] sm:%s486]
          %514 = vst [vmem:[%s494 + $0x24] sm:%s486] %v513
          %v515 = vld [vmem:[%s493 + $0x24] sm:%s486]
          %516 = vst [vmem:[%s494 + $0x28] sm:%s486] %v515
          %v517 = vld [vmem:[%s493 + $0x34] sm:%s486]
          %518 = vst [vmem:[%s494 + $0x2c] sm:%s486] %v517
          %v519 = vld [vmem:[%s493 + $0x28] sm:%s486]
          %520 = vst [vmem:[%s494 + $0x30] sm:%s486] %v519
          %v521 = vld [vmem:[%s493 + $0x38] sm:%s486]
          %522 = vst [vmem:[%s494 + $0x34] sm:%s486] %v521
          %v523 = vld [vmem:[%s493 + $0x2c] sm:%s486]
          %524 = vst [vmem:[%s494 + $0x38] sm:%s486] %v523
          %v525 = vld [vmem:[%s493 + $0x3c] sm:%s486]
          %526 = vst [vmem:[%s494 + $0x3c] sm:%s486] %v525
          %v527 = vld [vmem:[%s493 + $0x40] sm:%s486]
          %528 = vst [vmem:[%s494 + $0x40] sm:%s486] %v527
          %v529 = vld [vmem:[%s493 + $0x50] sm:%s486]
          %530 = vst [vmem:[%s494 + $0x44] sm:%s486] %v529
          %v531 = vld [vmem:[%s493 + $0x44] sm:%s486]
          %532 = vst [vmem:[%s494 + $0x48] sm:%s486] %v531
          %v533 = vld [vmem:[%s493 + $0x54] sm:%s486]
          %534 = vst [vmem:[%s494 + $0x4c] sm:%s486] %v533
          %v535 = vld [vmem:[%s493 + $0x48] sm:%s486]
          %536 = vst [vmem:[%s494 + $0x50] sm:%s486] %v535
          %v537 = vld [vmem:[%s493 + $0x58] sm:%s486]
          %538 = vst [vmem:[%s494 + $0x54] sm:%s486] %v537
          %v539 = vld [vmem:[%s493 + $0x4c] sm:%s486]
          %540 = vst [vmem:[%s494 + $0x58] sm:%s486] %v539
          %v541 = vld [vmem:[%s493 + $0x5c] sm:%s486]
          %542 = vst [vmem:[%s494 + $0x5c] sm:%s486] %v541
          %v543 = vld [vmem:[%s493 + $0x60] sm:%s486]
          %544 = vst [vmem:[%s494 + $0x60] sm:%s486] %v543
          %v545 = vld [vmem:[%s493 + $0x70] sm:%s486]
          %546 = vst [vmem:[%s494 + $0x64] sm:%s486] %v545
          %v547 = vld [vmem:[%s493 + $0x64] sm:%s486]
          %548 = vst [vmem:[%s494 + $0x68] sm:%s486] %v547
          %v549 = vld [vmem:[%s493 + $0x74] sm:%s486]
          %550 = vst [vmem:[%s494 + $0x6c] sm:%s486] %v549
          %v551 = vld [vmem:[%s493 + $0x68] sm:%s486]
          %552 = vst [vmem:[%s494 + $0x70] sm:%s486] %v551
          %v553 = vld [vmem:[%s493 + $0x78] sm:%s486]
          %554 = vst [vmem:[%s494 + $0x74] sm:%s486] %v553
          %v555 = vld [vmem:[%s493 + $0x6c] sm:%s486]
          %556 = vst [vmem:[%s494 + $0x78] sm:%s486] %v555
          %v557 = vld [vmem:[%s493 + $0x7c] sm:%s486]
          %558 = vst [vmem:[%s494 + $0x7c] sm:%s486] %v557
          %v559 = vld [vmem:[%s493 + $0x80] sm:%s486]
          %560 = vst [vmem:[%s494 + $0x80] sm:%s486] %v559
          %v561 = vld [vmem:[%s493 + $0x90] sm:%s486]
          %562 = vst [vmem:[%s494 + $0x84] sm:%s486] %v561
          %v563 = vld [vmem:[%s493 + $0x84] sm:%s486]
          %564 = vst [vmem:[%s494 + $0x88] sm:%s486] %v563
          %v565 = vld [vmem:[%s493 + $0x94] sm:%s486]
          %566 = vst [vmem:[%s494 + $0x8c] sm:%s486] %v565
          %v567 = vld [vmem:[%s493 + $0x88] sm:%s486]
          %568 = vst [vmem:[%s494 + $0x90] sm:%s486] %v567
          %v569 = vld [vmem:[%s493 + $0x98] sm:%s486]
          %570 = vst [vmem:[%s494 + $0x94] sm:%s486] %v569
          %v571 = vld [vmem:[%s493 + $0x8c] sm:%s486]
          %572 = vst [vmem:[%s494 + $0x98] sm:%s486] %v571
          %v573 = vld [vmem:[%s493 + $0x9c] sm:%s486]
          %574 = vst [vmem:[%s494 + $0x9c] sm:%s486] %v573
          %v575 = vld [vmem:[%s493 + $0xa0] sm:%s486]
          %576 = vst [vmem:[%s494 + $0xa0] sm:%s486] %v575
          %v577 = vld [vmem:[%s493 + $0xb0] sm:%s486]
          %578 = vst [vmem:[%s494 + $0xa4] sm:%s486] %v577
          %v579 = vld [vmem:[%s493 + $0xa4] sm:%s486]
          %580 = vst [vmem:[%s494 + $0xa8] sm:%s486] %v579
          %v581 = vld [vmem:[%s493 + $0xb4] sm:%s486]
          %582 = vst [vmem:[%s494 + $0xac] sm:%s486] %v581
          %v583 = vld [vmem:[%s493 + $0xa8] sm:%s486]
          %584 = vst [vmem:[%s494 + $0xb0] sm:%s486] %v583
          %v585 = vld [vmem:[%s493 + $0xb8] sm:%s486]
          %586 = vst [vmem:[%s494 + $0xb4] sm:%s486] %v585
          %v587 = vld [vmem:[%s493 + $0xac] sm:%s486]
          %588 = vst [vmem:[%s494 + $0xb8] sm:%s486] %v587
          %v589 = vld [vmem:[%s493 + $0xbc] sm:%s486]
          %590 = vst [vmem:[%s494 + $0xbc] sm:%s486] %v589
          %v591 = vld [vmem:[%s493 + $0xc0] sm:%s486]
          %592 = vst [vmem:[%s494 + $0xc0] sm:%s486] %v591
          %v593 = vld [vmem:[%s493 + $0xd0] sm:%s486]
          %594 = vst [vmem:[%s494 + $0xc4] sm:%s486] %v593
          %v595 = vld [vmem:[%s493 + $0xc4] sm:%s486]
          %596 = vst [vmem:[%s494 + $0xc8] sm:%s486] %v595
          %v597 = vld [vmem:[%s493 + $0xd4] sm:%s486]
          %598 = vst [vmem:[%s494 + $0xcc] sm:%s486] %v597
          %v599 = vld [vmem:[%s493 + $0xc8] sm:%s486]
          %600 = vst [vmem:[%s494 + $0xd0] sm:%s486] %v599
          %v601 = vld [vmem:[%s493 + $0xd8] sm:%s486]
          %602 = vst [vmem:[%s494 + $0xd4] sm:%s486] %v601
          %v603 = vld [vmem:[%s493 + $0xcc] sm:%s486]
          %604 = vst [vmem:[%s494 + $0xd8] sm:%s486] %v603
          %v605 = vld [vmem:[%s493 + $0xdc] sm:%s486]
          %606 = vst [vmem:[%s494 + $0xdc] sm:%s486] %v605
          %v607 = vld [vmem:[%s493 + $0xe0] sm:%s486]
          %608 = vst [vmem:[%s494 + $0xe0] sm:%s486] %v607
          %v609 = vld [vmem:[%s493 + $0xf0] sm:%s486]
          %610 = vst [vmem:[%s494 + $0xe4] sm:%s486] %v609
          %v611 = vld [vmem:[%s493 + $0xe4] sm:%s486]
          %612 = vst [vmem:[%s494 + $0xe8] sm:%s486] %v611
          %v613 = vld [vmem:[%s493 + $0xf4] sm:%s486]
          %614 = vst [vmem:[%s494 + $0xec] sm:%s486] %v613
          %v615 = vld [vmem:[%s493 + $0xe8] sm:%s486]
          %616 = vst [vmem:[%s494 + $0xf0] sm:%s486] %v615
          %v617 = vld [vmem:[%s493 + $0xf8] sm:%s486]
          %618 = vst [vmem:[%s494 + $0xf4] sm:%s486] %v617
          %v619 = vld [vmem:[%s493 + $0xec] sm:%s486]
          %620 = vst [vmem:[%s494 + $0xf8] sm:%s486] %v619
          %v621 = vld [vmem:[%s493 + $0xfc] sm:%s486]
          %622 = vst [vmem:[%s494 + $0xfc] sm:%s486] %v621
        $region81: #{blstm_forward.2} parent=68 // loop_footer
          %s492 = sadd.s32 1, %s488
        $region82: #{blstm_forward.2} parent=68 // loop_footer_branch
          %487 = sbr.rel target = $region78
        $region83: #{blstm_forward.2} parent=68 // loop_exit
          _
      $region69: #{blstm_forward.2} parent=53 // pred_fallthru
        _
    $region54: #{blstm_forward.2} parent=12 // pred_fallthru
      _
    // Predicated region
    $region55: #{blstm_forward.2} parent=12 // pred_check
      %p328 = pneg %p324
    $region56: #{blstm_forward.2} parent=12 // pred_check_branch
      %330 = sbr.rel (%p328) target = $region58
    $region57: #{blstm_forward.2} parent=12 // pred_region
      %s331 = sshllo.u32 0, 4
      loop: start=0, step=1, limit=1
      $region59: #{blstm_forward.2} parent=57 // loop_pre_header
        _
      $region60: #{blstm_forward.2} parent=57 // loop_header
        %s333 = sphi 0, %s337
        %p334 = scmp.ge.s32.totalorder %s333, 1
        %s338 = sphi %s2, %s2
        %s339 = sphi [#allocation3], [#allocation3]
      $region61: #{blstm_forward.2} parent=57 // loop_header_branch
        %336 = sbr.rel (%p334) target = $region65
      $region62: #{blstm_forward.2} parent=57 // loop_body
        %v340 = vld [vmem:[%s338] sm:%s331]
        %341 = vst [vmem:[%s339] sm:%s331] %v340
        %v342 = vld [vmem:[%s338 + $0x10] sm:%s331]
        %343 = vst [vmem:[%s339 + $0x4] sm:%s331] %v342
        %v344 = vld [vmem:[%s338 + $0x4] sm:%s331]
        %345 = vst [vmem:[%s339 + $0x8] sm:%s331] %v344
        %v346 = vld [vmem:[%s338 + $0x14] sm:%s331]
        %347 = vst [vmem:[%s339 + $0xc] sm:%s331] %v346
        %v348 = vld [vmem:[%s338 + $0x8] sm:%s331]
        %349 = vst [vmem:[%s339 + $0x10] sm:%s331] %v348
        %v350 = vld [vmem:[%s338 + $0x18] sm:%s331]
        %351 = vst [vmem:[%s339 + $0x14] sm:%s331] %v350
        %v352 = vld [vmem:[%s338 + $0xc] sm:%s331]
        %353 = vst [vmem:[%s339 + $0x18] sm:%s331] %v352
        %v354 = vld [vmem:[%s338 + $0x1c] sm:%s331]
        %355 = vst [vmem:[%s339 + $0x1c] sm:%s331] %v354
        %v356 = vld [vmem:[%s338 + $0x20] sm:%s331]
        %357 = vst [vmem:[%s339 + $0x20] sm:%s331] %v356
        %v358 = vld [vmem:[%s338 + $0x30] sm:%s331]
        %359 = vst [vmem:[%s339 + $0x24] sm:%s331] %v358
        %v360 = vld [vmem:[%s338 + $0x24] sm:%s331]
        %361 = vst [vmem:[%s339 + $0x28] sm:%s331] %v360
        %v362 = vld [vmem:[%s338 + $0x34] sm:%s331]
        %363 = vst [vmem:[%s339 + $0x2c] sm:%s331] %v362
        %v364 = vld [vmem:[%s338 + $0x28] sm:%s331]
        %365 = vst [vmem:[%s339 + $0x30] sm:%s331] %v364
        %v366 = vld [vmem:[%s338 + $0x38] sm:%s331]
        %367 = vst [vmem:[%s339 + $0x34] sm:%s331] %v366
        %v368 = vld [vmem:[%s338 + $0x2c] sm:%s331]
        %369 = vst [vmem:[%s339 + $0x38] sm:%s331] %v368
        %v370 = vld [vmem:[%s338 + $0x3c] sm:%s331]
        %371 = vst [vmem:[%s339 + $0x3c] sm:%s331] %v370
        %v372 = vld [vmem:[%s338 + $0x40] sm:%s331]
        %373 = vst [vmem:[%s339 + $0x40] sm:%s331] %v372
        %v374 = vld [vmem:[%s338 + $0x50] sm:%s331]
        %375 = vst [vmem:[%s339 + $0x44] sm:%s331] %v374
        %v376 = vld [vmem:[%s338 + $0x44] sm:%s331]
        %377 = vst [vmem:[%s339 + $0x48] sm:%s331] %v376
        %v378 = vld [vmem:[%s338 + $0x54] sm:%s331]
        %379 = vst [vmem:[%s339 + $0x4c] sm:%s331] %v378
        %v380 = vld [vmem:[%s338 + $0x48] sm:%s331]
        %381 = vst [vmem:[%s339 + $0x50] sm:%s331] %v380
        %v382 = vld [vmem:[%s338 + $0x58] sm:%s331]
        %383 = vst [vmem:[%s339 + $0x54] sm:%s331] %v382
        %v384 = vld [vmem:[%s338 + $0x4c] sm:%s331]
        %385 = vst [vmem:[%s339 + $0x58] sm:%s331] %v384
        %v386 = vld [vmem:[%s338 + $0x5c] sm:%s331]
        %387 = vst [vmem:[%s339 + $0x5c] sm:%s331] %v386
        %v388 = vld [vmem:[%s338 + $0x60] sm:%s331]
        %389 = vst [vmem:[%s339 + $0x60] sm:%s331] %v388
        %v390 = vld [vmem:[%s338 + $0x70] sm:%s331]
        %391 = vst [vmem:[%s339 + $0x64] sm:%s331] %v390
        %v392 = vld [vmem:[%s338 + $0x64] sm:%s331]
        %393 = vst [vmem:[%s339 + $0x68] sm:%s331] %v392
        %v394 = vld [vmem:[%s338 + $0x74] sm:%s331]
        %395 = vst [vmem:[%s339 + $0x6c] sm:%s331] %v394
        %v396 = vld [vmem:[%s338 + $0x68] sm:%s331]
        %397 = vst [vmem:[%s339 + $0x70] sm:%s331] %v396
        %v398 = vld [vmem:[%s338 + $0x78] sm:%s331]
        %399 = vst [vmem:[%s339 + $0x74] sm:%s331] %v398
        %v400 = vld [vmem:[%s338 + $0x6c] sm:%s331]
        %401 = vst [vmem:[%s339 + $0x78] sm:%s331] %v400
        %v402 = vld [vmem:[%s338 + $0x7c] sm:%s331]
        %403 = vst [vmem:[%s339 + $0x7c] sm:%s331] %v402
        %v404 = vld [vmem:[%s338 + $0x80] sm:%s331]
        %405 = vst [vmem:[%s339 + $0x80] sm:%s331] %v404
        %v406 = vld [vmem:[%s338 + $0x90] sm:%s331]
        %407 = vst [vmem:[%s339 + $0x84] sm:%s331] %v406
        %v408 = vld [vmem:[%s338 + $0x84] sm:%s331]
        %409 = vst [vmem:[%s339 + $0x88] sm:%s331] %v408
        %v410 = vld [vmem:[%s338 + $0x94] sm:%s331]
        %411 = vst [vmem:[%s339 + $0x8c] sm:%s331] %v410
        %v412 = vld [vmem:[%s338 + $0x88] sm:%s331]
        %413 = vst [vmem:[%s339 + $0x90] sm:%s331] %v412
        %v414 = vld [vmem:[%s338 + $0x98] sm:%s331]
        %415 = vst [vmem:[%s339 + $0x94] sm:%s331] %v414
        %v416 = vld [vmem:[%s338 + $0x8c] sm:%s331]
        %417 = vst [vmem:[%s339 + $0x98] sm:%s331] %v416
        %v418 = vld [vmem:[%s338 + $0x9c] sm:%s331]
        %419 = vst [vmem:[%s339 + $0x9c] sm:%s331] %v418
        %v420 = vld [vmem:[%s338 + $0xa0] sm:%s331]
        %421 = vst [vmem:[%s339 + $0xa0] sm:%s331] %v420
        %v422 = vld [vmem:[%s338 + $0xb0] sm:%s331]
        %423 = vst [vmem:[%s339 + $0xa4] sm:%s331] %v422
        %v424 = vld [vmem:[%s338 + $0xa4] sm:%s331]
        %425 = vst [vmem:[%s339 + $0xa8] sm:%s331] %v424
        %v426 = vld [vmem:[%s338 + $0xb4] sm:%s331]
        %427 = vst [vmem:[%s339 + $0xac] sm:%s331] %v426
        %v428 = vld [vmem:[%s338 + $0xa8] sm:%s331]
        %429 = vst [vmem:[%s339 + $0xb0] sm:%s331] %v428
        %v430 = vld [vmem:[%s338 + $0xb8] sm:%s331]
        %431 = vst [vmem:[%s339 + $0xb4] sm:%s331] %v430
        %v432 = vld [vmem:[%s338 + $0xac] sm:%s331]
        %433 = vst [vmem:[%s339 + $0xb8] sm:%s331] %v432
        %v434 = vld [vmem:[%s338 + $0xbc] sm:%s331]
        %435 = vst [vmem:[%s339 + $0xbc] sm:%s331] %v434
        %v436 = vld [vmem:[%s338 + $0xc0] sm:%s331]
        %437 = vst [vmem:[%s339 + $0xc0] sm:%s331] %v436
        %v438 = vld [vmem:[%s338 + $0xd0] sm:%s331]
        %439 = vst [vmem:[%s339 + $0xc4] sm:%s331] %v438
        %v440 = vld [vmem:[%s338 + $0xc4] sm:%s331]
        %441 = vst [vmem:[%s339 + $0xc8] sm:%s331] %v440
        %v442 = vld [vmem:[%s338 + $0xd4] sm:%s331]
        %443 = vst [vmem:[%s339 + $0xcc] sm:%s331] %v442
        %v444 = vld [vmem:[%s338 + $0xc8] sm:%s331]
        %445 = vst [vmem:[%s339 + $0xd0] sm:%s331] %v444
        %v446 = vld [vmem:[%s338 + $0xd8] sm:%s331]
        %447 = vst [vmem:[%s339 + $0xd4] sm:%s331] %v446
        %v448 = vld [vmem:[%s338 + $0xcc] sm:%s331]
        %449 = vst [vmem:[%s339 + $0xd8] sm:%s331] %v448
        %v450 = vld [vmem:[%s338 + $0xdc] sm:%s331]
        %451 = vst [vmem:[%s339 + $0xdc] sm:%s331] %v450
        %v452 = vld [vmem:[%s338 + $0xe0] sm:%s331]
        %453 = vst [vmem:[%s339 + $0xe0] sm:%s331] %v452
        %v454 = vld [vmem:[%s338 + $0xf0] sm:%s331]
        %455 = vst [vmem:[%s339 + $0xe4] sm:%s331] %v454
        %v456 = vld [vmem:[%s338 + $0xe4] sm:%s331]
        %457 = vst [vmem:[%s339 + $0xe8] sm:%s331] %v456
        %v458 = vld [vmem:[%s338 + $0xf4] sm:%s331]
        %459 = vst [vmem:[%s339 + $0xec] sm:%s331] %v458
        %v460 = vld [vmem:[%s338 + $0xe8] sm:%s331]
        %461 = vst [vmem:[%s339 + $0xf0] sm:%s331] %v460
        %v462 = vld [vmem:[%s338 + $0xf8] sm:%s331]
        %463 = vst [vmem:[%s339 + $0xf4] sm:%s331] %v462
        %v464 = vld [vmem:[%s338 + $0xec] sm:%s331]
        %465 = vst [vmem:[%s339 + $0xf8] sm:%s331] %v464
        %v466 = vld [vmem:[%s338 + $0xfc] sm:%s331]
        %467 = vst [vmem:[%s339 + $0xfc] sm:%s331] %v466
      $region63: #{blstm_forward.2} parent=57 // loop_footer
        %s337 = sadd.s32 1, %s333
      $region64: #{blstm_forward.2} parent=57 // loop_footer_branch
        %332 = sbr.rel target = $region60
      $region65: #{blstm_forward.2} parent=57 // loop_exit
        _
    $region58: #{blstm_forward.2} parent=12 // pred_fallthru
      _
    // Predicated region
    $region84: #{blstm_forward.2} parent=12 // pred_check
      _
    $region85: #{blstm_forward.2} parent=12 // pred_check_branch
      %625 = sbr.rel (0) target = $region87
    $region86: #{blstm_forward.2} parent=12 // pred_region
      %626 = vsyncadd %s322, 4096
    $region87: #{blstm_forward.2} parent=12 // pred_fallthru
      _
    %627 = vst [vmem:[#allocation5] sm:$0xff] 0
    %628 = vst [vmem:[#allocation6] sm:$0xff] 0.0
    %629 = vst [vmem:[#allocation6 + $0x8] sm:$0xff] 0.0
    %s630 = smul.u32 4, 16
    %s631 = smul.u32 %s630, 4
    %s632 = sshll.u32 %s631, 4
    %633 = dma.done [#allocation7], %s632
    %s634 = sshll.u32 %s631, 4
    %635 = dma.done %s322, %s634
  $region13: #{blstm_forward.2} parent=0 // pred_fallthru
    _
  %v636 = vld [vmem:[%s0] sm:$0xf]
  %v637 = vld [vmem:[%s0 + $0x4] sm:$0xf]
  %v638 = vld [vmem:[%s0 + $0x8] sm:$0xf]
  %v639 = vld [vmem:[%s0 + $0xc] sm:$0xf]
  %v640 = vld [vmem:[%s0 + $0x10] sm:$0xf]
  %v641 = vld [vmem:[%s0 + $0x14] sm:$0xf]
  %v642 = vld [vmem:[%s0 + $0x18] sm:$0xf]
  %v643 = vld [vmem:[%s0 + $0x1c] sm:$0xf]
  %v644 = vld [vmem:[%s0 + $0x20] sm:$0xf]
  %v645 = vld [vmem:[%s0 + $0x24] sm:$0xf]
  %v646 = vld [vmem:[%s0 + $0x28] sm:$0xf]
  %v647 = vld [vmem:[%s0 + $0x2c] sm:$0xf]
  %v648 = vld [vmem:[%s0 + $0x30] sm:$0xf]
  %v649 = vld [vmem:[%s0 + $0x34] sm:$0xf]
  %v650 = vld [vmem:[%s0 + $0x38] sm:$0xf]
  %v651 = vld [vmem:[%s0 + $0x3c] sm:$0xf]
  %v652 = vld [vmem:[#allocation2] sm:$0xff]
  %v653 = vld [vmem:[#allocation2 + $0x8] sm:$0xff]
  %v654 = vld [vmem:[#allocation2 + $0x10] sm:$0xff]
  %v655 = vld [vmem:[#allocation2 + $0x18] sm:$0xff]
  %v656 = vld [vmem:[#allocation2 + $0x20] sm:$0xff]
  %v657 = vld [vmem:[#allocation2 + $0x28] sm:$0xff]
  %v658 = vld [vmem:[#allocation2 + $0x30] sm:$0xff]
  %v659 = vld [vmem:[#allocation2 + $0x38] sm:$0xff]
  %v660 = vld [vmem:[#allocation2 + $0x40] sm:$0xff]
  %v661 = vld [vmem:[#allocation2 + $0x48] sm:$0xff]
  %v662 = vld [vmem:[#allocation2 + $0x50] sm:$0xff]
  %v663 = vld [vmem:[#allocation2 + $0x58] sm:$0xff]
  %v664 = vld [vmem:[#allocation2 + $0x60] sm:$0xff]
  %v665 = vld [vmem:[#allocation2 + $0x68] sm:$0xff]
  %v666 = vld [vmem:[#allocation2 + $0x70] sm:$0xff]
  %v667 = vld [vmem:[#allocation2 + $0x78] sm:$0xff]
  %v668 = vld [vmem:[#allocation2 + $0x80] sm:$0xff]
  %v669 = vld [vmem:[#allocation2 + $0x88] sm:$0xff]
  %v670 = vld [vmem:[#allocation2 + $0x90] sm:$0xff]
  %v671 = vld [vmem:[#allocation2 + $0x98] sm:$0xff]
  %v672 = vld [vmem:[#allocation2 + $0xa0] sm:$0xff]
  %v673 = vld [vmem:[#allocation2 + $0xa8] sm:$0xff]
  %v674 = vld [vmem:[#allocation2 + $0xb0] sm:$0xff]
  %v675 = vld [vmem:[#allocation2 + $0xb8] sm:$0xff]
  %v676 = vld [vmem:[#allocation2 + $0xc0] sm:$0xff]
  %v677 = vld [vmem:[#allocation2 + $0xc8] sm:$0xff]
  %v678 = vld [vmem:[#allocation2 + $0xd0] sm:$0xff]
  %v679 = vld [vmem:[#allocation2 + $0xd8] sm:$0xff]
  %v680 = vld [vmem:[#allocation2 + $0xe0] sm:$0xff]
  %v681 = vld [vmem:[#allocation2 + $0xe8] sm:$0xff]
  %v682 = vld [vmem:[#allocation2 + $0xf0] sm:$0xff]
  %v683 = vld [vmem:[#allocation2 + $0xf8] sm:$0xff]
  %v684 = vld [vmem:[%s3] sm:$0xf]
  %v686 = vlaneseq
  %v687 = vshrl.u32 %v686, 7
  %v688 = vsub.s32 0, %v687
  %v689 = vrot.slane %v684, %v688
  %v690 = vlaneseq
  %v691 = vshrl.u32 %v690, 7
  %v692 = vsub.s32 1, %v691
  %v693 = vrot.slane %v684, %v692
  %v694 = vlaneseq
  %v695 = vshrl.u32 %v694, 7
  %v696 = vsub.s32 2, %v695
  %v697 = vrot.slane %v684, %v696
  %v698 = vlaneseq
  %v699 = vshrl.u32 %v698, 7
  %v700 = vsub.s32 3, %v699
  %v701 = vrot.slane %v684, %v700
  %v722 = vunpack.c.l.b16 %v636
  %v723 = vunpack.c.l.b16 %v637
  %v724 = vunpack.c.l.b16 %v638
  %v725 = vunpack.c.l.b16 %v639
  %v726 = vunpack.c.l.b16 %v640
  %v727 = vunpack.c.l.b16 %v641
  %v728 = vunpack.c.l.b16 %v642
  %v729 = vunpack.c.l.b16 %v643
  %v730 = vunpack.c.l.b16 %v644
  %v731 = vunpack.c.l.b16 %v645
  %v732 = vunpack.c.l.b16 %v646
  %v733 = vunpack.c.l.b16 %v647
  %v734 = vunpack.c.l.b16 %v648
  %v735 = vunpack.c.l.b16 %v649
  %v736 = vunpack.c.l.b16 %v650
  %v737 = vunpack.c.l.b16 %v651
  %v738 = vpack.c.b16 %v723, %v722
  %v739 = vpack.c.b16 %v725, %v724
  %v740 = vpack.c.b16 %v727, %v726
  %v741 = vpack.c.b16 %v729, %v728
  %v742 = vpack.c.b16 %v731, %v730
  %v743 = vpack.c.b16 %v733, %v732
  %v744 = vpack.c.b16 %v735, %v734
  %v745 = vpack.c.b16 %v737, %v736
  %754 = vmatprep.subr.bf16.mxu0 %v653
  %755 = vmatpush1.bf16.msra.mxu0 %v652
  %756 = vmatprep.subr.bf16.mxu0 %v657
  %757 = vmatpush1.bf16.msra.mxu0 %v656
  %758 = vmatprep.subr.bf16.mxu0 %v661
  %759 = vmatpush1.bf16.msra.mxu0 %v660
  %760 = vmatprep.subr.bf16.mxu0 %v665
  %761 = vmatpush1.bf16.msra.mxu0 %v664
  %762 = vmatprep.subr.bf16.mxu0 %v669
  %763 = vmatpush1.bf16.msra.mxu0 %v668
  %764 = vmatprep.subr.bf16.mxu0 %v673
  %765 = vmatpush1.bf16.msra.mxu0 %v672
  %766 = vmatprep.subr.bf16.mxu0 %v677
  %767 = vmatpush1.bf16.msra.mxu0 %v676
  %768 = vmatprep.subr.bf16.mxu0 %v681
  %769 = vmatpush1.bf16.msra.mxu0 %v680
  %770 = vmatprep.subr.bf16.mxu0 0
  %771 = vmatpush1.bf16.msra.mxu0 0
  %772 = vmatprep.subr.bf16.mxu0 0
  %773 = vmatpush1.bf16.msra.mxu0 0
  %774 = vmatprep.subr.bf16.mxu0 0
  %775 = vmatpush1.bf16.msra.mxu0 0
  %776 = vmatprep.subr.bf16.mxu0 0
  %777 = vmatpush1.bf16.msra.mxu0 0
  %778 = vmatprep.subr.bf16.mxu0 0
  %779 = vmatpush1.bf16.msra.mxu0 0
  %780 = vmatprep.subr.bf16.mxu0 0
  %781 = vmatpush1.bf16.msra.mxu0 0
  %782 = vmatprep.subr.bf16.mxu0 0
  %783 = vmatpush1.bf16.msra.mxu0 0
  %784 = vmatprep.subr.bf16.mxu0 0
  %785 = vmatpush1.bf16.msra.mxu0 0
  %786 = vmatprep.mubr.bf16.mxu0 0
  %787 = vmatmul.mubr.bf16.gmra.mrb[0].mxu0 %v738
  %v788 = vpop.f32.mrb[0].mxu0
  %v789 = vadd.f32 %v689, %v788
  %v790 = vpop.f32.mrb[0].mxu0
  %v791 = vadd.f32 %v693, %v790
  %v792 = vpop.f32.mrb[0].mxu0
  %v793 = vadd.f32 %v689, %v792
  %v794 = vpop.f32.mrb[0].mxu0
  %v795 = vadd.f32 %v693, %v794
  %796 = vmatprep.mubr.bf16.mxu0 0
  %797 = vmatmul.mubr.bf16.gmra.mrb[0].mxu0 %v739
  %v798 = vpop.f32.mrb[0].mxu0
  %v799 = vadd.f32 %v689, %v798
  %v800 = vpop.f32.mrb[0].mxu0
  %v801 = vadd.f32 %v693, %v800
  %v802 = vpop.f32.mrb[0].mxu0
  %v803 = vadd.f32 %v689, %v802
  %v804 = vpop.f32.mrb[0].mxu0
  %v805 = vadd.f32 %v693, %v804
  %806 = vmatprep.mubr.bf16.mxu0 0
  %807 = vmatmul.mubr.bf16.gmra.mrb[0].mxu0 %v740
  %v808 = vpop.f32.mrb[0].mxu0
  %v809 = vadd.f32 %v689, %v808
  %v810 = vpop.f32.mrb[0].mxu0
  %v811 = vadd.f32 %v693, %v810
  %v812 = vpop.f32.mrb[0].mxu0
  %v813 = vadd.f32 %v689, %v812
  %v814 = vpop.f32.mrb[0].mxu0
  %v815 = vadd.f32 %v693, %v814
  %816 = vmatprep.mubr.bf16.mxu0 0
  %817 = vmatmul.mubr.bf16.gmra.mrb[0].mxu0 %v741
  %v818 = vpop.f32.mrb[0].mxu0
  %v819 = vadd.f32 %v689, %v818
  %v820 = vpop.f32.mrb[0].mxu0
  %v821 = vadd.f32 %v693, %v820
  %v822 = vpop.f32.mrb[0].mxu0
  %v823 = vadd.f32 %v689, %v822
  %v824 = vpop.f32.mrb[0].mxu0
  %v825 = vadd.f32 %v693, %v824
  %826 = vmatprep.mubr.bf16.mxu0 0
  %827 = vmatmul.mubr.bf16.gmra.mrb[0].mxu0 %v742
  %v828 = vpop.f32.mrb[0].mxu0
  %v829 = vadd.f32 %v689, %v828
  %v830 = vpop.f32.mrb[0].mxu0
  %v831 = vadd.f32 %v693, %v830
  %v832 = vpop.f32.mrb[0].mxu0
  %v833 = vadd.f32 %v689, %v832
  %v834 = vpop.f32.mrb[0].mxu0
  %v835 = vadd.f32 %v693, %v834
  %836 = vmatprep.mubr.bf16.mxu0 0
  %837 = vmatmul.mubr.bf16.gmra.mrb[0].mxu0 %v743
  %v838 = vpop.f32.mrb[0].mxu0
  %v839 = vadd.f32 %v689, %v838
  %v840 = vpop.f32.mrb[0].mxu0
  %v841 = vadd.f32 %v693, %v840
  %v842 = vpop.f32.mrb[0].mxu0
  %v843 = vadd.f32 %v689, %v842
  %v844 = vpop.f32.mrb[0].mxu0
  %v845 = vadd.f32 %v693, %v844
  %846 = vmatprep.mubr.bf16.mxu0 0
  %847 = vmatmul.mubr.bf16.gmra.mrb[0].mxu0 %v744
  %v848 = vpop.f32.mrb[0].mxu0
  %v849 = vadd.f32 %v689, %v848
  %v850 = vpop.f32.mrb[0].mxu0
  %v851 = vadd.f32 %v693, %v850
  %v852 = vpop.f32.mrb[0].mxu0
  %v853 = vadd.f32 %v689, %v852
  %v854 = vpop.f32.mrb[0].mxu0
  %v855 = vadd.f32 %v693, %v854
  %856 = vmatprep.mubr.bf16.mxu0 0
  %857 = vmatmul.mubr.bf16.gmra.mrb[0].mxu0 %v745
  %v858 = vpop.f32.mrb[0].mxu0
  %v859 = vadd.f32 %v689, %v858
  %v860 = vpop.f32.mrb[0].mxu0
  %v861 = vadd.f32 %v693, %v860
  %v862 = vpop.f32.mrb[0].mxu0
  %v863 = vadd.f32 %v689, %v862
  %v864 = vpop.f32.mrb[0].mxu0
  %v865 = vadd.f32 %v693, %v864
  %866 = vdwg.mxu0
  %867 = vmatprep.subr.bf16.mxu0 %v655
  %868 = vmatpush1.bf16.msra.mxu0 %v654
  %869 = vmatprep.subr.bf16.mxu0 %v659
  %870 = vmatpush1.bf16.msra.mxu0 %v658
  %871 = vmatprep.subr.bf16.mxu0 %v663
  %872 = vmatpush1.bf16.msra.mxu0 %v662
  %873 = vmatprep.subr.bf16.mxu0 %v667
  %874 = vmatpush1.bf16.msra.mxu0 %v666
  %875 = vmatprep.subr.bf16.mxu0 %v671
  %876 = vmatpush1.bf16.msra.mxu0 %v670
  %877 = vmatprep.subr.bf16.mxu0 %v675
  %878 = vmatpush1.bf16.msra.mxu0 %v674
  %879 = vmatprep.subr.bf16.mxu0 %v679
  %880 = vmatpush1.bf16.msra.mxu0 %v678
  %881 = vmatprep.subr.bf16.mxu0 %v683
  %882 = vmatpush1.bf16.msra.mxu0 %v682
  %883 = vmatprep.subr.bf16.mxu0 0
  %884 = vmatpush1.bf16.msra.mxu0 0
  %885 = vmatprep.subr.bf16.mxu0 0
  %886 = vmatpush1.bf16.msra.mxu0 0
  %887 = vmatprep.subr.bf16.mxu0 0
  %888 = vmatpush1.bf16.msra.mxu0 0
  %889 = vmatprep.subr.bf16.mxu0 0
  %890 = vmatpush1.bf16.msra.mxu0 0
  %891 = vmatprep.subr.bf16.mxu0 0
  %892 = vmatpush1.bf16.msra.mxu0 0
  %893 = vmatprep.subr.bf16.mxu0 0
  %894 = vmatpush1.bf16.msra.mxu0 0
  %895 = vmatprep.subr.bf16.mxu0 0
  %896 = vmatpush1.bf16.msra.mxu0 0
  %897 = vmatprep.subr.bf16.mxu0 0
  %898 = vmatpush1.bf16.msra.mxu0 0
  %899 = vmatprep.mubr.bf16.mxu0 0
  %900 = vmatmul.mubr.bf16.gmra.mrb[0].mxu0 %v738
  %v901 = vpop.f32.mrb[0].mxu0
  %v902 = vadd.f32 %v697, %v901
  %v903 = vpop.f32.mrb[0].mxu0
  %v904 = vadd.f32 %v701, %v903
  %v905 = vpop.f32.mrb[0].mxu0
  %v906 = vadd.f32 %v697, %v905
  %v907 = vpop.f32.mrb[0].mxu0
  %v908 = vadd.f32 %v701, %v907
  %909 = vmatprep.mubr.bf16.mxu0 0
  %910 = vmatmul.mubr.bf16.gmra.mrb[0].mxu0 %v739
  %v911 = vpop.f32.mrb[0].mxu0
  %v912 = vadd.f32 %v697, %v911
  %v913 = vpop.f32.mrb[0].mxu0
  %v914 = vadd.f32 %v701, %v913
  %v915 = vpop.f32.mrb[0].mxu0
  %v916 = vadd.f32 %v697, %v915
  %v917 = vpop.f32.mrb[0].mxu0
  %v918 = vadd.f32 %v701, %v917
  %919 = vmatprep.mubr.bf16.mxu0 0
  %920 = vmatmul.mubr.bf16.gmra.mrb[0].mxu0 %v740
  %v921 = vpop.f32.mrb[0].mxu0
  %v922 = vadd.f32 %v697, %v921
  %v923 = vpop.f32.mrb[0].mxu0
  %v924 = vadd.f32 %v701, %v923
  %v925 = vpop.f32.mrb[0].mxu0
  %v926 = vadd.f32 %v697, %v925
  %v927 = vpop.f32.mrb[0].mxu0
  %v928 = vadd.f32 %v701, %v927
  %929 = vmatprep.mubr.bf16.mxu0 0
  %930 = vmatmul.mubr.bf16.gmra.mrb[0].mxu0 %v741
  %v931 = vpop.f32.mrb[0].mxu0
  %v932 = vadd.f32 %v697, %v931
  %v933 = vpop.f32.mrb[0].mxu0
  %v934 = vadd.f32 %v701, %v933
  %v935 = vpop.f32.mrb[0].mxu0
  %v936 = vadd.f32 %v697, %v935
  %v937 = vpop.f32.mrb[0].mxu0
  %v938 = vadd.f32 %v701, %v937
  %939 = vmatprep.mubr.bf16.mxu0 0
  %940 = vmatmul.mubr.bf16.gmra.mrb[0].mxu0 %v742
  %v941 = vpop.f32.mrb[0].mxu0
  %v942 = vadd.f32 %v697, %v941
  %v943 = vpop.f32.mrb[0].mxu0
  %v944 = vadd.f32 %v701, %v943
  %v945 = vpop.f32.mrb[0].mxu0
  %v946 = vadd.f32 %v697, %v945
  %v947 = vpop.f32.mrb[0].mxu0
  %v948 = vadd.f32 %v701, %v947
  %949 = vmatprep.mubr.bf16.mxu0 0
  %950 = vmatmul.mubr.bf16.gmra.mrb[0].mxu0 %v743
  %v951 = vpop.f32.mrb[0].mxu0
  %v952 = vadd.f32 %v697, %v951
  %v953 = vpop.f32.mrb[0].mxu0
  %v954 = vadd.f32 %v701, %v953
  %v955 = vpop.f32.mrb[0].mxu0
  %v956 = vadd.f32 %v697, %v955
  %v957 = vpop.f32.mrb[0].mxu0
  %v958 = vadd.f32 %v701, %v957
  %959 = vmatprep.mubr.bf16.mxu0 0
  %960 = vmatmul.mubr.bf16.gmra.mrb[0].mxu0 %v744
  %v961 = vpop.f32.mrb[0].mxu0
  %v962 = vadd.f32 %v697, %v961
  %v963 = vpop.f32.mrb[0].mxu0
  %v964 = vadd.f32 %v701, %v963
  %v965 = vpop.f32.mrb[0].mxu0
  %v966 = vadd.f32 %v697, %v965
  %v967 = vpop.f32.mrb[0].mxu0
  %v968 = vadd.f32 %v701, %v967
  %969 = vmatprep.mubr.bf16.mxu0 0
  %970 = vmatmul.mubr.bf16.gmra.mrb[0].mxu0 %v745
  %v971 = vpop.f32.mrb[0].mxu0
  %v972 = vadd.f32 %v697, %v971
  %v973 = vpop.f32.mrb[0].mxu0
  %v974 = vadd.f32 %v701, %v973
  %v975 = vpop.f32.mrb[0].mxu0
  %v976 = vadd.f32 %v697, %v975
  %v977 = vpop.f32.mrb[0].mxu0
  %v978 = vadd.f32 %v701, %v977
  %979 = vdwg.mxu0
  %980 = vst [vmem:[#allocation4] sm:$0xff] %v789
  %981 = vst [vmem:[#allocation4 + $0x8] sm:$0xff] %v791
  %982 = vst [vmem:[#allocation4 + $0x10] sm:$0xff] %v902
  %983 = vst [vmem:[#allocation4 + $0x18] sm:$0xff] %v904
  %984 = vst [vmem:[#allocation4 + $0x20] sm:$0xff] %v793
  %985 = vst [vmem:[#allocation4 + $0x28] sm:$0xff] %v795
  %986 = vst [vmem:[#allocation4 + $0x30] sm:$0xff] %v906
  %987 = vst [vmem:[#allocation4 + $0x38] sm:$0xff] %v908
  %988 = vst [vmem:[#allocation4 + $0x40] sm:$0xff] %v799
  %989 = vst [vmem:[#allocation4 + $0x48] sm:$0xff] %v801
  %990 = vst [vmem:[#allocation4 + $0x50] sm:$0xff] %v912
  %991 = vst [vmem:[#allocation4 + $0x58] sm:$0xff] %v914
  %992 = vst [vmem:[#allocation4 + $0x60] sm:$0xff] %v803
  %993 = vst [vmem:[#allocation4 + $0x68] sm:$0xff] %v805
  %994 = vst [vmem:[#allocation4 + $0x70] sm:$0xff] %v916
  %995 = vst [vmem:[#allocation4 + $0x78] sm:$0xff] %v918
  %996 = vst [vmem:[#allocation4 + $0x80] sm:$0xff] %v809
  %997 = vst [vmem:[#allocation4 + $0x88] sm:$0xff] %v811
  %998 = vst [vmem:[#allocation4 + $0x90] sm:$0xff] %v922
  %999 = vst [vmem:[#allocation4 + $0x98] sm:$0xff] %v924
  %1000 = vst [vmem:[#allocation4 + $0xa0] sm:$0xff] %v813
  %1001 = vst [vmem:[#allocation4 + $0xa8] sm:$0xff] %v815
  %1002 = vst [vmem:[#allocation4 + $0xb0] sm:$0xff] %v926
  %1003 = vst [vmem:[#allocation4 + $0xb8] sm:$0xff] %v928
  %1004 = vst [vmem:[#allocation4 + $0xc0] sm:$0xff] %v819
  %1005 = vst [vmem:[#allocation4 + $0xc8] sm:$0xff] %v821
  %1006 = vst [vmem:[#allocation4 + $0xd0] sm:$0xff] %v932
  %1007 = vst [vmem:[#allocation4 + $0xd8] sm:$0xff] %v934
  %1008 = vst [vmem:[#allocation4 + $0xe0] sm:$0xff] %v823
  %1009 = vst [vmem:[#allocation4 + $0xe8] sm:$0xff] %v825
  %1010 = vst [vmem:[#allocation4 + $0xf0] sm:$0xff] %v936
  %1011 = vst [vmem:[#allocation4 + $0xf8] sm:$0xff] %v938
  %1012 = vst [vmem:[#allocation4 + $0x100] sm:$0xff] %v829
  %1013 = vst [vmem:[#allocation4 + $0x108] sm:$0xff] %v831
  %1014 = vst [vmem:[#allocation4 + $0x110] sm:$0xff] %v942
  %1015 = vst [vmem:[#allocation4 + $0x118] sm:$0xff] %v944
  %1016 = vst [vmem:[#allocation4 + $0x120] sm:$0xff] %v833
  %1017 = vst [vmem:[#allocation4 + $0x128] sm:$0xff] %v835
  %1018 = vst [vmem:[#allocation4 + $0x130] sm:$0xff] %v946
  %1019 = vst [vmem:[#allocation4 + $0x138] sm:$0xff] %v948
  %1020 = vst [vmem:[#allocation4 + $0x140] sm:$0xff] %v839
  %1021 = vst [vmem:[#allocation4 + $0x148] sm:$0xff] %v841
  %1022 = vst [vmem:[#allocation4 + $0x150] sm:$0xff] %v952
  %1023 = vst [vmem:[#allocation4 + $0x158] sm:$0xff] %v954
  %1024 = vst [vmem:[#allocation4 + $0x160] sm:$0xff] %v843
  %1025 = vst [vmem:[#allocation4 + $0x168] sm:$0xff] %v845
  %1026 = vst [vmem:[#allocation4 + $0x170] sm:$0xff] %v956
  %1027 = vst [vmem:[#allocation4 + $0x178] sm:$0xff] %v958
  %1028 = vst [vmem:[#allocation4 + $0x180] sm:$0xff] %v849
  %1029 = vst [vmem:[#allocation4 + $0x188] sm:$0xff] %v851
  %1030 = vst [vmem:[#allocation4 + $0x190] sm:$0xff] %v962
  %1031 = vst [vmem:[#allocation4 + $0x198] sm:$0xff] %v964
  %1032 = vst [vmem:[#allocation4 + $0x1a0] sm:$0xff] %v853
  %1033 = vst [vmem:[#allocation4 + $0x1a8] sm:$0xff] %v855
  %1034 = vst [vmem:[#allocation4 + $0x1b0] sm:$0xff] %v966
  %1035 = vst [vmem:[#allocation4 + $0x1b8] sm:$0xff] %v968
  %1036 = vst [vmem:[#allocation4 + $0x1c0] sm:$0xff] %v859
  %1037 = vst [vmem:[#allocation4 + $0x1c8] sm:$0xff] %v861
  %1038 = vst [vmem:[#allocation4 + $0x1d0] sm:$0xff] %v972
  %1039 = vst [vmem:[#allocation4 + $0x1d8] sm:$0xff] %v974
  %1040 = vst [vmem:[#allocation4 + $0x1e0] sm:$0xff] %v863
  %1041 = vst [vmem:[#allocation4 + $0x1e8] sm:$0xff] %v865
  %1042 = vst [vmem:[#allocation4 + $0x1f0] sm:$0xff] %v976
  %1043 = vst [vmem:[#allocation4 + $0x1f8] sm:$0xff] %v978
  loop: start=0, step=1, limit=8
  $region88: #{blstm_forward.2} parent=0 // loop_pre_header
    _
  $region89: #{blstm_forward.2} parent=0 // loop_header
    %s1045 = sphi 0, %s1049
    %p1046 = scmp.ge.s32.totalorder %s1045, 8
  $region90: #{blstm_forward.2} parent=0 // loop_header_branch
    %1048 = sbr.rel (%p1046) target = $region94
  $region91: #{blstm_forward.2} parent=0 // loop_body
    %s1050 = smul.u32 %s1045, 16
    %s1051 = sshra.s32 %s1050, 3
    %s1052 = sand.u32 %s1050, 7
    %s1053 = smul.u32 %s1051, 4
    %s1054 = smul.addr %s1053, 8
    %s1055 = scalar_lea.vmem [#allocation4], %s1054
    %v1056 = vld [vmem:[%s1055] sm:$0xff]
    %v1057 = vld [vmem:[%s1055 + $0x8] sm:$0xff]
    %v1058 = vld [vmem:[%s1055 + $0x10] sm:$0xff]
    %v1059 = vld [vmem:[%s1055 + $0x18] sm:$0xff]
    %v1060 = vld [vmem:[%s1055 + $0x20] sm:$0xff]
    %v1061 = vld [vmem:[%s1055 + $0x28] sm:$0xff]
    %v1062 = vld [vmem:[%s1055 + $0x30] sm:$0xff]
    %v1063 = vld [vmem:[%s1055 + $0x38] sm:$0xff]
    %v1064 = vld [vmem:[#allocation5] sm:$0xff]
    %v1065 = vld [vmem:[#allocation3] sm:$0xff]
    %v1066 = vld [vmem:[#allocation3 + $0x8] sm:$0xff]
    %v1067 = vld [vmem:[#allocation3 + $0x10] sm:$0xff]
    %v1068 = vld [vmem:[#allocation3 + $0x18] sm:$0xff]
    %v1069 = vld [vmem:[#allocation3 + $0x20] sm:$0xff]
    %v1070 = vld [vmem:[#allocation3 + $0x28] sm:$0xff]
    %v1071 = vld [vmem:[#allocation3 + $0x30] sm:$0xff]
    %v1072 = vld [vmem:[#allocation3 + $0x38] sm:$0xff]
    %v1073 = vld [vmem:[#allocation3 + $0x40] sm:$0xff]
    %v1074 = vld [vmem:[#allocation3 + $0x48] sm:$0xff]
    %v1075 = vld [vmem:[#allocation3 + $0x50] sm:$0xff]
    %v1076 = vld [vmem:[#allocation3 + $0x58] sm:$0xff]
    %v1077 = vld [vmem:[#allocation3 + $0x60] sm:$0xff]
    %v1078 = vld [vmem:[#allocation3 + $0x68] sm:$0xff]
    %v1079 = vld [vmem:[#allocation3 + $0x70] sm:$0xff]
    %v1080 = vld [vmem:[#allocation3 + $0x78] sm:$0xff]
    %v1081 = vld [vmem:[#allocation3 + $0x80] sm:$0xff]
    %v1082 = vld [vmem:[#allocation3 + $0x88] sm:$0xff]
    %v1083 = vld [vmem:[#allocation3 + $0x90] sm:$0xff]
    %v1084 = vld [vmem:[#allocation3 + $0x98] sm:$0xff]
    %v1085 = vld [vmem:[#allocation3 + $0xa0] sm:$0xff]
    %v1086 = vld [vmem:[#allocation3 + $0xa8] sm:$0xff]
    %v1087 = vld [vmem:[#allocation3 + $0xb0] sm:$0xff]
    %v1088 = vld [vmem:[#allocation3 + $0xb8] sm:$0xff]
    %v1089 = vld [vmem:[#allocation3 + $0xc0] sm:$0xff]
    %v1090 = vld [vmem:[#allocation3 + $0xc8] sm:$0xff]
    %v1091 = vld [vmem:[#allocation3 + $0xd0] sm:$0xff]
    %v1092 = vld [vmem:[#allocation3 + $0xd8] sm:$0xff]
    %v1093 = vld [vmem:[#allocation3 + $0xe0] sm:$0xff]
    %v1094 = vld [vmem:[#allocation3 + $0xe8] sm:$0xff]
    %v1095 = vld [vmem:[#allocation3 + $0xf0] sm:$0xff]
    %v1096 = vld [vmem:[#allocation3 + $0xf8] sm:$0xff]
    %1097 = vmatprep.subr.bf16.mxu0 %v1066
    %1098 = vmatpush1.bf16.msra.mxu0 %v1065
    %1099 = vmatprep.subr.bf16.mxu0 %v1070
    %1100 = vmatpush1.bf16.msra.mxu0 %v1069
    %1101 = vmatprep.subr.bf16.mxu0 %v1074
    %1102 = vmatpush1.bf16.msra.mxu0 %v1073
    %1103 = vmatprep.subr.bf16.mxu0 %v1078
    %1104 = vmatpush1.bf16.msra.mxu0 %v1077
    %1105 = vmatprep.subr.bf16.mxu0 %v1082
    %1106 = vmatpush1.bf16.msra.mxu0 %v1081
    %1107 = vmatprep.subr.bf16.mxu0 %v1086
    %1108 = vmatpush1.bf16.msra.mxu0 %v1085
    %1109 = vmatprep.subr.bf16.mxu0 %v1090
    %1110 = vmatpush1.bf16.msra.mxu0 %v1089
    %1111 = vmatprep.subr.bf16.mxu0 %v1094
    %1112 = vmatpush1.bf16.msra.mxu0 %v1093
    %1113 = vmatprep.subr.bf16.mxu0 0
    %1114 = vmatpush1.bf16.msra.mxu0 0
    %1115 = vmatprep.subr.bf16.mxu0 0
    %1116 = vmatpush1.bf16.msra.mxu0 0
    %1117 = vmatprep.subr.bf16.mxu0 0
    %1118 = vmatpush1.bf16.msra.mxu0 0
    %1119 = vmatprep.subr.bf16.mxu0 0
    %1120 = vmatpush1.bf16.msra.mxu0 0
    %1121 = vmatprep.subr.bf16.mxu0 0
    %1122 = vmatpush1.bf16.msra.mxu0 0
    %1123 = vmatprep.subr.bf16.mxu0 0
    %1124 = vmatpush1.bf16.msra.mxu0 0
    %1125 = vmatprep.subr.bf16.mxu0 0
    %1126 = vmatpush1.bf16.msra.mxu0 0
    %1127 = vmatprep.subr.bf16.mxu0 0
    %1128 = vmatpush1.bf16.msra.mxu0 0
    %1129 = vmatprep.mubr.bf16.mxu0 0
    %1130 = vmatmul.mubr.bf16.gmra.mrb[0].mxu0 %v1064
    %v1131 = vpop.f32.mrb[0].mxu0
    %v1132 = vadd.f32 0.0, %v1131
    %v1133 = vpop.f32.mrb[0].mxu0
    %v1134 = vadd.f32 0.0, %v1133
    %v1135 = vpop.f32.mrb[0].mxu0
    %v1136 = vadd.f32 0.0, %v1135
    %v1137 = vpop.f32.mrb[0].mxu0
    %v1138 = vadd.f32 0.0, %v1137
    %1139 = vdwg.mxu0
    %1140 = vmatprep.subr.bf16.mxu0 %v1068
    %1141 = vmatpush1.bf16.msra.mxu0 %v1067
    %1142 = vmatprep.subr.bf16.mxu0 %v1072
    %1143 = vmatpush1.bf16.msra.mxu0 %v1071
    %1144 = vmatprep.subr.bf16.mxu0 %v1076
    %1145 = vmatpush1.bf16.msra.mxu0 %v1075
    %1146 = vmatprep.subr.bf16.mxu0 %v1080
    %1147 = vmatpush1.bf16.msra.mxu0 %v1079
    %1148 = vmatprep.subr.bf16.mxu0 %v1084
    %1149 = vmatpush1.bf16.msra.mxu0 %v1083
    %1150 = vmatprep.subr.bf16.mxu0 %v1088
    %1151 = vmatpush1.bf16.msra.mxu0 %v1087
    %1152 = vmatprep.subr.bf16.mxu0 %v1092
    %1153 = vmatpush1.bf16.msra.mxu0 %v1091
    %1154 = vmatprep.subr.bf16.mxu0 %v1096
    %1155 = vmatpush1.bf16.msra.mxu0 %v1095
    %1156 = vmatprep.subr.bf16.mxu0 0
    %1157 = vmatpush1.bf16.msra.mxu0 0
    %1158 = vmatprep.subr.bf16.mxu0 0
    %1159 = vmatpush1.bf16.msra.mxu0 0
    %1160 = vmatprep.subr.bf16.mxu0 0
    %1161 = vmatpush1.bf16.msra.mxu0 0
    %1162 = vmatprep.subr.bf16.mxu0 0
    %1163 = vmatpush1.bf16.msra.mxu0 0
    %1164 = vmatprep.subr.bf16.mxu0 0
    %1165 = vmatpush1.bf16.msra.mxu0 0
    %1166 = vmatprep.subr.bf16.mxu0 0
    %1167 = vmatpush1.bf16.msra.mxu0 0
    %1168 = vmatprep.subr.bf16.mxu0 0
    %1169 = vmatpush1.bf16.msra.mxu0 0
    %1170 = vmatprep.subr.bf16.mxu0 0
    %1171 = vmatpush1.bf16.msra.mxu0 0
    %1172 = vmatprep.mubr.bf16.mxu0 0
    %1173 = vmatmul.mubr.bf16.gmra.mrb[0].mxu0 %v1064
    %v1174 = vpop.f32.mrb[0].mxu0
    %v1175 = vadd.f32 0.0, %v1174
    %v1176 = vpop.f32.mrb[0].mxu0
    %v1177 = vadd.f32 0.0, %v1176
    %v1178 = vpop.f32.mrb[0].mxu0
    %v1179 = vadd.f32 0.0, %v1178
    %v1180 = vpop.f32.mrb[0].mxu0
    %v1181 = vadd.f32 0.0, %v1180
    %1182 = vdwg.mxu0
    %v1183 = vadd.f32 %v1056, %v1132
    %v1184 = vadd.f32 %v1057, %v1134
    %v1185 = vadd.f32 %v1058, %v1175
    %v1186 = vadd.f32 %v1059, %v1177
    %v1187 = vadd.f32 %v1060, %v1136
    %v1188 = vadd.f32 %v1061, %v1138
    %v1189 = vadd.f32 %v1062, %v1179
    %v1190 = vadd.f32 %v1063, %v1181
    %v1191 = vxor.u32 %v1183, 2147483648
    %v1192 = vxor.u32 %v1187, 2147483648
    %v1193 = vmul.f32 %v1191, 1.442695
    %v1194 = vpow.pop %v1193
    %v1195 = vmul.f32 %v1192, 1.442695
    %v1196 = vpow.pop %v1195
    %v1197 = vadd.f32 %v1194, 1.0
    %v1198 = vadd.f32 %v1196, 1.0
    %v1199 = vrcp.pop %v1197
    %v1200 = vmul.f32 1.0, %v1199
    %v1201 = vrcp.pop %v1198
    %v1202 = vmul.f32 1.0, %v1201
    %v1203 = vxor.u32 %v1184, 2147483648
    %v1204 = vxor.u32 %v1188, 2147483648
    %v1205 = vmul.f32 %v1203, 1.442695
    %v1206 = vpow.pop %v1205
    %v1207 = vmul.f32 %v1204, 1.442695
    %v1208 = vpow.pop %v1207
    %v1209 = vadd.f32 %v1206, 1.0
    %v1210 = vadd.f32 %v1208, 1.0
    %v1211 = vrcp.pop %v1209
    %v1212 = vmul.f32 1.0, %v1211
    %v1213 = vrcp.pop %v1210
    %v1214 = vmul.f32 1.0, %v1213
    %v1215 = vtanh.pop %v1185
    %v1216 = vtanh.pop %v1189
    %v1217 = vxor.u32 %v1186, 2147483648
    %v1218 = vxor.u32 %v1190, 2147483648
    %v1219 = vmul.f32 %v1217, 1.442695
    %v1220 = vpow.pop %v1219
    %v1221 = vmul.f32 %v1218, 1.442695
    %v1222 = vpow.pop %v1221
    %v1223 = vadd.f32 %v1220, 1.0
    %v1224 = vadd.f32 %v1222, 1.0
    %v1225 = vrcp.pop %v1223
    %v1226 = vmul.f32 1.0, %v1225
    %v1227 = vrcp.pop %v1224
    %v1228 = vmul.f32 1.0, %v1227
    %v1229 = vld [vmem:[#allocation6] sm:$0xff]
    %v1230 = vld [vmem:[#allocation6 + $0x8] sm:$0xff]
    %v1231 = vmul.f32 %v1212, %v1229
    %v1232 = vmul.f32 %v1214, %v1230
    %v1233 = vmul.f32 %v1200, %v1215
    %v1234 = vmul.f32 %v1202, %v1216
    %v1235 = vadd.f32 %v1231, %v1233
    %v1236 = vadd.f32 %v1232, %v1234
    %v1237 = vtanh.pop %v1235
    %v1238 = vtanh.pop %v1236
    %v1239 = vmul.f32 %v1226, %v1237
    %v1240 = vmul.f32 %v1228, %v1238
    %v1241 = vpack.c.bf16 %v1240, %v1239
    %1242 = vst [vmem:[#allocation5] sm:$0xff] %v1241
    %1243 = vst [vmem:[#allocation6] sm:$0xff] %v1235
    %1244 = vst [vmem:[#allocation6 + $0x8] sm:$0xff] %v1236
    %v1245 = vmul.f32 %v1239, 0.5
    %v1246 = vmul.f32 %v1240, 0.5
    %v1247 = vmul.f32 %v1239, 0.70710677
    %v1248 = vmul.f32 %v1240, 0.70710677
    %v1249 = verf.f32.pop %v1247
    %v1250 = verf.f32.pop %v1248
    %v1251 = vadd.f32 %v1249, 1.0
    %v1252 = vadd.f32 %v1250, 1.0
    %v1253 = vmul.f32 %v1245, %v1251
    %v1254 = vmul.f32 %v1246, %v1252
    %v1255 = vpack.c.bf16 %v1254, %v1253
    %v1257 = vunpack.c.l.b16 %v1255
    %v1258 = vunpack.c.h.b16 %v1255
    %v1259 = vpack.c.b16 %v1257, %v1257
    %v1260 = vpack.c.b16 %v1258, %v1258
    %s1263 = smul.addr %s1051, 4
    %s1264 = scalar_lea.vmem %s4, %s1263
    %1265 = vst [vmem:[%s1264] sm:$0xf] %v1259
    %1266 = vst [vmem:[%s1264 + $0x4] sm:$0xf] %v1260
  $region92: #{blstm_forward.2} parent=0 // loop_footer
    %s1049 = sadd.s32 1, %s1045
  $region93: #{blstm_forward.2} parent=0 // loop_footer_branch
    %1044 = sbr.rel target = $region89
  $region94: #{blstm_forward.2} parent=0 // loop_exit
    _
  // Predicated region
  $region95: #{blstm_forward.2} parent=0 // pred_check
    _
  $region96: #{blstm_forward.2} parent=0 // pred_check_branch
    %1268 = sbr.rel (0) target = $region98
  $region97: #{blstm_forward.2} parent=0 // pred_region
    _
  $region98: #{blstm_forward.2} parent=0 // pred_fallthru
    _
  // Predicated region
  $region99: #{blstm_forward.2} parent=0 // pred_check
    _
  $region100: #{blstm_forward.2} parent=0 // pred_check_branch
    %1270 = sbr.rel (0) target = $region102
  $region101: #{blstm_forward.2} parent=0 // pred_region
    _
  $region102: #{blstm_forward.2} parent=0 // pred_fallthru
    _
  %1271 = vsyncmov [#allocation7]
  %s1272 = vpop.sfrf %1271
  %p1273 = scmp.eq.s32.totalorder %s1272, 0
  %p1274 = pneg %p1273
  %1276 = shalt.err (%p1274)
  %s1277 = scalar_lea.sflag [#allocation7], 1
  %1278 = vsyncmov %s1277
  %s1279 = vpop.sfrf %1278
  %p1280 = scmp.eq.s32.totalorder %s1279, 0
  %p1281 = pneg %p1280
  %1283 = shalt.err (%p1281)

// kernel: blstm_forward.3
$region0: #{blstm_forward.3}
  #allocation0 [shape = 'u32[]', space=smem, size = 0x4, offset = 0x4, fixed_abs, tag = 'smem constant byte address 0x4 - core index']
  #allocation1 [shape = 'u32[144,128]{1,0:T(1,128)}', space=vmem, size = 0x12000, scoped, tag = 'internal scratch']
  #allocation2 [shape = 'bf16[128,512]{1,0:T(16,128)(2,1)}', space=vmem, size = 0x20000, scoped, tag = 'scratch operand']
  #allocation3 [shape = 'bf16[128,512]{1,0:T(16,128)(2,1)}', space=vmem, size = 0x20000, scoped, tag = 'scratch operand']
  #allocation4 [shape = 'f32[128,512]{1,0:T(8,128)}', space=vmem, size = 0x40000, scoped, tag = 'scratch operand']
  #allocation5 [shape = 'bf16[16,128]{1,0:T(16,128)(2,1)}', space=vmem, size = 0x1000, scoped, tag = 'scratch operand']
  #allocation6 [shape = 'f32[16,128]{1,0:T(8,128)}', space=vmem, size = 0x2000, scoped, tag = 'scratch operand']
  #allocation7 [shape = 's32[2]{0}', space=sflag, size = 0x8, scoped, tag = 'scratch operand']
  #allocation8 [shape = 's32[]', space=sflag, size = 0x4, offset = 0, fixed_abs, tag = 'sflag constant byte address 0x0 - dummy sync flag']
  #allocation9 [shape = 's32[]', space=sflag, size = 0x4, offset = 0, fixed_abs, tag = 'sflag constant byte address 0x0 - dummy sync flag']
  %s0 = inlined_call_operand.vmem [shape: bf16[128,128], index: 0, kind: input, shape index: {}]
  %s1 = inlined_call_operand.vmem [shape: bf16[128,512], index: 1, kind: input, shape index: {}]
  %s2 = inlined_call_operand.vmem [shape: bf16[128,512], index: 2, kind: input, shape index: {}]
  %s3 = inlined_call_operand.vmem [shape: f32[1,512], index: 3, kind: input, shape index: {}]
  %s4 = inlined_call_operand.vmem [shape: f32[128,128], index: 4, kind: output, shape index: {}]
  %s5 = sld [smem:[#allocation0]]
  $region103: #{blstm_forward.3} parent=0
    _
  %s7 = ssub.s32 1, %s5
  %s8 = scalar_select 0, %s7, %s5
  // Predicated region
  $region2: #{blstm_forward.3} parent=0 // pred_check
    _
  $region3: #{blstm_forward.3} parent=0 // pred_check_branch
    %10 = sbr.rel (0) target = $region5
  $region4: #{blstm_forward.3} parent=0 // pred_region
    %s11 = ssub.s32 0, 0
    %s12 = smul.u32 16, %s11
    %p13 = scmp.lt.s32.totalorder %s12, 15
    %s14 = scalar_select %p13, %s12, 15
    %s15 = smul.addr %s14, 4
    %s16 = scalar_lea.vmem %s0, %s15
    %s17 = ssub.s32 0, 0
    %s18 = smul.u32 16, %s17
  $region5: #{blstm_forward.3} parent=0 // pred_fallthru
    _
  // Predicated region
  $region6: #{blstm_forward.3} parent=0 // pred_check
    _
  $region7: #{blstm_forward.3} parent=0 // pred_check_branch
    %20 = sbr.rel (0) target = $region9
  $region8: #{blstm_forward.3} parent=0 // pred_region
    _
  $region9: #{blstm_forward.3} parent=0 // pred_fallthru
    _
  %s21 = ssub.s32 0, 0
  %s22 = smul.u32 16, %s21
  %p23 = scmp.lt.s32.totalorder %s22, 15
  %s24 = scalar_select %p23, %s22, 15
  %s25 = smul.addr %s24, 4
  %s26 = scalar_lea.vmem %s0, %s25
  %s27 = ssub.s32 0, 0
  %s28 = smul.u32 16, %s27
  %p29 = scmp.lt.s32.totalorder %s28, 15
  %s30 = scalar_select %p29, %s28, 15
  %s31 = smul.addr %s30, 8
  %s32 = scalar_lea.vmem %s4, %s31
  %s33 = ssub.s32 0, 0
  %s34 = smul.u32 16, %s33
  %p35 = scmp.lt.s32.totalorder %s34, 15
  %s36 = scalar_select %p35, %s34, 15
  %s37 = smul.addr %s36, 4
  %s38 = scalar_lea.vmem %s0, %s37
  %s39 = ssub.s32 0, 0
  %s40 = smul.u32 16, %s39
  %s41 = ssub.s32 0, 0
  %s42 = smul.u32 16, %s41
  %p43 = scmp.lt.s32.totalorder %s42, 15
  %s44 = scalar_select %p43, %s42, 15
  %s45 = smul.addr %s44, 8
  %s46 = scalar_lea.vmem %s4, %s45
  %s47 = ssub.s32 0, 0
  %s48 = smul.u32 16, %s47
  %p50 = scmp.eq.s32.totalorder 0, 0
  // Predicated region
  $region10: #{blstm_forward.3} parent=0 // pred_check
    %p51 = pneg %p50
  $region11: #{blstm_forward.3} parent=0 // pred_check_branch
    %53 = sbr.rel (%p51) target = $region13
  $region12: #{blstm_forward.3} parent=0 // pred_region
    %p55 = scmp.lt.u32.totalorder 4, 8
    %p56 = pneg %p55
    // Predicated region
    $region14: #{blstm_forward.3} parent=12 // pred_check
      _
    $region15: #{blstm_forward.3} parent=12 // pred_check_branch
      %58 = sbr.rel (%p55) target = $region17
    $region16: #{blstm_forward.3} parent=12 // pred_region
      %s199 = sand.u32 4, 7
      %p200 = scmp.eq.s32.totalorder %s199, 0
      %p201 = pneg %p200
      // Predicated region
      $region29: #{blstm_forward.3} parent=16 // pred_check
        _
      $region30: #{blstm_forward.3} parent=16 // pred_check_branch
        %203 = sbr.rel (%p200) target = $region32
      $region31: #{blstm_forward.3} parent=16 // pred_region
        %s204 = sand.u32 4, 7
        %s205 = ssub.s32 4, %s204
        %s206 = scalar_lea.vmem %s1, %s205
        %s207 = ssub.s32 4, %s204
        %s208 = scalar_lea.vmem [#allocation2], %s207
        loop: start=0, step=1, limit=1
        $region33: #{blstm_forward.3} parent=31 // loop_pre_header
          _
        $region34: #{blstm_forward.3} parent=31 // loop_header
          %s210 = sphi 0, %s214
          %p211 = scmp.ge.s32.totalorder %s210, 1
          %s215 = sphi %s1, %s1
          %s216 = sphi [#allocation2], [#allocation2]
        $region35: #{blstm_forward.3} parent=31 // loop_header_branch
          %213 = sbr.rel (%p211) target = $region39
        $region36: #{blstm_forward.3} parent=31 // loop_body
          _
        $region37: #{blstm_forward.3} parent=31 // loop_footer
          %s214 = sadd.s32 1, %s210
        $region38: #{blstm_forward.3} parent=31 // loop_footer_branch
          %209 = sbr.rel target = $region34
        $region39: #{blstm_forward.3} parent=31 // loop_exit
          _
        %s217 = sshllo.u32 0, %s204
        loop: start=0, step=1, limit=1
        $region40: #{blstm_forward.3} parent=31 // loop_pre_header
          _
        $region41: #{blstm_forward.3} parent=31 // loop_header
          %s219 = sphi 0, %s223
          %p220 = scmp.ge.s32.totalorder %s219, 1
          %s224 = sphi %s206, %s206
          %s225 = sphi %s208, %s208
        $region42: #{blstm_forward.3} parent=31 // loop_header_branch
          %222 = sbr.rel (%p220) target = $region46
        $region43: #{blstm_forward.3} parent=31 // loop_body
          %v226 = vld [vmem:[%s224] sm:%s217]
          %227 = vst [vmem:[%s225] sm:%s217] %v226
          %v228 = vld [vmem:[%s224 + $0x10] sm:%s217]
          %229 = vst [vmem:[%s225 + $0x4] sm:%s217] %v228
          %v230 = vld [vmem:[%s224 + $0x4] sm:%s217]
          %231 = vst [vmem:[%s225 + $0x8] sm:%s217] %v230
          %v232 = vld [vmem:[%s224 + $0x14] sm:%s217]
          %233 = vst [vmem:[%s225 + $0xc] sm:%s217] %v232
          %v234 = vld [vmem:[%s224 + $0x8] sm:%s217]
          %235 = vst [vmem:[%s225 + $0x10] sm:%s217] %v234
          %v236 = vld [vmem:[%s224 + $0x18] sm:%s217]
          %237 = vst [vmem:[%s225 + $0x14] sm:%s217] %v236
          %v238 = vld [vmem:[%s224 + $0xc] sm:%s217]
          %239 = vst [vmem:[%s225 + $0x18] sm:%s217] %v238
          %v240 = vld [vmem:[%s224 + $0x1c] sm:%s217]
          %241 = vst [vmem:[%s225 + $0x1c] sm:%s217] %v240
          %v242 = vld [vmem:[%s224 + $0x20] sm:%s217]
          %243 = vst [vmem:[%s225 + $0x20] sm:%s217] %v242
          %v244 = vld [vmem:[%s224 + $0x30] sm:%s217]
          %245 = vst [vmem:[%s225 + $0x24] sm:%s217] %v244
          %v246 = vld [vmem:[%s224 + $0x24] sm:%s217]
          %247 = vst [vmem:[%s225 + $0x28] sm:%s217] %v246
          %v248 = vld [vmem:[%s224 + $0x34] sm:%s217]
          %249 = vst [vmem:[%s225 + $0x2c] sm:%s217] %v248
          %v250 = vld [vmem:[%s224 + $0x28] sm:%s217]
          %251 = vst [vmem:[%s225 + $0x30] sm:%s217] %v250
          %v252 = vld [vmem:[%s224 + $0x38] sm:%s217]
          %253 = vst [vmem:[%s225 + $0x34] sm:%s217] %v252
          %v254 = vld [vmem:[%s224 + $0x2c] sm:%s217]
          %255 = vst [vmem:[%s225 + $0x38] sm:%s217] %v254
          %v256 = vld [vmem:[%s224 + $0x3c] sm:%s217]
          %257 = vst [vmem:[%s225 + $0x3c] sm:%s217] %v256
          %v258 = vld [vmem:[%s224 + $0x40] sm:%s217]
          %259 = vst [vmem:[%s225 + $0x40] sm:%s217] %v258
          %v260 = vld [vmem:[%s224 + $0x50] sm:%s217]
          %261 = vst [vmem:[%s225 + $0x44] sm:%s217] %v260
          %v262 = vld [vmem:[%s224 + $0x44] sm:%s217]
          %263 = vst [vmem:[%s225 + $0x48] sm:%s217] %v262
          %v264 = vld [vmem:[%s224 + $0x54] sm:%s217]
          %265 = vst [vmem:[%s225 + $0x4c] sm:%s217] %v264
          %v266 = vld [vmem:[%s224 + $0x48] sm:%s217]
          %267 = vst [vmem:[%s225 + $0x50] sm:%s217] %v266
          %v268 = vld [vmem:[%s224 + $0x58] sm:%s217]
          %269 = vst [vmem:[%s225 + $0x54] sm:%s217] %v268
          %v270 = vld [vmem:[%s224 + $0x4c] sm:%s217]
          %271 = vst [vmem:[%s225 + $0x58] sm:%s217] %v270
          %v272 = vld [vmem:[%s224 + $0x5c] sm:%s217]
          %273 = vst [vmem:[%s225 + $0x5c] sm:%s217] %v272
          %v274 = vld [vmem:[%s224 + $0x60] sm:%s217]
          %275 = vst [vmem:[%s225 + $0x60] sm:%s217] %v274
          %v276 = vld [vmem:[%s224 + $0x70] sm:%s217]
          %277 = vst [vmem:[%s225 + $0x64] sm:%s217] %v276
          %v278 = vld [vmem:[%s224 + $0x64] sm:%s217]
          %279 = vst [vmem:[%s225 + $0x68] sm:%s217] %v278
          %v280 = vld [vmem:[%s224 + $0x74] sm:%s217]
          %281 = vst [vmem:[%s225 + $0x6c] sm:%s217] %v280
          %v282 = vld [vmem:[%s224 + $0x68] sm:%s217]
          %283 = vst [vmem:[%s225 + $0x70] sm:%s217] %v282
          %v284 = vld [vmem:[%s224 + $0x78] sm:%s217]
          %285 = vst [vmem:[%s225 + $0x74] sm:%s217] %v284
          %v286 = vld [vmem:[%s224 + $0x6c] sm:%s217]
          %287 = vst [vmem:[%s225 + $0x78] sm:%s217] %v286
          %v288 = vld [vmem:[%s224 + $0x7c] sm:%s217]
          %289 = vst [vmem:[%s225 + $0x7c] sm:%s217] %v288
          %v290 = vld [vmem:[%s224 + $0x80] sm:%s217]
          %291 = vst [vmem:[%s225 + $0x80] sm:%s217] %v290
          %v292 = vld [vmem:[%s224 + $0x90] sm:%s217]
          %293 = vst [vmem:[%s225 + $0x84] sm:%s217] %v292
          %v294 = vld [vmem:[%s224 + $0x84] sm:%s217]
          %295 = vst [vmem:[%s225 + $0x88] sm:%s217] %v294
          %v296 = vld [vmem:[%s224 + $0x94] sm:%s217]
          %297 = vst [vmem:[%s225 + $0x8c] sm:%s217] %v296
          %v298 = vld [vmem:[%s224 + $0x88] sm:%s217]
          %299 = vst [vmem:[%s225 + $0x90] sm:%s217] %v298
          %v300 = vld [vmem:[%s224 + $0x98] sm:%s217]
          %301 = vst [vmem:[%s225 + $0x94] sm:%s217] %v300
          %v302 = vld [vmem:[%s224 + $0x8c] sm:%s217]
          %303 = vst [vmem:[%s225 + $0x98] sm:%s217] %v302
          %v304 = vld [vmem:[%s224 + $0x9c] sm:%s217]
          %305 = vst [vmem:[%s225 + $0x9c] sm:%s217] %v304
          %v306 = vld [vmem:[%s224 + $0xa0] sm:%s217]
          %307 = vst [vmem:[%s225 + $0xa0] sm:%s217] %v306
          %v308 = vld [vmem:[%s224 + $0xb0] sm:%s217]
          %309 = vst [vmem:[%s225 + $0xa4] sm:%s217] %v308
          %v310 = vld [vmem:[%s224 + $0xa4] sm:%s217]
          %311 = vst [vmem:[%s225 + $0xa8] sm:%s217] %v310
          %v312 = vld [vmem:[%s224 + $0xb4] sm:%s217]
          %313 = vst [vmem:[%s225 + $0xac] sm:%s217] %v312
          %v314 = vld [vmem:[%s224 + $0xa8] sm:%s217]
          %315 = vst [vmem:[%s225 + $0xb0] sm:%s217] %v314
          %v316 = vld [vmem:[%s224 + $0xb8] sm:%s217]
          %317 = vst [vmem:[%s225 + $0xb4] sm:%s217] %v316
          %v318 = vld [vmem:[%s224 + $0xac] sm:%s217]
          %319 = vst [vmem:[%s225 + $0xb8] sm:%s217] %v318
          %v320 = vld [vmem:[%s224 + $0xbc] sm:%s217]
          %321 = vst [vmem:[%s225 + $0xbc] sm:%s217] %v320
          %v322 = vld [vmem:[%s224 + $0xc0] sm:%s217]
          %323 = vst [vmem:[%s225 + $0xc0] sm:%s217] %v322
          %v324 = vld [vmem:[%s224 + $0xd0] sm:%s217]
          %325 = vst [vmem:[%s225 + $0xc4] sm:%s217] %v324
          %v326 = vld [vmem:[%s224 + $0xc4] sm:%s217]
          %327 = vst [vmem:[%s225 + $0xc8] sm:%s217] %v326
          %v328 = vld [vmem:[%s224 + $0xd4] sm:%s217]
          %329 = vst [vmem:[%s225 + $0xcc] sm:%s217] %v328
          %v330 = vld [vmem:[%s224 + $0xc8] sm:%s217]
          %331 = vst [vmem:[%s225 + $0xd0] sm:%s217] %v330
          %v332 = vld [vmem:[%s224 + $0xd8] sm:%s217]
          %333 = vst [vmem:[%s225 + $0xd4] sm:%s217] %v332
          %v334 = vld [vmem:[%s224 + $0xcc] sm:%s217]
          %335 = vst [vmem:[%s225 + $0xd8] sm:%s217] %v334
          %v336 = vld [vmem:[%s224 + $0xdc] sm:%s217]
          %337 = vst [vmem:[%s225 + $0xdc] sm:%s217] %v336
          %v338 = vld [vmem:[%s224 + $0xe0] sm:%s217]
          %339 = vst [vmem:[%s225 + $0xe0] sm:%s217] %v338
          %v340 = vld [vmem:[%s224 + $0xf0] sm:%s217]
          %341 = vst [vmem:[%s225 + $0xe4] sm:%s217] %v340
          %v342 = vld [vmem:[%s224 + $0xe4] sm:%s217]
          %343 = vst [vmem:[%s225 + $0xe8] sm:%s217] %v342
          %v344 = vld [vmem:[%s224 + $0xf4] sm:%s217]
          %345 = vst [vmem:[%s225 + $0xec] sm:%s217] %v344
          %v346 = vld [vmem:[%s224 + $0xe8] sm:%s217]
          %347 = vst [vmem:[%s225 + $0xf0] sm:%s217] %v346
          %v348 = vld [vmem:[%s224 + $0xf8] sm:%s217]
          %349 = vst [vmem:[%s225 + $0xf4] sm:%s217] %v348
          %v350 = vld [vmem:[%s224 + $0xec] sm:%s217]
          %351 = vst [vmem:[%s225 + $0xf8] sm:%s217] %v350
          %v352 = vld [vmem:[%s224 + $0xfc] sm:%s217]
          %353 = vst [vmem:[%s225 + $0xfc] sm:%s217] %v352
        $region44: #{blstm_forward.3} parent=31 // loop_footer
          %s223 = sadd.s32 1, %s219
        $region45: #{blstm_forward.3} parent=31 // loop_footer_branch
          %218 = sbr.rel target = $region41
        $region46: #{blstm_forward.3} parent=31 // loop_exit
          _
      $region32: #{blstm_forward.3} parent=16 // pred_fallthru
        _
    $region17: #{blstm_forward.3} parent=12 // pred_fallthru
      _
    // Predicated region
    $region18: #{blstm_forward.3} parent=12 // pred_check
      %p59 = pneg %p55
    $region19: #{blstm_forward.3} parent=12 // pred_check_branch
      %61 = sbr.rel (%p59) target = $region21
    $region20: #{blstm_forward.3} parent=12 // pred_region
      %s62 = sshllo.u32 0, 4
      loop: start=0, step=1, limit=1
      $region22: #{blstm_forward.3} parent=20 // loop_pre_header
        _
      $region23: #{blstm_forward.3} parent=20 // loop_header
        %s64 = sphi 0, %s68
        %p65 = scmp.ge.s32.totalorder %s64, 1
        %s69 = sphi %s1, %s1
        %s70 = sphi [#allocation2], [#allocation2]
      $region24: #{blstm_forward.3} parent=20 // loop_header_branch
        %67 = sbr.rel (%p65) target = $region28
      $region25: #{blstm_forward.3} parent=20 // loop_body
        %v71 = vld [vmem:[%s69] sm:%s62]
        %72 = vst [vmem:[%s70] sm:%s62] %v71
        %v73 = vld [vmem:[%s69 + $0x10] sm:%s62]
        %74 = vst [vmem:[%s70 + $0x4] sm:%s62] %v73
        %v75 = vld [vmem:[%s69 + $0x4] sm:%s62]
        %76 = vst [vmem:[%s70 + $0x8] sm:%s62] %v75
        %v77 = vld [vmem:[%s69 + $0x14] sm:%s62]
        %78 = vst [vmem:[%s70 + $0xc] sm:%s62] %v77
        %v79 = vld [vmem:[%s69 + $0x8] sm:%s62]
        %80 = vst [vmem:[%s70 + $0x10] sm:%s62] %v79
        %v81 = vld [vmem:[%s69 + $0x18] sm:%s62]
        %82 = vst [vmem:[%s70 + $0x14] sm:%s62] %v81
        %v83 = vld [vmem:[%s69 + $0xc] sm:%s62]
        %84 = vst [vmem:[%s70 + $0x18] sm:%s62] %v83
        %v85 = vld [vmem:[%s69 + $0x1c] sm:%s62]
        %86 = vst [vmem:[%s70 + $0x1c] sm:%s62] %v85
        %v87 = vld [vmem:[%s69 + $0x20] sm:%s62]
        %88 = vst [vmem:[%s70 + $0x20] sm:%s62] %v87
        %v89 = vld [vmem:[%s69 + $0x30] sm:%s62]
        %90 = vst [vmem:[%s70 + $0x24] sm:%s62] %v89
        %v91 = vld [vmem:[%s69 + $0x24] sm:%s62]
        %92 = vst [vmem:[%s70 + $0x28] sm:%s62] %v91
        %v93 = vld [vmem:[%s69 + $0x34] sm:%s62]
        %94 = vst [vmem:[%s70 + $0x2c] sm:%s62] %v93
        %v95 = vld [vmem:[%s69 + $0x28] sm:%s62]
        %96 = vst [vmem:[%s70 + $0x30] sm:%s62] %v95
        %v97 = vld [vmem:[%s69 + $0x38] sm:%s62]
        %98 = vst [vmem:[%s70 + $0x34] sm:%s62] %v97
        %v99 = vld [vmem:[%s69 + $0x2c] sm:%s62]
        %100 = vst [vmem:[%s70 + $0x38] sm:%s62] %v99
        %v101 = vld [vmem:[%s69 + $0x3c] sm:%s62]
        %102 = vst [vmem:[%s70 + $0x3c] sm:%s62] %v101
        %v103 = vld [vmem:[%s69 + $0x40] sm:%s62]
        %104 = vst [vmem:[%s70 + $0x40] sm:%s62] %v103
        %v105 = vld [vmem:[%s69 + $0x50] sm:%s62]
        %106 = vst [vmem:[%s70 + $0x44] sm:%s62] %v105
        %v107 = vld [vmem:[%s69 + $0x44] sm:%s62]
        %108 = vst [vmem:[%s70 + $0x48] sm:%s62] %v107
        %v109 = vld [vmem:[%s69 + $0x54] sm:%s62]
        %110 = vst [vmem:[%s70 + $0x4c] sm:%s62] %v109
        %v111 = vld [vmem:[%s69 + $0x48] sm:%s62]
        %112 = vst [vmem:[%s70 + $0x50] sm:%s62] %v111
        %v113 = vld [vmem:[%s69 + $0x58] sm:%s62]
        %114 = vst [vmem:[%s70 + $0x54] sm:%s62] %v113
        %v115 = vld [vmem:[%s69 + $0x4c] sm:%s62]
        %116 = vst [vmem:[%s70 + $0x58] sm:%s62] %v115
        %v117 = vld [vmem:[%s69 + $0x5c] sm:%s62]
        %118 = vst [vmem:[%s70 + $0x5c] sm:%s62] %v117
        %v119 = vld [vmem:[%s69 + $0x60] sm:%s62]
        %120 = vst [vmem:[%s70 + $0x60] sm:%s62] %v119
        %v121 = vld [vmem:[%s69 + $0x70] sm:%s62]
        %122 = vst [vmem:[%s70 + $0x64] sm:%s62] %v121
        %v123 = vld [vmem:[%s69 + $0x64] sm:%s62]
        %124 = vst [vmem:[%s70 + $0x68] sm:%s62] %v123
        %v125 = vld [vmem:[%s69 + $0x74] sm:%s62]
        %126 = vst [vmem:[%s70 + $0x6c] sm:%s62] %v125
        %v127 = vld [vmem:[%s69 + $0x68] sm:%s62]
        %128 = vst [vmem:[%s70 + $0x70] sm:%s62] %v127
        %v129 = vld [vmem:[%s69 + $0x78] sm:%s62]
        %130 = vst [vmem:[%s70 + $0x74] sm:%s62] %v129
        %v131 = vld [vmem:[%s69 + $0x6c] sm:%s62]
        %132 = vst [vmem:[%s70 + $0x78] sm:%s62] %v131
        %v133 = vld [vmem:[%s69 + $0x7c] sm:%s62]
        %134 = vst [vmem:[%s70 + $0x7c] sm:%s62] %v133
        %v135 = vld [vmem:[%s69 + $0x80] sm:%s62]
        %136 = vst [vmem:[%s70 + $0x80] sm:%s62] %v135
        %v137 = vld [vmem:[%s69 + $0x90] sm:%s62]
        %138 = vst [vmem:[%s70 + $0x84] sm:%s62] %v137
        %v139 = vld [vmem:[%s69 + $0x84] sm:%s62]
        %140 = vst [vmem:[%s70 + $0x88] sm:%s62] %v139
        %v141 = vld [vmem:[%s69 + $0x94] sm:%s62]
        %142 = vst [vmem:[%s70 + $0x8c] sm:%s62] %v141
        %v143 = vld [vmem:[%s69 + $0x88] sm:%s62]
        %144 = vst [vmem:[%s70 + $0x90] sm:%s62] %v143
        %v145 = vld [vmem:[%s69 + $0x98] sm:%s62]
        %146 = vst [vmem:[%s70 + $0x94] sm:%s62] %v145
        %v147 = vld [vmem:[%s69 + $0x8c] sm:%s62]
        %148 = vst [vmem:[%s70 + $0x98] sm:%s62] %v147
        %v149 = vld [vmem:[%s69 + $0x9c] sm:%s62]
        %150 = vst [vmem:[%s70 + $0x9c] sm:%s62] %v149
        %v151 = vld [vmem:[%s69 + $0xa0] sm:%s62]
        %152 = vst [vmem:[%s70 + $0xa0] sm:%s62] %v151
        %v153 = vld [vmem:[%s69 + $0xb0] sm:%s62]
        %154 = vst [vmem:[%s70 + $0xa4] sm:%s62] %v153
        %v155 = vld [vmem:[%s69 + $0xa4] sm:%s62]
        %156 = vst [vmem:[%s70 + $0xa8] sm:%s62] %v155
        %v157 = vld [vmem:[%s69 + $0xb4] sm:%s62]
        %158 = vst [vmem:[%s70 + $0xac] sm:%s62] %v157
        %v159 = vld [vmem:[%s69 + $0xa8] sm:%s62]
        %160 = vst [vmem:[%s70 + $0xb0] sm:%s62] %v159
        %v161 = vld [vmem:[%s69 + $0xb8] sm:%s62]
        %162 = vst [vmem:[%s70 + $0xb4] sm:%s62] %v161
        %v163 = vld [vmem:[%s69 + $0xac] sm:%s62]
        %164 = vst [vmem:[%s70 + $0xb8] sm:%s62] %v163
        %v165 = vld [vmem:[%s69 + $0xbc] sm:%s62]
        %166 = vst [vmem:[%s70 + $0xbc] sm:%s62] %v165
        %v167 = vld [vmem:[%s69 + $0xc0] sm:%s62]
        %168 = vst [vmem:[%s70 + $0xc0] sm:%s62] %v167
        %v169 = vld [vmem:[%s69 + $0xd0] sm:%s62]
        %170 = vst [vmem:[%s70 + $0xc4] sm:%s62] %v169
        %v171 = vld [vmem:[%s69 + $0xc4] sm:%s62]
        %172 = vst [vmem:[%s70 + $0xc8] sm:%s62] %v171
        %v173 = vld [vmem:[%s69 + $0xd4] sm:%s62]
        %174 = vst [vmem:[%s70 + $0xcc] sm:%s62] %v173
        %v175 = vld [vmem:[%s69 + $0xc8] sm:%s62]
        %176 = vst [vmem:[%s70 + $0xd0] sm:%s62] %v175
        %v177 = vld [vmem:[%s69 + $0xd8] sm:%s62]
        %178 = vst [vmem:[%s70 + $0xd4] sm:%s62] %v177
        %v179 = vld [vmem:[%s69 + $0xcc] sm:%s62]
        %180 = vst [vmem:[%s70 + $0xd8] sm:%s62] %v179
        %v181 = vld [vmem:[%s69 + $0xdc] sm:%s62]
        %182 = vst [vmem:[%s70 + $0xdc] sm:%s62] %v181
        %v183 = vld [vmem:[%s69 + $0xe0] sm:%s62]
        %184 = vst [vmem:[%s70 + $0xe0] sm:%s62] %v183
        %v185 = vld [vmem:[%s69 + $0xf0] sm:%s62]
        %186 = vst [vmem:[%s70 + $0xe4] sm:%s62] %v185
        %v187 = vld [vmem:[%s69 + $0xe4] sm:%s62]
        %188 = vst [vmem:[%s70 + $0xe8] sm:%s62] %v187
        %v189 = vld [vmem:[%s69 + $0xf4] sm:%s62]
        %190 = vst [vmem:[%s70 + $0xec] sm:%s62] %v189
        %v191 = vld [vmem:[%s69 + $0xe8] sm:%s62]
        %192 = vst [vmem:[%s70 + $0xf0] sm:%s62] %v191
        %v193 = vld [vmem:[%s69 + $0xf8] sm:%s62]
        %194 = vst [vmem:[%s70 + $0xf4] sm:%s62] %v193
        %v195 = vld [vmem:[%s69 + $0xec] sm:%s62]
        %196 = vst [vmem:[%s70 + $0xf8] sm:%s62] %v195
        %v197 = vld [vmem:[%s69 + $0xfc] sm:%s62]
        %198 = vst [vmem:[%s70 + $0xfc] sm:%s62] %v197
      $region26: #{blstm_forward.3} parent=20 // loop_footer
        %s68 = sadd.s32 1, %s64
      $region27: #{blstm_forward.3} parent=20 // loop_footer_branch
        %63 = sbr.rel target = $region23
      $region28: #{blstm_forward.3} parent=20 // loop_exit
        _
    $region21: #{blstm_forward.3} parent=12 // pred_fallthru
      _
    // Predicated region
    $region47: #{blstm_forward.3} parent=12 // pred_check
      _
    $region48: #{blstm_forward.3} parent=12 // pred_check_branch
      %356 = sbr.rel (0) target = $region50
    $region49: #{blstm_forward.3} parent=12 // pred_region
      %357 = vsyncadd [#allocation7], 4096
    $region50: #{blstm_forward.3} parent=12 // pred_fallthru
      _
    %s358 = scalar_lea.sflag [#allocation7], 1
    %p360 = scmp.lt.u32.totalorder 4, 8
    %p361 = pneg %p360
    // Predicated region
    $region51: #{blstm_forward.3} parent=12 // pred_check
      _
    $region52: #{blstm_forward.3} parent=12 // pred_check_branch
      %363 = sbr.rel (%p360) target = $region54
    $region53: #{blstm_forward.3} parent=12 // pred_region
      %s504 = sand.u32 4, 7
      %p505 = scmp.eq.s32.totalorder %s504, 0
      %p506 = pneg %p505
      // Predicated region
      $region66: #{blstm_forward.3} parent=53 // pred_check
        _
      $region67: #{blstm_forward.3} parent=53 // pred_check_branch
        %508 = sbr.rel (%p505) target = $region69
      $region68: #{blstm_forward.3} parent=53 // pred_region
        %s509 = sand.u32 4, 7
        %s510 = ssub.s32 4, %s509
        %s511 = scalar_lea.vmem %s2, %s510
        %s512 = ssub.s32 4, %s509
        %s513 = scalar_lea.vmem [#allocation3], %s512
        loop: start=0, step=1, limit=1
        $region70: #{blstm_forward.3} parent=68 // loop_pre_header
          _
        $region71: #{blstm_forward.3} parent=68 // loop_header
          %s515 = sphi 0, %s519
          %p516 = scmp.ge.s32.totalorder %s515, 1
          %s520 = sphi %s2, %s2
          %s521 = sphi [#allocation3], [#allocation3]
        $region72: #{blstm_forward.3} parent=68 // loop_header_branch
          %518 = sbr.rel (%p516) target = $region76
        $region73: #{blstm_forward.3} parent=68 // loop_body
          _
        $region74: #{blstm_forward.3} parent=68 // loop_footer
          %s519 = sadd.s32 1, %s515
        $region75: #{blstm_forward.3} parent=68 // loop_footer_branch
          %514 = sbr.rel target = $region71
        $region76: #{blstm_forward.3} parent=68 // loop_exit
          _
        %s522 = sshllo.u32 0, %s509
        loop: start=0, step=1, limit=1
        $region77: #{blstm_forward.3} parent=68 // loop_pre_header
          _
        $region78: #{blstm_forward.3} parent=68 // loop_header
          %s524 = sphi 0, %s528
          %p525 = scmp.ge.s32.totalorder %s524, 1
          %s529 = sphi %s511, %s511
          %s530 = sphi %s513, %s513
        $region79: #{blstm_forward.3} parent=68 // loop_header_branch
          %527 = sbr.rel (%p525) target = $region83
        $region80: #{blstm_forward.3} parent=68 // loop_body
          %v531 = vld [vmem:[%s529] sm:%s522]
          %532 = vst [vmem:[%s530] sm:%s522] %v531
          %v533 = vld [vmem:[%s529 + $0x10] sm:%s522]
          %534 = vst [vmem:[%s530 + $0x4] sm:%s522] %v533
          %v535 = vld [vmem:[%s529 + $0x4] sm:%s522]
          %536 = vst [vmem:[%s530 + $0x8] sm:%s522] %v535
          %v537 = vld [vmem:[%s529 + $0x14] sm:%s522]
          %538 = vst [vmem:[%s530 + $0xc] sm:%s522] %v537
          %v539 = vld [vmem:[%s529 + $0x8] sm:%s522]
          %540 = vst [vmem:[%s530 + $0x10] sm:%s522] %v539
          %v541 = vld [vmem:[%s529 + $0x18] sm:%s522]
          %542 = vst [vmem:[%s530 + $0x14] sm:%s522] %v541
          %v543 = vld [vmem:[%s529 + $0xc] sm:%s522]
          %544 = vst [vmem:[%s530 + $0x18] sm:%s522] %v543
          %v545 = vld [vmem:[%s529 + $0x1c] sm:%s522]
          %546 = vst [vmem:[%s530 + $0x1c] sm:%s522] %v545
          %v547 = vld [vmem:[%s529 + $0x20] sm:%s522]
          %548 = vst [vmem:[%s530 + $0x20] sm:%s522] %v547
          %v549 = vld [vmem:[%s529 + $0x30] sm:%s522]
          %550 = vst [vmem:[%s530 + $0x24] sm:%s522] %v549
          %v551 = vld [vmem:[%s529 + $0x24] sm:%s522]
          %552 = vst [vmem:[%s530 + $0x28] sm:%s522] %v551
          %v553 = vld [vmem:[%s529 + $0x34] sm:%s522]
          %554 = vst [vmem:[%s530 + $0x2c] sm:%s522] %v553
          %v555 = vld [vmem:[%s529 + $0x28] sm:%s522]
          %556 = vst [vmem:[%s530 + $0x30] sm:%s522] %v555
          %v557 = vld [vmem:[%s529 + $0x38] sm:%s522]
          %558 = vst [vmem:[%s530 + $0x34] sm:%s522] %v557
          %v559 = vld [vmem:[%s529 + $0x2c] sm:%s522]
          %560 = vst [vmem:[%s530 + $0x38] sm:%s522] %v559
          %v561 = vld [vmem:[%s529 + $0x3c] sm:%s522]
          %562 = vst [vmem:[%s530 + $0x3c] sm:%s522] %v561
          %v563 = vld [vmem:[%s529 + $0x40] sm:%s522]
          %564 = vst [vmem:[%s530 + $0x40] sm:%s522] %v563
          %v565 = vld [vmem:[%s529 + $0x50] sm:%s522]
          %566 = vst [vmem:[%s530 + $0x44] sm:%s522] %v565
          %v567 = vld [vmem:[%s529 + $0x44] sm:%s522]
          %568 = vst [vmem:[%s530 + $0x48] sm:%s522] %v567
          %v569 = vld [vmem:[%s529 + $0x54] sm:%s522]
          %570 = vst [vmem:[%s530 + $0x4c] sm:%s522] %v569
          %v571 = vld [vmem:[%s529 + $0x48] sm:%s522]
          %572 = vst [vmem:[%s530 + $0x50] sm:%s522] %v571
          %v573 = vld [vmem:[%s529 + $0x58] sm:%s522]
          %574 = vst [vmem:[%s530 + $0x54] sm:%s522] %v573
          %v575 = vld [vmem:[%s529 + $0x4c] sm:%s522]
          %576 = vst [vmem:[%s530 + $0x58] sm:%s522] %v575
          %v577 = vld [vmem:[%s529 + $0x5c] sm:%s522]
          %578 = vst [vmem:[%s530 + $0x5c] sm:%s522] %v577
          %v579 = vld [vmem:[%s529 + $0x60] sm:%s522]
          %580 = vst [vmem:[%s530 + $0x60] sm:%s522] %v579
          %v581 = vld [vmem:[%s529 + $0x70] sm:%s522]
          %582 = vst [vmem:[%s530 + $0x64] sm:%s522] %v581
          %v583 = vld [vmem:[%s529 + $0x64] sm:%s522]
          %584 = vst [vmem:[%s530 + $0x68] sm:%s522] %v583
          %v585 = vld [vmem:[%s529 + $0x74] sm:%s522]
          %586 = vst [vmem:[%s530 + $0x6c] sm:%s522] %v585
          %v587 = vld [vmem:[%s529 + $0x68] sm:%s522]
          %588 = vst [vmem:[%s530 + $0x70] sm:%s522] %v587
          %v589 = vld [vmem:[%s529 + $0x78] sm:%s522]
          %590 = vst [vmem:[%s530 + $0x74] sm:%s522] %v589
          %v591 = vld [vmem:[%s529 + $0x6c] sm:%s522]
          %592 = vst [vmem:[%s530 + $0x78] sm:%s522] %v591
          %v593 = vld [vmem:[%s529 + $0x7c] sm:%s522]
          %594 = vst [vmem:[%s530 + $0x7c] sm:%s522] %v593
          %v595 = vld [vmem:[%s529 + $0x80] sm:%s522]
          %596 = vst [vmem:[%s530 + $0x80] sm:%s522] %v595
          %v597 = vld [vmem:[%s529 + $0x90] sm:%s522]
          %598 = vst [vmem:[%s530 + $0x84] sm:%s522] %v597
          %v599 = vld [vmem:[%s529 + $0x84] sm:%s522]
          %600 = vst [vmem:[%s530 + $0x88] sm:%s522] %v599
          %v601 = vld [vmem:[%s529 + $0x94] sm:%s522]
          %602 = vst [vmem:[%s530 + $0x8c] sm:%s522] %v601
          %v603 = vld [vmem:[%s529 + $0x88] sm:%s522]
          %604 = vst [vmem:[%s530 + $0x90] sm:%s522] %v603
          %v605 = vld [vmem:[%s529 + $0x98] sm:%s522]
          %606 = vst [vmem:[%s530 + $0x94] sm:%s522] %v605
          %v607 = vld [vmem:[%s529 + $0x8c] sm:%s522]
          %608 = vst [vmem:[%s530 + $0x98] sm:%s522] %v607
          %v609 = vld [vmem:[%s529 + $0x9c] sm:%s522]
          %610 = vst [vmem:[%s530 + $0x9c] sm:%s522] %v609
          %v611 = vld [vmem:[%s529 + $0xa0] sm:%s522]
          %612 = vst [vmem:[%s530 + $0xa0] sm:%s522] %v611
          %v613 = vld [vmem:[%s529 + $0xb0] sm:%s522]
          %614 = vst [vmem:[%s530 + $0xa4] sm:%s522] %v613
          %v615 = vld [vmem:[%s529 + $0xa4] sm:%s522]
          %616 = vst [vmem:[%s530 + $0xa8] sm:%s522] %v615
          %v617 = vld [vmem:[%s529 + $0xb4] sm:%s522]
          %618 = vst [vmem:[%s530 + $0xac] sm:%s522] %v617
          %v619 = vld [vmem:[%s529 + $0xa8] sm:%s522]
          %620 = vst [vmem:[%s530 + $0xb0] sm:%s522] %v619
          %v621 = vld [vmem:[%s529 + $0xb8] sm:%s522]
          %622 = vst [vmem:[%s530 + $0xb4] sm:%s522] %v621
          %v623 = vld [vmem:[%s529 + $0xac] sm:%s522]
          %624 = vst [vmem:[%s530 + $0xb8] sm:%s522] %v623
          %v625 = vld [vmem:[%s529 + $0xbc] sm:%s522]
          %626 = vst [vmem:[%s530 + $0xbc] sm:%s522] %v625
          %v627 = vld [vmem:[%s529 + $0xc0] sm:%s522]
          %628 = vst [vmem:[%s530 + $0xc0] sm:%s522] %v627
          %v629 = vld [vmem:[%s529 + $0xd0] sm:%s522]
          %630 = vst [vmem:[%s530 + $0xc4] sm:%s522] %v629
          %v631 = vld [vmem:[%s529 + $0xc4] sm:%s522]
          %632 = vst [vmem:[%s530 + $0xc8] sm:%s522] %v631
          %v633 = vld [vmem:[%s529 + $0xd4] sm:%s522]
          %634 = vst [vmem:[%s530 + $0xcc] sm:%s522] %v633
          %v635 = vld [vmem:[%s529 + $0xc8] sm:%s522]
          %636 = vst [vmem:[%s530 + $0xd0] sm:%s522] %v635
          %v637 = vld [vmem:[%s529 + $0xd8] sm:%s522]
          %638 = vst [vmem:[%s530 + $0xd4] sm:%s522] %v637
          %v639 = vld [vmem:[%s529 + $0xcc] sm:%s522]
          %640 = vst [vmem:[%s530 + $0xd8] sm:%s522] %v639
          %v641 = vld [vmem:[%s529 + $0xdc] sm:%s522]
          %642 = vst [vmem:[%s530 + $0xdc] sm:%s522] %v641
          %v643 = vld [vmem:[%s529 + $0xe0] sm:%s522]
          %644 = vst [vmem:[%s530 + $0xe0] sm:%s522] %v643
          %v645 = vld [vmem:[%s529 + $0xf0] sm:%s522]
          %646 = vst [vmem:[%s530 + $0xe4] sm:%s522] %v645
          %v647 = vld [vmem:[%s529 + $0xe4] sm:%s522]
          %648 = vst [vmem:[%s530 + $0xe8] sm:%s522] %v647
          %v649 = vld [vmem:[%s529 + $0xf4] sm:%s522]
          %650 = vst [vmem:[%s530 + $0xec] sm:%s522] %v649
          %v651 = vld [vmem:[%s529 + $0xe8] sm:%s522]
          %652 = vst [vmem:[%s530 + $0xf0] sm:%s522] %v651
          %v653 = vld [vmem:[%s529 + $0xf8] sm:%s522]
          %654 = vst [vmem:[%s530 + $0xf4] sm:%s522] %v653
          %v655 = vld [vmem:[%s529 + $0xec] sm:%s522]
          %656 = vst [vmem:[%s530 + $0xf8] sm:%s522] %v655
          %v657 = vld [vmem:[%s529 + $0xfc] sm:%s522]
          %658 = vst [vmem:[%s530 + $0xfc] sm:%s522] %v657
        $region81: #{blstm_forward.3} parent=68 // loop_footer
          %s528 = sadd.s32 1, %s524
        $region82: #{blstm_forward.3} parent=68 // loop_footer_branch
          %523 = sbr.rel target = $region78
        $region83: #{blstm_forward.3} parent=68 // loop_exit
          _
      $region69: #{blstm_forward.3} parent=53 // pred_fallthru
        _
    $region54: #{blstm_forward.3} parent=12 // pred_fallthru
      _
    // Predicated region
    $region55: #{blstm_forward.3} parent=12 // pred_check
      %p364 = pneg %p360
    $region56: #{blstm_forward.3} parent=12 // pred_check_branch
      %366 = sbr.rel (%p364) target = $region58
    $region57: #{blstm_forward.3} parent=12 // pred_region
      %s367 = sshllo.u32 0, 4
      loop: start=0, step=1, limit=1
      $region59: #{blstm_forward.3} parent=57 // loop_pre_header
        _
      $region60: #{blstm_forward.3} parent=57 // loop_header
        %s369 = sphi 0, %s373
        %p370 = scmp.ge.s32.totalorder %s369, 1
        %s374 = sphi %s2, %s2
        %s375 = sphi [#allocation3], [#allocation3]
      $region61: #{blstm_forward.3} parent=57 // loop_header_branch
        %372 = sbr.rel (%p370) target = $region65
      $region62: #{blstm_forward.3} parent=57 // loop_body
        %v376 = vld [vmem:[%s374] sm:%s367]
        %377 = vst [vmem:[%s375] sm:%s367] %v376
        %v378 = vld [vmem:[%s374 + $0x10] sm:%s367]
        %379 = vst [vmem:[%s375 + $0x4] sm:%s367] %v378
        %v380 = vld [vmem:[%s374 + $0x4] sm:%s367]
        %381 = vst [vmem:[%s375 + $0x8] sm:%s367] %v380
        %v382 = vld [vmem:[%s374 + $0x14] sm:%s367]
        %383 = vst [vmem:[%s375 + $0xc] sm:%s367] %v382
        %v384 = vld [vmem:[%s374 + $0x8] sm:%s367]
        %385 = vst [vmem:[%s375 + $0x10] sm:%s367] %v384
        %v386 = vld [vmem:[%s374 + $0x18] sm:%s367]
        %387 = vst [vmem:[%s375 + $0x14] sm:%s367] %v386
        %v388 = vld [vmem:[%s374 + $0xc] sm:%s367]
        %389 = vst [vmem:[%s375 + $0x18] sm:%s367] %v388
        %v390 = vld [vmem:[%s374 + $0x1c] sm:%s367]
        %391 = vst [vmem:[%s375 + $0x1c] sm:%s367] %v390
        %v392 = vld [vmem:[%s374 + $0x20] sm:%s367]
        %393 = vst [vmem:[%s375 + $0x20] sm:%s367] %v392
        %v394 = vld [vmem:[%s374 + $0x30] sm:%s367]
        %395 = vst [vmem:[%s375 + $0x24] sm:%s367] %v394
        %v396 = vld [vmem:[%s374 + $0x24] sm:%s367]
        %397 = vst [vmem:[%s375 + $0x28] sm:%s367] %v396
        %v398 = vld [vmem:[%s374 + $0x34] sm:%s367]
        %399 = vst [vmem:[%s375 + $0x2c] sm:%s367] %v398
        %v400 = vld [vmem:[%s374 + $0x28] sm:%s367]
        %401 = vst [vmem:[%s375 + $0x30] sm:%s367] %v400
        %v402 = vld [vmem:[%s374 + $0x38] sm:%s367]
        %403 = vst [vmem:[%s375 + $0x34] sm:%s367] %v402
        %v404 = vld [vmem:[%s374 + $0x2c] sm:%s367]
        %405 = vst [vmem:[%s375 + $0x38] sm:%s367] %v404
        %v406 = vld [vmem:[%s374 + $0x3c] sm:%s367]
        %407 = vst [vmem:[%s375 + $0x3c] sm:%s367] %v406
        %v408 = vld [vmem:[%s374 + $0x40] sm:%s367]
        %409 = vst [vmem:[%s375 + $0x40] sm:%s367] %v408
        %v410 = vld [vmem:[%s374 + $0x50] sm:%s367]
        %411 = vst [vmem:[%s375 + $0x44] sm:%s367] %v410
        %v412 = vld [vmem:[%s374 + $0x44] sm:%s367]
        %413 = vst [vmem:[%s375 + $0x48] sm:%s367] %v412
        %v414 = vld [vmem:[%s374 + $0x54] sm:%s367]
        %415 = vst [vmem:[%s375 + $0x4c] sm:%s367] %v414
        %v416 = vld [vmem:[%s374 + $0x48] sm:%s367]
        %417 = vst [vmem:[%s375 + $0x50] sm:%s367] %v416
        %v418 = vld [vmem:[%s374 + $0x58] sm:%s367]
        %419 = vst [vmem:[%s375 + $0x54] sm:%s367] %v418
        %v420 = vld [vmem:[%s374 + $0x4c] sm:%s367]
        %421 = vst [vmem:[%s375 + $0x58] sm:%s367] %v420
        %v422 = vld [vmem:[%s374 + $0x5c] sm:%s367]
        %423 = vst [vmem:[%s375 + $0x5c] sm:%s367] %v422
        %v424 = vld [vmem:[%s374 + $0x60] sm:%s367]
        %425 = vst [vmem:[%s375 + $0x60] sm:%s367] %v424
        %v426 = vld [vmem:[%s374 + $0x70] sm:%s367]
        %427 = vst [vmem:[%s375 + $0x64] sm:%s367] %v426
        %v428 = vld [vmem:[%s374 + $0x64] sm:%s367]
        %429 = vst [vmem:[%s375 + $0x68] sm:%s367] %v428
        %v430 = vld [vmem:[%s374 + $0x74] sm:%s367]
        %431 = vst [vmem:[%s375 + $0x6c] sm:%s367] %v430
        %v432 = vld [vmem:[%s374 + $0x68] sm:%s367]
        %433 = vst [vmem:[%s375 + $0x70] sm:%s367] %v432
        %v434 = vld [vmem:[%s374 + $0x78] sm:%s367]
        %435 = vst [vmem:[%s375 + $0x74] sm:%s367] %v434
        %v436 = vld [vmem:[%s374 + $0x6c] sm:%s367]
        %437 = vst [vmem:[%s375 + $0x78] sm:%s367] %v436
        %v438 = vld [vmem:[%s374 + $0x7c] sm:%s367]
        %439 = vst [vmem:[%s375 + $0x7c] sm:%s367] %v438
        %v440 = vld [vmem:[%s374 + $0x80] sm:%s367]
        %441 = vst [vmem:[%s375 + $0x80] sm:%s367] %v440
        %v442 = vld [vmem:[%s374 + $0x90] sm:%s367]
        %443 = vst [vmem:[%s375 + $0x84] sm:%s367] %v442
        %v444 = vld [vmem:[%s374 + $0x84] sm:%s367]
        %445 = vst [vmem:[%s375 + $0x88] sm:%s367] %v444
        %v446 = vld [vmem:[%s374 + $0x94] sm:%s367]
        %447 = vst [vmem:[%s375 + $0x8c] sm:%s367] %v446
        %v448 = vld [vmem:[%s374 + $0x88] sm:%s367]
        %449 = vst [vmem:[%s375 + $0x90] sm:%s367] %v448
        %v450 = vld [vmem:[%s374 + $0x98] sm:%s367]
        %451 = vst [vmem:[%s375 + $0x94] sm:%s367] %v450
        %v452 = vld [vmem:[%s374 + $0x8c] sm:%s367]
        %453 = vst [vmem:[%s375 + $0x98] sm:%s367] %v452
        %v454 = vld [vmem:[%s374 + $0x9c] sm:%s367]
        %455 = vst [vmem:[%s375 + $0x9c] sm:%s367] %v454
        %v456 = vld [vmem:[%s374 + $0xa0] sm:%s367]
        %457 = vst [vmem:[%s375 + $0xa0] sm:%s367] %v456
        %v458 = vld [vmem:[%s374 + $0xb0] sm:%s367]
        %459 = vst [vmem:[%s375 + $0xa4] sm:%s367] %v458
        %v460 = vld [vmem:[%s374 + $0xa4] sm:%s367]
        %461 = vst [vmem:[%s375 + $0xa8] sm:%s367] %v460
        %v462 = vld [vmem:[%s374 + $0xb4] sm:%s367]
        %463 = vst [vmem:[%s375 + $0xac] sm:%s367] %v462
        %v464 = vld [vmem:[%s374 + $0xa8] sm:%s367]
        %465 = vst [vmem:[%s375 + $0xb0] sm:%s367] %v464
        %v466 = vld [vmem:[%s374 + $0xb8] sm:%s367]
        %467 = vst [vmem:[%s375 + $0xb4] sm:%s367] %v466
        %v468 = vld [vmem:[%s374 + $0xac] sm:%s367]
        %469 = vst [vmem:[%s375 + $0xb8] sm:%s367] %v468
        %v470 = vld [vmem:[%s374 + $0xbc] sm:%s367]
        %471 = vst [vmem:[%s375 + $0xbc] sm:%s367] %v470
        %v472 = vld [vmem:[%s374 + $0xc0] sm:%s367]
        %473 = vst [vmem:[%s375 + $0xc0] sm:%s367] %v472
        %v474 = vld [vmem:[%s374 + $0xd0] sm:%s367]
        %475 = vst [vmem:[%s375 + $0xc4] sm:%s367] %v474
        %v476 = vld [vmem:[%s374 + $0xc4] sm:%s367]
        %477 = vst [vmem:[%s375 + $0xc8] sm:%s367] %v476
        %v478 = vld [vmem:[%s374 + $0xd4] sm:%s367]
        %479 = vst [vmem:[%s375 + $0xcc] sm:%s367] %v478
        %v480 = vld [vmem:[%s374 + $0xc8] sm:%s367]
        %481 = vst [vmem:[%s375 + $0xd0] sm:%s367] %v480
        %v482 = vld [vmem:[%s374 + $0xd8] sm:%s367]
        %483 = vst [vmem:[%s375 + $0xd4] sm:%s367] %v482
        %v484 = vld [vmem:[%s374 + $0xcc] sm:%s367]
        %485 = vst [vmem:[%s375 + $0xd8] sm:%s367] %v484
        %v486 = vld [vmem:[%s374 + $0xdc] sm:%s367]
        %487 = vst [vmem:[%s375 + $0xdc] sm:%s367] %v486
        %v488 = vld [vmem:[%s374 + $0xe0] sm:%s367]
        %489 = vst [vmem:[%s375 + $0xe0] sm:%s367] %v488
        %v490 = vld [vmem:[%s374 + $0xf0] sm:%s367]
        %491 = vst [vmem:[%s375 + $0xe4] sm:%s367] %v490
        %v492 = vld [vmem:[%s374 + $0xe4] sm:%s367]
        %493 = vst [vmem:[%s375 + $0xe8] sm:%s367] %v492
        %v494 = vld [vmem:[%s374 + $0xf4] sm:%s367]
        %495 = vst [vmem:[%s375 + $0xec] sm:%s367] %v494
        %v496 = vld [vmem:[%s374 + $0xe8] sm:%s367]
        %497 = vst [vmem:[%s375 + $0xf0] sm:%s367] %v496
        %v498 = vld [vmem:[%s374 + $0xf8] sm:%s367]
        %499 = vst [vmem:[%s375 + $0xf4] sm:%s367] %v498
        %v500 = vld [vmem:[%s374 + $0xec] sm:%s367]
        %501 = vst [vmem:[%s375 + $0xf8] sm:%s367] %v500
        %v502 = vld [vmem:[%s374 + $0xfc] sm:%s367]
        %503 = vst [vmem:[%s375 + $0xfc] sm:%s367] %v502
      $region63: #{blstm_forward.3} parent=57 // loop_footer
        %s373 = sadd.s32 1, %s369
      $region64: #{blstm_forward.3} parent=57 // loop_footer_branch
        %368 = sbr.rel target = $region60
      $region65: #{blstm_forward.3} parent=57 // loop_exit
        _
    $region58: #{blstm_forward.3} parent=12 // pred_fallthru
      _
    // Predicated region
    $region84: #{blstm_forward.3} parent=12 // pred_check
      _
    $region85: #{blstm_forward.3} parent=12 // pred_check_branch
      %661 = sbr.rel (0) target = $region87
    $region86: #{blstm_forward.3} parent=12 // pred_region
      %662 = vsyncadd %s358, 4096
    $region87: #{blstm_forward.3} parent=12 // pred_fallthru
      _
    %663 = vst [vmem:[#allocation5] sm:$0xff] 0
    %664 = vst [vmem:[#allocation6] sm:$0xff] 0.0
    %665 = vst [vmem:[#allocation6 + $0x8] sm:$0xff] 0.0
    %s666 = smul.u32 4, 16
    %s667 = smul.u32 %s666, 4
    %s668 = sshll.u32 %s667, 4
    %669 = dma.done [#allocation7], %s668
    %s670 = sshll.u32 %s667, 4
    %671 = dma.done %s358, %s670
  $region13: #{blstm_forward.3} parent=0 // pred_fallthru
    _
  %v672 = vld [vmem:[%s38] sm:$0xf]
  %v673 = vld [vmem:[%s38 + $0x4] sm:$0xf]
  %v674 = vld [vmem:[%s38 + $0x8] sm:$0xf]
  %v675 = vld [vmem:[%s38 + $0xc] sm:$0xf]
  %v676 = vld [vmem:[%s38 + $0x10] sm:$0xf]
  %v677 = vld [vmem:[%s38 + $0x14] sm:$0xf]
  %v678 = vld [vmem:[%s38 + $0x18] sm:$0xf]
  %v679 = vld [vmem:[%s38 + $0x1c] sm:$0xf]
  %v680 = vld [vmem:[%s38 + $0x20] sm:$0xf]
  %v681 = vld [vmem:[%s38 + $0x24] sm:$0xf]
  %v682 = vld [vmem:[%s38 + $0x28] sm:$0xf]
  %v683 = vld [vmem:[%s38 + $0x2c] sm:$0xf]
  %v684 = vld [vmem:[%s38 + $0x30] sm:$0xf]
  %v685 = vld [vmem:[%s38 + $0x34] sm:$0xf]
  %v686 = vld [vmem:[%s38 + $0x38] sm:$0xf]
  %v687 = vld [vmem:[%s38 + $0x3c] sm:$0xf]
  %v688 = vld [vmem:[#allocation2] sm:$0xff]
  %v689 = vld [vmem:[#allocation2 + $0x8] sm:$0xff]
  %v690 = vld [vmem:[#allocation2 + $0x10] sm:$0xff]
  %v691 = vld [vmem:[#allocation2 + $0x18] sm:$0xff]
  %v692 = vld [vmem:[#allocation2 + $0x20] sm:$0xff]
  %v693 = vld [vmem:[#allocation2 + $0x28] sm:$0xff]
  %v694 = vld [vmem:[#allocation2 + $0x30] sm:$0xff]
  %v695 = vld [vmem:[#allocation2 + $0x38] sm:$0xff]
  %v696 = vld [vmem:[#allocation2 + $0x40] sm:$0xff]
  %v697 = vld [vmem:[#allocation2 + $0x48] sm:$0xff]
  %v698 = vld [vmem:[#allocation2 + $0x50] sm:$0xff]
  %v699 = vld [vmem:[#allocation2 + $0x58] sm:$0xff]
  %v700 = vld [vmem:[#allocation2 + $0x60] sm:$0xff]
  %v701 = vld [vmem:[#allocation2 + $0x68] sm:$0xff]
  %v702 = vld [vmem:[#allocation2 + $0x70] sm:$0xff]
  %v703 = vld [vmem:[#allocation2 + $0x78] sm:$0xff]
  %v704 = vld [vmem:[#allocation2 + $0x80] sm:$0xff]
  %v705 = vld [vmem:[#allocation2 + $0x88] sm:$0xff]
  %v706 = vld [vmem:[#allocation2 + $0x90] sm:$0xff]
  %v707 = vld [vmem:[#allocation2 + $0x98] sm:$0xff]
  %v708 = vld [vmem:[#allocation2 + $0xa0] sm:$0xff]
  %v709 = vld [vmem:[#allocation2 + $0xa8] sm:$0xff]
  %v710 = vld [vmem:[#allocation2 + $0xb0] sm:$0xff]
  %v711 = vld [vmem:[#allocation2 + $0xb8] sm:$0xff]
  %v712 = vld [vmem:[#allocation2 + $0xc0] sm:$0xff]
  %v713 = vld [vmem:[#allocation2 + $0xc8] sm:$0xff]
  %v714 = vld [vmem:[#allocation2 + $0xd0] sm:$0xff]
  %v715 = vld [vmem:[#allocation2 + $0xd8] sm:$0xff]
  %v716 = vld [vmem:[#allocation2 + $0xe0] sm:$0xff]
  %v717 = vld [vmem:[#allocation2 + $0xe8] sm:$0xff]
  %v718 = vld [vmem:[#allocation2 + $0xf0] sm:$0xff]
  %v719 = vld [vmem:[#allocation2 + $0xf8] sm:$0xff]
  %v720 = vld [vmem:[%s3] sm:$0xf]
  %v722 = vlaneseq
  %v723 = vshrl.u32 %v722, 7
  %v724 = vsub.s32 0, %v723
  %v725 = vrot.slane %v720, %v724
  %v726 = vlaneseq
  %v727 = vshrl.u32 %v726, 7
  %v728 = vsub.s32 1, %v727
  %v729 = vrot.slane %v720, %v728
  %v730 = vlaneseq
  %v731 = vshrl.u32 %v730, 7
  %v732 = vsub.s32 2, %v731
  %v733 = vrot.slane %v720, %v732
  %v734 = vlaneseq
  %v735 = vshrl.u32 %v734, 7
  %v736 = vsub.s32 3, %v735
  %v737 = vrot.slane %v720, %v736
  %v758 = vunpack.c.l.b16 %v672
  %v759 = vunpack.c.l.b16 %v673
  %v760 = vunpack.c.l.b16 %v674
  %v761 = vunpack.c.l.b16 %v675
  %v762 = vunpack.c.l.b16 %v676
  %v763 = vunpack.c.l.b16 %v677
  %v764 = vunpack.c.l.b16 %v678
  %v765 = vunpack.c.l.b16 %v679
  %v766 = vunpack.c.l.b16 %v680
  %v767 = vunpack.c.l.b16 %v681
  %v768 = vunpack.c.l.b16 %v682
  %v769 = vunpack.c.l.b16 %v683
  %v770 = vunpack.c.l.b16 %v684
  %v771 = vunpack.c.l.b16 %v685
  %v772 = vunpack.c.l.b16 %v686
  %v773 = vunpack.c.l.b16 %v687
  %v774 = vpack.c.b16 %v759, %v758
  %v775 = vpack.c.b16 %v761, %v760
  %v776 = vpack.c.b16 %v763, %v762
  %v777 = vpack.c.b16 %v765, %v764
  %v778 = vpack.c.b16 %v767, %v766
  %v779 = vpack.c.b16 %v769, %v768
  %v780 = vpack.c.b16 %v771, %v770
  %v781 = vpack.c.b16 %v773, %v772
  %790 = vmatprep.subr.bf16.mxu0 %v689
  %791 = vmatpush1.bf16.msra.mxu0 %v688
  %792 = vmatprep.subr.bf16.mxu0 %v693
  %793 = vmatpush1.bf16.msra.mxu0 %v692
  %794 = vmatprep.subr.bf16.mxu0 %v697
  %795 = vmatpush1.bf16.msra.mxu0 %v696
  %796 = vmatprep.subr.bf16.mxu0 %v701
  %797 = vmatpush1.bf16.msra.mxu0 %v700
  %798 = vmatprep.subr.bf16.mxu0 %v705
  %799 = vmatpush1.bf16.msra.mxu0 %v704
  %800 = vmatprep.subr.bf16.mxu0 %v709
  %801 = vmatpush1.bf16.msra.mxu0 %v708
  %802 = vmatprep.subr.bf16.mxu0 %v713
  %803 = vmatpush1.bf16.msra.mxu0 %v712
  %804 = vmatprep.subr.bf16.mxu0 %v717
  %805 = vmatpush1.bf16.msra.mxu0 %v716
  %806 = vmatprep.subr.bf16.mxu0 0
  %807 = vmatpush1.bf16.msra.mxu0 0
  %808 = vmatprep.subr.bf16.mxu0 0
  %809 = vmatpush1.bf16.msra.mxu0 0
  %810 = vmatprep.subr.bf16.mxu0 0
  %811 = vmatpush1.bf16.msra.mxu0 0
  %812 = vmatprep.subr.bf16.mxu0 0
  %813 = vmatpush1.bf16.msra.mxu0 0
  %814 = vmatprep.subr.bf16.mxu0 0
  %815 = vmatpush1.bf16.msra.mxu0 0
  %816 = vmatprep.subr.bf16.mxu0 0
  %817 = vmatpush1.bf16.msra.mxu0 0
  %818 = vmatprep.subr.bf16.mxu0 0
  %819 = vmatpush1.bf16.msra.mxu0 0
  %820 = vmatprep.subr.bf16.mxu0 0
  %821 = vmatpush1.bf16.msra.mxu0 0
  %822 = vmatprep.mubr.bf16.mxu0 0
  %823 = vmatmul.mubr.bf16.gmra.mrb[0].mxu0 %v774
  %v824 = vpop.f32.mrb[0].mxu0
  %v825 = vadd.f32 %v725, %v824
  %v826 = vpop.f32.mrb[0].mxu0
  %v827 = vadd.f32 %v729, %v826
  %v828 = vpop.f32.mrb[0].mxu0
  %v829 = vadd.f32 %v725, %v828
  %v830 = vpop.f32.mrb[0].mxu0
  %v831 = vadd.f32 %v729, %v830
  %832 = vmatprep.mubr.bf16.mxu0 0
  %833 = vmatmul.mubr.bf16.gmra.mrb[0].mxu0 %v775
  %v834 = vpop.f32.mrb[0].mxu0
  %v835 = vadd.f32 %v725, %v834
  %v836 = vpop.f32.mrb[0].mxu0
  %v837 = vadd.f32 %v729, %v836
  %v838 = vpop.f32.mrb[0].mxu0
  %v839 = vadd.f32 %v725, %v838
  %v840 = vpop.f32.mrb[0].mxu0
  %v841 = vadd.f32 %v729, %v840
  %842 = vmatprep.mubr.bf16.mxu0 0
  %843 = vmatmul.mubr.bf16.gmra.mrb[0].mxu0 %v776
  %v844 = vpop.f32.mrb[0].mxu0
  %v845 = vadd.f32 %v725, %v844
  %v846 = vpop.f32.mrb[0].mxu0
  %v847 = vadd.f32 %v729, %v846
  %v848 = vpop.f32.mrb[0].mxu0
  %v849 = vadd.f32 %v725, %v848
  %v850 = vpop.f32.mrb[0].mxu0
  %v851 = vadd.f32 %v729, %v850
  %852 = vmatprep.mubr.bf16.mxu0 0
  %853 = vmatmul.mubr.bf16.gmra.mrb[0].mxu0 %v777
  %v854 = vpop.f32.mrb[0].mxu0
  %v855 = vadd.f32 %v725, %v854
  %v856 = vpop.f32.mrb[0].mxu0
  %v857 = vadd.f32 %v729, %v856
  %v858 = vpop.f32.mrb[0].mxu0
  %v859 = vadd.f32 %v725, %v858
  %v860 = vpop.f32.mrb[0].mxu0
  %v861 = vadd.f32 %v729, %v860
  %862 = vmatprep.mubr.bf16.mxu0 0
  %863 = vmatmul.mubr.bf16.gmra.mrb[0].mxu0 %v778
  %v864 = vpop.f32.mrb[0].mxu0
  %v865 = vadd.f32 %v725, %v864
  %v866 = vpop.f32.mrb[0].mxu0
  %v867 = vadd.f32 %v729, %v866
  %v868 = vpop.f32.mrb[0].mxu0
  %v869 = vadd.f32 %v725, %v868
  %v870 = vpop.f32.mrb[0].mxu0
  %v871 = vadd.f32 %v729, %v870
  %872 = vmatprep.mubr.bf16.mxu0 0
  %873 = vmatmul.mubr.bf16.gmra.mrb[0].mxu0 %v779
  %v874 = vpop.f32.mrb[0].mxu0
  %v875 = vadd.f32 %v725, %v874
  %v876 = vpop.f32.mrb[0].mxu0
  %v877 = vadd.f32 %v729, %v876
  %v878 = vpop.f32.mrb[0].mxu0
  %v879 = vadd.f32 %v725, %v878
  %v880 = vpop.f32.mrb[0].mxu0
  %v881 = vadd.f32 %v729, %v880
  %882 = vmatprep.mubr.bf16.mxu0 0
  %883 = vmatmul.mubr.bf16.gmra.mrb[0].mxu0 %v780
  %v884 = vpop.f32.mrb[0].mxu0
  %v885 = vadd.f32 %v725, %v884
  %v886 = vpop.f32.mrb[0].mxu0
  %v887 = vadd.f32 %v729, %v886
  %v888 = vpop.f32.mrb[0].mxu0
  %v889 = vadd.f32 %v725, %v888
  %v890 = vpop.f32.mrb[0].mxu0
  %v891 = vadd.f32 %v729, %v890
  %892 = vmatprep.mubr.bf16.mxu0 0
  %893 = vmatmul.mubr.bf16.gmra.mrb[0].mxu0 %v781
  %v894 = vpop.f32.mrb[0].mxu0
  %v895 = vadd.f32 %v725, %v894
  %v896 = vpop.f32.mrb[0].mxu0
  %v897 = vadd.f32 %v729, %v896
  %v898 = vpop.f32.mrb[0].mxu0
  %v899 = vadd.f32 %v725, %v898
  %v900 = vpop.f32.mrb[0].mxu0
  %v901 = vadd.f32 %v729, %v900
  %902 = vdwg.mxu0
  %903 = vmatprep.subr.bf16.mxu0 %v691
  %904 = vmatpush1.bf16.msra.mxu0 %v690
  %905 = vmatprep.subr.bf16.mxu0 %v695
  %906 = vmatpush1.bf16.msra.mxu0 %v694
  %907 = vmatprep.subr.bf16.mxu0 %v699
  %908 = vmatpush1.bf16.msra.mxu0 %v698
  %909 = vmatprep.subr.bf16.mxu0 %v703
  %910 = vmatpush1.bf16.msra.mxu0 %v702
  %911 = vmatprep.subr.bf16.mxu0 %v707
  %912 = vmatpush1.bf16.msra.mxu0 %v706
  %913 = vmatprep.subr.bf16.mxu0 %v711
  %914 = vmatpush1.bf16.msra.mxu0 %v710
  %915 = vmatprep.subr.bf16.mxu0 %v715
  %916 = vmatpush1.bf16.msra.mxu0 %v714
  %917 = vmatprep.subr.bf16.mxu0 %v719
  %918 = vmatpush1.bf16.msra.mxu0 %v718
  %919 = vmatprep.subr.bf16.mxu0 0
  %920 = vmatpush1.bf16.msra.mxu0 0
  %921 = vmatprep.subr.bf16.mxu0 0
  %922 = vmatpush1.bf16.msra.mxu0 0
  %923 = vmatprep.subr.bf16.mxu0 0
  %924 = vmatpush1.bf16.msra.mxu0 0
  %925 = vmatprep.subr.bf16.mxu0 0
  %926 = vmatpush1.bf16.msra.mxu0 0
  %927 = vmatprep.subr.bf16.mxu0 0
  %928 = vmatpush1.bf16.msra.mxu0 0
  %929 = vmatprep.subr.bf16.mxu0 0
  %930 = vmatpush1.bf16.msra.mxu0 0
  %931 = vmatprep.subr.bf16.mxu0 0
  %932 = vmatpush1.bf16.msra.mxu0 0
  %933 = vmatprep.subr.bf16.mxu0 0
  %934 = vmatpush1.bf16.msra.mxu0 0
  %935 = vmatprep.mubr.bf16.mxu0 0
  %936 = vmatmul.mubr.bf16.gmra.mrb[0].mxu0 %v774
  %v937 = vpop.f32.mrb[0].mxu0
  %v938 = vadd.f32 %v733, %v937
  %v939 = vpop.f32.mrb[0].mxu0
  %v940 = vadd.f32 %v737, %v939
  %v941 = vpop.f32.mrb[0].mxu0
  %v942 = vadd.f32 %v733, %v941
  %v943 = vpop.f32.mrb[0].mxu0
  %v944 = vadd.f32 %v737, %v943
  %945 = vmatprep.mubr.bf16.mxu0 0
  %946 = vmatmul.mubr.bf16.gmra.mrb[0].mxu0 %v775
  %v947 = vpop.f32.mrb[0].mxu0
  %v948 = vadd.f32 %v733, %v947
  %v949 = vpop.f32.mrb[0].mxu0
  %v950 = vadd.f32 %v737, %v949
  %v951 = vpop.f32.mrb[0].mxu0
  %v952 = vadd.f32 %v733, %v951
  %v953 = vpop.f32.mrb[0].mxu0
  %v954 = vadd.f32 %v737, %v953
  %955 = vmatprep.mubr.bf16.mxu0 0
  %956 = vmatmul.mubr.bf16.gmra.mrb[0].mxu0 %v776
  %v957 = vpop.f32.mrb[0].mxu0
  %v958 = vadd.f32 %v733, %v957
  %v959 = vpop.f32.mrb[0].mxu0
  %v960 = vadd.f32 %v737, %v959
  %v961 = vpop.f32.mrb[0].mxu0
  %v962 = vadd.f32 %v733, %v961
  %v963 = vpop.f32.mrb[0].mxu0
  %v964 = vadd.f32 %v737, %v963
  %965 = vmatprep.mubr.bf16.mxu0 0
  %966 = vmatmul.mubr.bf16.gmra.mrb[0].mxu0 %v777
  %v967 = vpop.f32.mrb[0].mxu0
  %v968 = vadd.f32 %v733, %v967
  %v969 = vpop.f32.mrb[0].mxu0
  %v970 = vadd.f32 %v737, %v969
  %v971 = vpop.f32.mrb[0].mxu0
  %v972 = vadd.f32 %v733, %v971
  %v973 = vpop.f32.mrb[0].mxu0
  %v974 = vadd.f32 %v737, %v973
  %975 = vmatprep.mubr.bf16.mxu0 0
  %976 = vmatmul.mubr.bf16.gmra.mrb[0].mxu0 %v778
  %v977 = vpop.f32.mrb[0].mxu0
  %v978 = vadd.f32 %v733, %v977
  %v979 = vpop.f32.mrb[0].mxu0
  %v980 = vadd.f32 %v737, %v979
  %v981 = vpop.f32.mrb[0].mxu0
  %v982 = vadd.f32 %v733, %v981
  %v983 = vpop.f32.mrb[0].mxu0
  %v984 = vadd.f32 %v737, %v983
  %985 = vmatprep.mubr.bf16.mxu0 0
  %986 = vmatmul.mubr.bf16.gmra.mrb[0].mxu0 %v779
  %v987 = vpop.f32.mrb[0].mxu0
  %v988 = vadd.f32 %v733, %v987
  %v989 = vpop.f32.mrb[0].mxu0
  %v990 = vadd.f32 %v737, %v989
  %v991 = vpop.f32.mrb[0].mxu0
  %v992 = vadd.f32 %v733, %v991
  %v993 = vpop.f32.mrb[0].mxu0
  %v994 = vadd.f32 %v737, %v993
  %995 = vmatprep.mubr.bf16.mxu0 0
  %996 = vmatmul.mubr.bf16.gmra.mrb[0].mxu0 %v780
  %v997 = vpop.f32.mrb[0].mxu0
  %v998 = vadd.f32 %v733, %v997
  %v999 = vpop.f32.mrb[0].mxu0
  %v1000 = vadd.f32 %v737, %v999
  %v1001 = vpop.f32.mrb[0].mxu0
  %v1002 = vadd.f32 %v733, %v1001
  %v1003 = vpop.f32.mrb[0].mxu0
  %v1004 = vadd.f32 %v737, %v1003
  %1005 = vmatprep.mubr.bf16.mxu0 0
  %1006 = vmatmul.mubr.bf16.gmra.mrb[0].mxu0 %v781
  %v1007 = vpop.f32.mrb[0].mxu0
  %v1008 = vadd.f32 %v733, %v1007
  %v1009 = vpop.f32.mrb[0].mxu0
  %v1010 = vadd.f32 %v737, %v1009
  %v1011 = vpop.f32.mrb[0].mxu0
  %v1012 = vadd.f32 %v733, %v1011
  %v1013 = vpop.f32.mrb[0].mxu0
  %v1014 = vadd.f32 %v737, %v1013
  %1015 = vdwg.mxu0
  %1016 = vst [vmem:[#allocation4] sm:$0xff] %v825
  %1017 = vst [vmem:[#allocation4 + $0x8] sm:$0xff] %v827
  %1018 = vst [vmem:[#allocation4 + $0x10] sm:$0xff] %v938
  %1019 = vst [vmem:[#allocation4 + $0x18] sm:$0xff] %v940
  %1020 = vst [vmem:[#allocation4 + $0x20] sm:$0xff] %v829
  %1021 = vst [vmem:[#allocation4 + $0x28] sm:$0xff] %v831
  %1022 = vst [vmem:[#allocation4 + $0x30] sm:$0xff] %v942
  %1023 = vst [vmem:[#allocation4 + $0x38] sm:$0xff] %v944
  %1024 = vst [vmem:[#allocation4 + $0x40] sm:$0xff] %v835
  %1025 = vst [vmem:[#allocation4 + $0x48] sm:$0xff] %v837
  %1026 = vst [vmem:[#allocation4 + $0x50] sm:$0xff] %v948
  %1027 = vst [vmem:[#allocation4 + $0x58] sm:$0xff] %v950
  %1028 = vst [vmem:[#allocation4 + $0x60] sm:$0xff] %v839
  %1029 = vst [vmem:[#allocation4 + $0x68] sm:$0xff] %v841
  %1030 = vst [vmem:[#allocation4 + $0x70] sm:$0xff] %v952
  %1031 = vst [vmem:[#allocation4 + $0x78] sm:$0xff] %v954
  %1032 = vst [vmem:[#allocation4 + $0x80] sm:$0xff] %v845
  %1033 = vst [vmem:[#allocation4 + $0x88] sm:$0xff] %v847
  %1034 = vst [vmem:[#allocation4 + $0x90] sm:$0xff] %v958
  %1035 = vst [vmem:[#allocation4 + $0x98] sm:$0xff] %v960
  %1036 = vst [vmem:[#allocation4 + $0xa0] sm:$0xff] %v849
  %1037 = vst [vmem:[#allocation4 + $0xa8] sm:$0xff] %v851
  %1038 = vst [vmem:[#allocation4 + $0xb0] sm:$0xff] %v962
  %1039 = vst [vmem:[#allocation4 + $0xb8] sm:$0xff] %v964
  %1040 = vst [vmem:[#allocation4 + $0xc0] sm:$0xff] %v855
  %1041 = vst [vmem:[#allocation4 + $0xc8] sm:$0xff] %v857
  %1042 = vst [vmem:[#allocation4 + $0xd0] sm:$0xff] %v968
  %1043 = vst [vmem:[#allocation4 + $0xd8] sm:$0xff] %v970
  %1044 = vst [vmem:[#allocation4 + $0xe0] sm:$0xff] %v859
  %1045 = vst [vmem:[#allocation4 + $0xe8] sm:$0xff] %v861
  %1046 = vst [vmem:[#allocation4 + $0xf0] sm:$0xff] %v972
  %1047 = vst [vmem:[#allocation4 + $0xf8] sm:$0xff] %v974
  %1048 = vst [vmem:[#allocation4 + $0x100] sm:$0xff] %v865
  %1049 = vst [vmem:[#allocation4 + $0x108] sm:$0xff] %v867
  %1050 = vst [vmem:[#allocation4 + $0x110] sm:$0xff] %v978
  %1051 = vst [vmem:[#allocation4 + $0x118] sm:$0xff] %v980
  %1052 = vst [vmem:[#allocation4 + $0x120] sm:$0xff] %v869
  %1053 = vst [vmem:[#allocation4 + $0x128] sm:$0xff] %v871
  %1054 = vst [vmem:[#allocation4 + $0x130] sm:$0xff] %v982
  %1055 = vst [vmem:[#allocation4 + $0x138] sm:$0xff] %v984
  %1056 = vst [vmem:[#allocation4 + $0x140] sm:$0xff] %v875
  %1057 = vst [vmem:[#allocation4 + $0x148] sm:$0xff] %v877
  %1058 = vst [vmem:[#allocation4 + $0x150] sm:$0xff] %v988
  %1059 = vst [vmem:[#allocation4 + $0x158] sm:$0xff] %v990
  %1060 = vst [vmem:[#allocation4 + $0x160] sm:$0xff] %v879
  %1061 = vst [vmem:[#allocation4 + $0x168] sm:$0xff] %v881
  %1062 = vst [vmem:[#allocation4 + $0x170] sm:$0xff] %v992
  %1063 = vst [vmem:[#allocation4 + $0x178] sm:$0xff] %v994
  %1064 = vst [vmem:[#allocation4 + $0x180] sm:$0xff] %v885
  %1065 = vst [vmem:[#allocation4 + $0x188] sm:$0xff] %v887
  %1066 = vst [vmem:[#allocation4 + $0x190] sm:$0xff] %v998
  %1067 = vst [vmem:[#allocation4 + $0x198] sm:$0xff] %v1000
  %1068 = vst [vmem:[#allocation4 + $0x1a0] sm:$0xff] %v889
  %1069 = vst [vmem:[#allocation4 + $0x1a8] sm:$0xff] %v891
  %1070 = vst [vmem:[#allocation4 + $0x1b0] sm:$0xff] %v1002
  %1071 = vst [vmem:[#allocation4 + $0x1b8] sm:$0xff] %v1004
  %1072 = vst [vmem:[#allocation4 + $0x1c0] sm:$0xff] %v895
  %1073 = vst [vmem:[#allocation4 + $0x1c8] sm:$0xff] %v897
  %1074 = vst [vmem:[#allocation4 + $0x1d0] sm:$0xff] %v1008
  %1075 = vst [vmem:[#allocation4 + $0x1d8] sm:$0xff] %v1010
  %1076 = vst [vmem:[#allocation4 + $0x1e0] sm:$0xff] %v899
  %1077 = vst [vmem:[#allocation4 + $0x1e8] sm:$0xff] %v901
  %1078 = vst [vmem:[#allocation4 + $0x1f0] sm:$0xff] %v1012
  %1079 = vst [vmem:[#allocation4 + $0x1f8] sm:$0xff] %v1014
  loop: start=0, step=1, limit=8
  $region88: #{blstm_forward.3} parent=0 // loop_pre_header
    _
  $region89: #{blstm_forward.3} parent=0 // loop_header
    %s1081 = sphi 0, %s1085
    %p1082 = scmp.ge.s32.totalorder %s1081, 8
  $region90: #{blstm_forward.3} parent=0 // loop_header_branch
    %1084 = sbr.rel (%p1082) target = $region94
  $region91: #{blstm_forward.3} parent=0 // loop_body
    %s1086 = ssub.s32 7, %s1081
    %s1087 = smul.u32 %s1086, 16
    %s1088 = sshra.s32 %s1087, 3
    %s1089 = sand.u32 %s1087, 7
    %s1090 = smul.u32 %s1088, 4
    %s1091 = smul.addr %s1090, 8
    %s1092 = scalar_lea.vmem [#allocation4], %s1091
    %v1093 = vld [vmem:[%s1092] sm:$0xff]
    %v1094 = vld [vmem:[%s1092 + $0x8] sm:$0xff]
    %v1095 = vld [vmem:[%s1092 + $0x10] sm:$0xff]
    %v1096 = vld [vmem:[%s1092 + $0x18] sm:$0xff]
    %v1097 = vld [vmem:[%s1092 + $0x20] sm:$0xff]
    %v1098 = vld [vmem:[%s1092 + $0x28] sm:$0xff]
    %v1099 = vld [vmem:[%s1092 + $0x30] sm:$0xff]
    %v1100 = vld [vmem:[%s1092 + $0x38] sm:$0xff]
    %v1101 = vld [vmem:[#allocation5] sm:$0xff]
    %v1102 = vld [vmem:[#allocation3] sm:$0xff]
    %v1103 = vld [vmem:[#allocation3 + $0x8] sm:$0xff]
    %v1104 = vld [vmem:[#allocation3 + $0x10] sm:$0xff]
    %v1105 = vld [vmem:[#allocation3 + $0x18] sm:$0xff]
    %v1106 = vld [vmem:[#allocation3 + $0x20] sm:$0xff]
    %v1107 = vld [vmem:[#allocation3 + $0x28] sm:$0xff]
    %v1108 = vld [vmem:[#allocation3 + $0x30] sm:$0xff]
    %v1109 = vld [vmem:[#allocation3 + $0x38] sm:$0xff]
    %v1110 = vld [vmem:[#allocation3 + $0x40] sm:$0xff]
    %v1111 = vld [vmem:[#allocation3 + $0x48] sm:$0xff]
    %v1112 = vld [vmem:[#allocation3 + $0x50] sm:$0xff]
    %v1113 = vld [vmem:[#allocation3 + $0x58] sm:$0xff]
    %v1114 = vld [vmem:[#allocation3 + $0x60] sm:$0xff]
    %v1115 = vld [vmem:[#allocation3 + $0x68] sm:$0xff]
    %v1116 = vld [vmem:[#allocation3 + $0x70] sm:$0xff]
    %v1117 = vld [vmem:[#allocation3 + $0x78] sm:$0xff]
    %v1118 = vld [vmem:[#allocation3 + $0x80] sm:$0xff]
    %v1119 = vld [vmem:[#allocation3 + $0x88] sm:$0xff]
    %v1120 = vld [vmem:[#allocation3 + $0x90] sm:$0xff]
    %v1121 = vld [vmem:[#allocation3 + $0x98] sm:$0xff]
    %v1122 = vld [vmem:[#allocation3 + $0xa0] sm:$0xff]
    %v1123 = vld [vmem:[#allocation3 + $0xa8] sm:$0xff]
    %v1124 = vld [vmem:[#allocation3 + $0xb0] sm:$0xff]
    %v1125 = vld [vmem:[#allocation3 + $0xb8] sm:$0xff]
    %v1126 = vld [vmem:[#allocation3 + $0xc0] sm:$0xff]
    %v1127 = vld [vmem:[#allocation3 + $0xc8] sm:$0xff]
    %v1128 = vld [vmem:[#allocation3 + $0xd0] sm:$0xff]
    %v1129 = vld [vmem:[#allocation3 + $0xd8] sm:$0xff]
    %v1130 = vld [vmem:[#allocation3 + $0xe0] sm:$0xff]
    %v1131 = vld [vmem:[#allocation3 + $0xe8] sm:$0xff]
    %v1132 = vld [vmem:[#allocation3 + $0xf0] sm:$0xff]
    %v1133 = vld [vmem:[#allocation3 + $0xf8] sm:$0xff]
    %1134 = vmatprep.subr.bf16.mxu0 %v1103
    %1135 = vmatpush1.bf16.msra.mxu0 %v1102
    %1136 = vmatprep.subr.bf16.mxu0 %v1107
    %1137 = vmatpush1.bf16.msra.mxu0 %v1106
    %1138 = vmatprep.subr.bf16.mxu0 %v1111
    %1139 = vmatpush1.bf16.msra.mxu0 %v1110
    %1140 = vmatprep.subr.bf16.mxu0 %v1115
    %1141 = vmatpush1.bf16.msra.mxu0 %v1114
    %1142 = vmatprep.subr.bf16.mxu0 %v1119
    %1143 = vmatpush1.bf16.msra.mxu0 %v1118
    %1144 = vmatprep.subr.bf16.mxu0 %v1123
    %1145 = vmatpush1.bf16.msra.mxu0 %v1122
    %1146 = vmatprep.subr.bf16.mxu0 %v1127
    %1147 = vmatpush1.bf16.msra.mxu0 %v1126
    %1148 = vmatprep.subr.bf16.mxu0 %v1131
    %1149 = vmatpush1.bf16.msra.mxu0 %v1130
    %1150 = vmatprep.subr.bf16.mxu0 0
    %1151 = vmatpush1.bf16.msra.mxu0 0
    %1152 = vmatprep.subr.bf16.mxu0 0
    %1153 = vmatpush1.bf16.msra.mxu0 0
    %1154 = vmatprep.subr.bf16.mxu0 0
    %1155 = vmatpush1.bf16.msra.mxu0 0
    %1156 = vmatprep.subr.bf16.mxu0 0
    %1157 = vmatpush1.bf16.msra.mxu0 0
    %1158 = vmatprep.subr.bf16.mxu0 0
    %1159 = vmatpush1.bf16.msra.mxu0 0
    %1160 = vmatprep.subr.bf16.mxu0 0
    %1161 = vmatpush1.bf16.msra.mxu0 0
    %1162 = vmatprep.subr.bf16.mxu0 0
    %1163 = vmatpush1.bf16.msra.mxu0 0
    %1164 = vmatprep.subr.bf16.mxu0 0
    %1165 = vmatpush1.bf16.msra.mxu0 0
    %1166 = vmatprep.mubr.bf16.mxu0 0
    %1167 = vmatmul.mubr.bf16.gmra.mrb[0].mxu0 %v1101
    %v1168 = vpop.f32.mrb[0].mxu0
    %v1169 = vadd.f32 0.0, %v1168
    %v1170 = vpop.f32.mrb[0].mxu0
    %v1171 = vadd.f32 0.0, %v1170
    %v1172 = vpop.f32.mrb[0].mxu0
    %v1173 = vadd.f32 0.0, %v1172
    %v1174 = vpop.f32.mrb[0].mxu0
    %v1175 = vadd.f32 0.0, %v1174
    %1176 = vdwg.mxu0
    %1177 = vmatprep.subr.bf16.mxu0 %v1105
    %1178 = vmatpush1.bf16.msra.mxu0 %v1104
    %1179 = vmatprep.subr.bf16.mxu0 %v1109
    %1180 = vmatpush1.bf16.msra.mxu0 %v1108
    %1181 = vmatprep.subr.bf16.mxu0 %v1113
    %1182 = vmatpush1.bf16.msra.mxu0 %v1112
    %1183 = vmatprep.subr.bf16.mxu0 %v1117
    %1184 = vmatpush1.bf16.msra.mxu0 %v1116
    %1185 = vmatprep.subr.bf16.mxu0 %v1121
    %1186 = vmatpush1.bf16.msra.mxu0 %v1120
    %1187 = vmatprep.subr.bf16.mxu0 %v1125
    %1188 = vmatpush1.bf16.msra.mxu0 %v1124
    %1189 = vmatprep.subr.bf16.mxu0 %v1129
    %1190 = vmatpush1.bf16.msra.mxu0 %v1128
    %1191 = vmatprep.subr.bf16.mxu0 %v1133
    %1192 = vmatpush1.bf16.msra.mxu0 %v1132
    %1193 = vmatprep.subr.bf16.mxu0 0
    %1194 = vmatpush1.bf16.msra.mxu0 0
    %1195 = vmatprep.subr.bf16.mxu0 0
    %1196 = vmatpush1.bf16.msra.mxu0 0
    %1197 = vmatprep.subr.bf16.mxu0 0
    %1198 = vmatpush1.bf16.msra.mxu0 0
    %1199 = vmatprep.subr.bf16.mxu0 0
    %1200 = vmatpush1.bf16.msra.mxu0 0
    %1201 = vmatprep.subr.bf16.mxu0 0
    %1202 = vmatpush1.bf16.msra.mxu0 0
    %1203 = vmatprep.subr.bf16.mxu0 0
    %1204 = vmatpush1.bf16.msra.mxu0 0
    %1205 = vmatprep.subr.bf16.mxu0 0
    %1206 = vmatpush1.bf16.msra.mxu0 0
    %1207 = vmatprep.subr.bf16.mxu0 0
    %1208 = vmatpush1.bf16.msra.mxu0 0
    %1209 = vmatprep.mubr.bf16.mxu0 0
    %1210 = vmatmul.mubr.bf16.gmra.mrb[0].mxu0 %v1101
    %v1211 = vpop.f32.mrb[0].mxu0
    %v1212 = vadd.f32 0.0, %v1211
    %v1213 = vpop.f32.mrb[0].mxu0
    %v1214 = vadd.f32 0.0, %v1213
    %v1215 = vpop.f32.mrb[0].mxu0
    %v1216 = vadd.f32 0.0, %v1215
    %v1217 = vpop.f32.mrb[0].mxu0
    %v1218 = vadd.f32 0.0, %v1217
    %1219 = vdwg.mxu0
    %v1220 = vadd.f32 %v1093, %v1169
    %v1221 = vadd.f32 %v1094, %v1171
    %v1222 = vadd.f32 %v1095, %v1212
    %v1223 = vadd.f32 %v1096, %v1214
    %v1224 = vadd.f32 %v1097, %v1173
    %v1225 = vadd.f32 %v1098, %v1175
    %v1226 = vadd.f32 %v1099, %v1216
    %v1227 = vadd.f32 %v1100, %v1218
    %v1228 = vxor.u32 %v1220, 2147483648
    %v1229 = vxor.u32 %v1224, 2147483648
    %v1230 = vmul.f32 %v1228, 1.442695
    %v1231 = vpow.pop %v1230
    %v1232 = vmul.f32 %v1229, 1.442695
    %v1233 = vpow.pop %v1232
    %v1234 = vadd.f32 %v1231, 1.0
    %v1235 = vadd.f32 %v1233, 1.0
    %v1236 = vrcp.pop %v1234
    %v1237 = vmul.f32 1.0, %v1236
    %v1238 = vrcp.pop %v1235
    %v1239 = vmul.f32 1.0, %v1238
    %v1240 = vxor.u32 %v1221, 2147483648
    %v1241 = vxor.u32 %v1225, 2147483648
    %v1242 = vmul.f32 %v1240, 1.442695
    %v1243 = vpow.pop %v1242
    %v1244 = vmul.f32 %v1241, 1.442695
    %v1245 = vpow.pop %v1244
    %v1246 = vadd.f32 %v1243, 1.0
    %v1247 = vadd.f32 %v1245, 1.0
    %v1248 = vrcp.pop %v1246
    %v1249 = vmul.f32 1.0, %v1248
    %v1250 = vrcp.pop %v1247
    %v1251 = vmul.f32 1.0, %v1250
    %v1252 = vtanh.pop %v1222
    %v1253 = vtanh.pop %v1226
    %v1254 = vxor.u32 %v1223, 2147483648
    %v1255 = vxor.u32 %v1227, 2147483648
    %v1256 = vmul.f32 %v1254, 1.442695
    %v1257 = vpow.pop %v1256
    %v1258 = vmul.f32 %v1255, 1.442695
    %v1259 = vpow.pop %v1258
    %v1260 = vadd.f32 %v1257, 1.0
    %v1261 = vadd.f32 %v1259, 1.0
    %v1262 = vrcp.pop %v1260
    %v1263 = vmul.f32 1.0, %v1262
    %v1264 = vrcp.pop %v1261
    %v1265 = vmul.f32 1.0, %v1264
    %v1266 = vld [vmem:[#allocation6] sm:$0xff]
    %v1267 = vld [vmem:[#allocation6 + $0x8] sm:$0xff]
    %v1268 = vmul.f32 %v1249, %v1266
    %v1269 = vmul.f32 %v1251, %v1267
    %v1270 = vmul.f32 %v1237, %v1252
    %v1271 = vmul.f32 %v1239, %v1253
    %v1272 = vadd.f32 %v1268, %v1270
    %v1273 = vadd.f32 %v1269, %v1271
    %v1274 = vtanh.pop %v1272
    %v1275 = vtanh.pop %v1273
    %v1276 = vmul.f32 %v1263, %v1274
    %v1277 = vmul.f32 %v1265, %v1275
    %v1278 = vpack.c.bf16 %v1277, %v1276
    %1279 = vst [vmem:[#allocation5] sm:$0xff] %v1278
    %1280 = vst [vmem:[#allocation6] sm:$0xff] %v1272
    %1281 = vst [vmem:[#allocation6 + $0x8] sm:$0xff] %v1273
    %v1282 = vmul.f32 %v1276, 0.5
    %v1283 = vmul.f32 %v1277, 0.5
    %v1284 = vmul.f32 %v1276, 0.70710677
    %v1285 = vmul.f32 %v1277, 0.70710677
    %v1286 = verf.f32.pop %v1284
    %v1287 = verf.f32.pop %v1285
    %v1288 = vadd.f32 %v1286, 1.0
    %v1289 = vadd.f32 %v1287, 1.0
    %v1290 = vmul.f32 %v1282, %v1288
    %v1291 = vmul.f32 %v1283, %v1289
    %s1292 = scalar_lea.vmem %s46, %s1087
    %1293 = vst [vmem:[%s1292] sm:$0xff] %v1290
    %1294 = vst [vmem:[%s1292 + $0x8] sm:$0xff] %v1291
  $region92: #{blstm_forward.3} parent=0 // loop_footer
    %s1085 = sadd.s32 1, %s1081
  $region93: #{blstm_forward.3} parent=0 // loop_footer_branch
    %1080 = sbr.rel target = $region89
  $region94: #{blstm_forward.3} parent=0 // loop_exit
    _
  %s1295 = ssub.s32 0, 0
  %s1296 = smul.u32 16, %s1295
  %p1297 = scmp.lt.s32.totalorder %s1296, 15
  %s1298 = scalar_select %p1297, %s1296, 15
  %s1299 = smul.addr %s1298, 8
  %s1300 = scalar_lea.vmem %s4, %s1299
  // Predicated region
  $region95: #{blstm_forward.3} parent=0 // pred_check
    _
  $region96: #{blstm_forward.3} parent=0 // pred_check_branch
    %1302 = sbr.rel (0) target = $region98
  $region97: #{blstm_forward.3} parent=0 // pred_region
    %s1303 = ssub.s32 0, 0
    %s1304 = smul.u32 16, %s1303
  $region98: #{blstm_forward.3} parent=0 // pred_fallthru
    _
  // Predicated region
  $region99: #{blstm_forward.3} parent=0 // pred_check
    _
  $region100: #{blstm_forward.3} parent=0 // pred_check_branch
    %1306 = sbr.rel (0) target = $region102
  $region101: #{blstm_forward.3} parent=0 // pred_region
    %s1307 = ssub.s32 0, 0
    %s1308 = smul.u32 16, %s1307
    %p1309 = scmp.lt.s32.totalorder %s1308, 15
    %s1310 = scalar_select %p1309, %s1308, 15
    %s1311 = smul.addr %s1310, 8
    %s1312 = scalar_lea.vmem %s4, %s1311
  $region102: #{blstm_forward.3} parent=0 // pred_fallthru
    _
  %1313 = vsyncmov [#allocation7]
  %s1314 = vpop.sfrf %1313
  %p1315 = scmp.eq.s32.totalorder %s1314, 0
  %p1316 = pneg %p1315
  %1318 = shalt.err (%p1316)
  %s1319 = scalar_lea.sflag [#allocation7], 1
  %1320 = vsyncmov %s1319
  %s1321 = vpop.sfrf %1320
  %p1322 = scmp.eq.s32.totalorder %s1321, 0
  %p1323 = pneg %p1322
  %1325 = shalt.err (%p1323)

</llo_original>
